<compile_context>
chip_gen: v7x
topology: tpu7x:2x2x1
jax: 0.10.0
libtpu: 0.0.40
codegen_flags: <defaults>
</compile_context>

<pallas_src>
import jax
import jax.numpy as jnp
import numpy as np
from jax import lax
from jax.experimental import pallas as pl
from jax.experimental.pallas import tpu as pltpu

NEG_SLOPE = 0.01   # nn.LeakyReLU() default
BN_EPS = 1e-5      # nn.BatchNorm2d default
LANE = 128
MB = 1024 * 1024


def _leaky(x):
    return jnp.where(x > 0, x, NEG_SLOPE * x)


def _fold_bn(g, b, m, v):
    s = g / jnp.sqrt(v + BN_EPS)
    return s, b - m * s


def _round_up(x, m):
    return (x + m - 1) // m * m


def _pick_vmem_limit():
    """Per-generation scoped-VMEM limit: ~48 MiB on v7x (64 MiB physical),
    ~96 MiB on v5e/v6e (128 MiB physical)."""
    try:
        cap = int(pltpu.get_tpu_info().vmem_capacity_bytes)
    except Exception:
        cap = 64 * MB
    return max(32 * MB, min(100 * MB, (cap * 3) // 4))


def _choose_tile_rows(H, W_pad, Cin, Chp, Cout_pad, pad_rows, budget):
    """Largest divisor of H whose per-step working set stays well under the
    VMEM budget (leave ~half for weights / pipeline intermediates).  Bigger
    tiles amortise the ~0.35us per-grid-step overhead and give the MXU a
    useful M dimension."""
    best = 1
    for th in range(1, H + 1):
        if H % th:
            continue
        thw = th * W_pad
        win = 2 * (th + 2 * pad_rows) * W_pad * Cin * 2      # 2x bf16 halo window
        slab = thw * 4 * Chp * 2                             # bf16 branch slab
        outb = 2 * thw * Cout_pad * 4                        # 2x f32 output block
        interm = 2 * thw * 4 * Chp * 4                       # live f32 intermediates
        if win + slab + outb + interm <= budget // 2:
            best = th
        if thw >= 8192:                                      # diminishing returns
            break
    return best


# ----------------------------- Pallas kernel ------------------------------ #
def _make_kernel(W_pad, TH, PADR, HP, WIN, Chp, extra_taps, mask_idx, n_tiles):
    """Kernel over one (batch, row-tile) grid cell.

    x_hbm is the whole row/col-padded image flattened to (B*HP*W_pad, Cin) in
    HBM; each grid step DMAs a (TH + 2*PADR)-row halo window into a
    double-buffered VMEM scratch.  Every dilated tap is a shifted window load
    (static offsets) times a precomputed 0/1 column mask.
    """
    THW = TH * W_pad
    f32 = jnp.float32

    def kernel(x_hbm, masks_ref, wc_ref, wx_ref, ms_ref, mb_ref,
               wred_ref, rs_ref, rbe_ref, o_ref, win_ref, sem_ref, slab_ref):
        b = pl.program_id(0)
        t = pl.program_id(1)
        slot = (t % 2) if n_tiles > 1 else 0

        def issue(tt, which):
            start = (b * HP + tt * TH) * W_pad
            src = x_hbm.at[pl.ds(start, WIN * W_pad), :]
            pltpu.make_async_copy(src, win_ref.at[which], sem_ref.at[which]).start()

        # Prime this batch element's first halo window.
        @pl.when(t == 0)
        def _():
            issue(0, 0)

        # Wait for the current tile's window.
        pltpu.make_async_copy(x_hbm.at[pl.ds(0, WIN * W_pad), :],
                              win_ref.at[slot], sem_ref.at[slot]).wait()

        # Prefetch the next tile's window while computing this one.
        if n_tiles > 1:
            @pl.when(t + 1 < n_tiles)
            def _():
                issue(t + 1, 1 - slot)

        # Hoist the tiny per-sx edge masks out of the tap loops.
        mvals = {sx: masks_ref[j] for sx, j in mask_idx.items()}     # (THW, 1) bf16

        def tap(sy, sx):
            # Shifted window load; the +1-row halo keeps the static offset in
            # range, and column over/under-flow (which reads the neighbouring
            # row) is zeroed by the multiplicative mask.
            start = (PADR + sy) * W_pad + sx                          # static int
            v = win_ref[slot, pl.ds(start, THW), :]                   # (THW, Cin) bf16
            if sx != 0:
                v = v * mvals[sx]
            return v

        # One merged matmul for the four branches' centre taps.
        cen = jnp.dot(tap(0, 0), wc_ref[...], preferred_element_type=f32)
        accs = [cen[:, i * Chp:(i + 1) * Chp] for i in range(4)]      # init from 1st tap

        # Statically pruned non-centre taps of the dilated 3x3 branches.
        for wi, (bi, sy, sx) in enumerate(extra_taps):
            accs[bi] = accs[bi] + jnp.dot(tap(sy, sx), wx_ref[wi],
                                          preferred_element_type=f32)

        # map_bn + LeakyReLU per branch (f32 epilogue), written straight into
        # the bf16 slab -- no lane-axis concatenate.
        for i in range(4):
            post = _leaky(accs[i] * ms_ref[i:i + 1, :] + mb_ref[i:i + 1, :])
            slab_ref[:, i * Chp:(i + 1) * Chp] = post.astype(jnp.bfloat16)

        # Fused red_conv (single K=4*Chp matmul) + red_bn (global-pooling
        # branch folded into its per-batch bias) + LeakyReLU.
        out = jnp.dot(slab_ref[...], wred_ref[...], preferred_element_type=f32)
        out = _leaky(out * rs_ref[...] + rbe_ref[...])
        o_ref[...] = out.astype(o_ref.dtype)

    return kernel


# ------------------------------ glue / wrapper ----------------------------- #
def aspp_pallas(x_nhwc, P, rates):
    B, H, W, Cin = x_nhwc.shape
    Ch = P['w1'].shape[0]
    Cout = P['w_red'].shape[0]
    Chp = _round_up(Ch, LANE)
    Cout_pad = _round_up(Cout, LANE)

    rates = tuple(int(r) for r in rates)
    D = max(rates)
    PADR = D + 1                       # +1 row so shifted-column loads stay in-window
    HP = H + 2 * PADR
    W_pad = _round_up(W, 16)           # bf16 sublane-aligned flattened row stride

    vmem_limit = _pick_vmem_limit()
    TH = _choose_tile_rows(H, W_pad, Cin, Chp, Cout_pad, PADR, vmem_limit)
    n_tiles = H // TH
    THW = TH * W_pad
    WIN = TH + 2 * PADR
    NBUF = 2 if n_tiles > 1 else 1

    # ---- input: pad rows/cols once, flatten, stream as bf16 straight from HBM
    xp = jnp.pad(x_nhwc, ((0, 0), (PADR, PADR), (0, W_pad - W), (0, 0)))
    x_flat = xp.reshape(B * HP * W_pad, Cin).astype(jnp.bfloat16)

    # ---- weights: merge centre taps, prune dead taps, pad N to 128 lanes
    w3 = [P[f'w3_{i}'] for i in range(3)]                 # (Ch, Cin, 3, 3) each

    def pad_ch(w_cin_ch):                                  # (Cin, Ch) -> (Cin, Chp)
        return jnp.pad(w_cin_ch, ((0, 0), (0, Chp - Ch)))

    centers = [P['w1'].reshape(Ch, Cin).T] + [w3[i][:, :, 1, 1].T for i in range(3)]
    wc = jnp.concatenate([pad_ch(c) for c in centers], axis=1).astype(jnp.bfloat16)

    extra_taps, wx_list, sx_vals = [], [], []
    for bi, d in enumerate(rates, start=1):
        for ky in range(3):
            sy = (ky - 1) * d
            if abs(sy) >= H:                               # never overlaps the image
                continue
            for kx in range(3):
                sx = (kx - 1) * d
                if abs(sx) >= W:
                    continue
                if ky == 1 and kx == 1:                    # centre already merged
                    continue
                extra_taps.append((bi, sy, sx))
                wx_list.append(pad_ch(w3[bi - 1][:, :, ky, kx].T))
                if sx != 0 and sx not in sx_vals:
                    sx_vals.append(sx)
    if wx_list:
        wx = jnp.stack(wx_list).astype(jnp.bfloat16)       # (n_extra, Cin, Chp)
    else:
        wx = jnp.zeros((1, Cin, Chp), jnp.bfloat16)        # dummy, unused

    # ---- precomputed multiplicative edge masks, one per distinct sx
    cols = np.tile(np.arange(W_pad, dtype=np.int64), TH)
    if sx_vals:
        masks_np = np.stack([((cols + sx >= 0) & (cols + sx < W_pad)).astype(np.float32)
                             for sx in sx_vals])[:, :, None]
    else:
        masks_np = np.ones((1, THW, 1), np.float32)
    masks = jnp.asarray(masks_np, dtype=jnp.bfloat16)      # (n_sx, THW, 1)
    mask_idx = {sx: i for i, sx in enumerate(sx_vals)}

    # ---- folded BN params (f32 epilogue), laid out on the padded channel slots
    ms, mb = _fold_bn(P['map_g'], P['map_b'], P['map_m'], P['map_v'])
    ms = jnp.pad(ms.reshape(4, Ch), ((0, 0), (0, Chp - Ch)))
    mb = jnp.pad(mb.reshape(4, Ch), ((0, 0), (0, Chp - Ch)))
    rs, rb = _fold_bn(P['red_g'], P['red_b'], P['red_m'], P['red_v'])

    # ---- fused red_conv weight laid out to match the (THW, 4*Chp) slab
    wr = jnp.transpose(P['w_red'].reshape(Cout, 4, Ch), (1, 2, 0))       # (4, Ch, Cout)
    wr = jnp.pad(wr, ((0, 0), (0, Chp - Ch), (0, Cout_pad - Cout)))
    wred = wr.reshape(4 * Chp, Cout_pad).astype(jnp.bfloat16)

    # ---- hoisted global-pooling branch folded into red_bn's bias (exact)
    gs, gb = _fold_bn(P['gp_g'], P['gp_b'], P['gp_m'], P['gp_v'])
    pool = jnp.mean(x_nhwc, axis=(1, 2))                                  # (B, Cin)
    ph = _leaky(jnp.dot(pool, P['w_gp'].reshape(Ch, Cin).T,
                        precision=lax.Precision.HIGHEST) * gs[None, :] + gb[None, :])
    pv = jnp.dot(ph, P['w_pr'].reshape(Cout, Ch).T,
                 precision=lax.Precision.HIGHEST)                         # (B, Cout)
    rb_eff = rb[None, :] + rs[None, :] * pv                               # (B, Cout)

    rs_p = jnp.pad(rs.reshape(1, Cout), ((0, 0), (0, Cout_pad - Cout)))
    rbe_p = jnp.pad(rb_eff, ((0, 0), (0, Cout_pad - Cout))).reshape(B, 1, Cout_pad)

    kernel = _make_kernel(W_pad, TH, PADR, HP, WIN, Chp, extra_taps, mask_idx, n_tiles)

    buf1 = pl.Buffered(1)   # constant-index inputs are never re-fetched

    def const_spec(shape):
        n = len(shape)
        return pl.BlockSpec(shape, lambda b_, t_, _n=n: (0,) * _n, pipeline_mode=buf1)

    in_specs = [
        pl.BlockSpec(memory_space=pl.ANY),                        # x (HBM; manual halo DMA)
        const_spec(masks.shape),                                  # per-sx edge masks
        const_spec(wc.shape),                                     # merged centre-tap weight
        const_spec(wx.shape),                                     # pruned non-centre taps
        const_spec(ms.shape),                                     # map_bn scale
        const_spec(mb.shape),                                     # map_bn bias
        const_spec(wred.shape),                                   # fused red_conv
        const_spec(rs_p.shape),                                   # red_bn scale
        pl.BlockSpec((None, 1, Cout_pad), lambda b_, t_: (b_, 0, 0)),  # per-batch folded bias
    ]

    out = pl.pallas_call(
        kernel,
        out_shape=jax.ShapeDtypeStruct((B, H * W_pad, Cout_pad), x_nhwc.dtype),
        grid=(B, n_tiles),
        in_specs=in_specs,
        out_specs=pl.BlockSpec((None, THW, Cout_pad), lambda b_, t_: (b_, t_, 0)),
        scratch_shapes=[
            pltpu.VMEM((NBUF, WIN * W_pad, Cin), jnp.bfloat16),   # halo window (double buf)
            pltpu.SemaphoreType.DMA((NBUF,)),
            pltpu.VMEM((THW, 4 * Chp), jnp.bfloat16),             # branch slab (no concat)
        ],
        compiler_params=pltpu.CompilerParams(
            # batch axis can be sharded across v7x cores; the row-tile axis
            # must stay in-order so the manual halo prefetch chain is valid.
            dimension_semantics=("parallel", "arbitrary"),
            vmem_limit_bytes=vmem_limit,
        ),
    )(x_flat, masks, wc, wx, ms, mb, wred, rs_p, rbe_p)

    out = out.reshape(B, H, W_pad, Cout_pad)[:, :, :W, :Cout]     # drop lane/col padding
    return out                                                    # (B, H, W, Cout) NHWC


# -------------------------- pure-JAX reference ----------------------------- #
def reference_forward(x_nchw, P, rates):
    def conv(x, w, d, p):
        return lax.conv_general_dilated(
            x, w, (1, 1), [(p, p), (p, p)], rhs_dilation=(d, d),
            dimension_numbers=('NCHW', 'OIHW', 'NCHW'),
            precision=lax.Precision.HIGHEST)

    def bn(x, g, b, m, v):
        sh = (1, -1, 1, 1)
        return g.reshape(sh) * (x - m.reshape(sh)) / jnp.sqrt(v.reshape(sh) + BN_EPS) + b.reshape(sh)

    outs = [conv(x_nchw, P['w1'], 1, 0),
            conv(x_nchw, P['w3_0'], rates[0], rates[0]),
            conv(x_nchw, P['w3_1'], rates[1], rates[1]),
            conv(x_nchw, P['w3_2'], rates[2], rates[2])]
    out = jnp.concatenate(outs, axis=1)
    out = _leaky(bn(out, P['map_g'], P['map_b'], P['map_m'], P['map_v']))
    out = conv(out, P['w_red'], 1, 0)

    pool = jnp.mean(x_nchw, axis=(2, 3), keepdims=True)
    pool = conv(pool, P['w_gp'], 1, 0)
    pool = _leaky(bn(pool, P['gp_g'], P['gp_b'], P['gp_m'], P['gp_v']))
    pool = conv(pool, P['w_pr'], 1, 0)

    out = out + pool  # broadcast == pool.repeat(1,1,H,W)
    out = _leaky(bn(out, P['red_g'], P['red_b'], P['red_m'], P['red_v']))
    return out


# --------------------------------- params ---------------------------------- #
def init_params(key, Cin, Ch, Cout):
    ks = iter(jax.random.split(key, 32))

    def conv_w(shape):
        fan_in = shape[1] * shape[2] * shape[3]
        bound = 1.0 / np.sqrt(fan_in)
        return jax.random.uniform(next(ks), shape, jnp.float32, -bound, bound)

    def bn(n):
        g = jax.random.uniform(next(ks), (n,), jnp.float32, 0.5, 1.5)
        b = 0.1 * jax.random.normal(next(ks), (n,), jnp.float32)
        m = 0.1 * jax.random.normal(next(ks), (n,), jnp.float32)
        v = jax.random.uniform(next(ks), (n,), jnp.float32, 0.5, 1.5)
        return g, b, m, v

    P = {}
    P['w1'] = conv_w((Ch, Cin, 1, 1))
    P['w3_0'] = conv_w((Ch, Cin, 3, 3))
    P['w3_1'] = conv_w((Ch, Cin, 3, 3))
    P['w3_2'] = conv_w((Ch, Cin, 3, 3))
    P['map_g'], P['map_b'], P['map_m'], P['map_v'] = bn(4 * Ch)
    P['w_gp'] = conv_w((Ch, Cin, 1, 1))
    P['gp_g'], P['gp_b'], P['gp_m'], P['gp_v'] = bn(Ch)
    P['w_red'] = conv_w((Cout, 4 * Ch, 1, 1))
    P['w_pr'] = conv_w((Cout, Ch, 1, 1))
    P['red_g'], P['red_b'], P['red_m'], P['red_v'] = bn(Cout)
    return P


if __name__ == "__main__":
    B, Cin, H, W = 2, 8, 16, 16
    Ch, Cout = 16, 16
    rates = (12, 24, 36)  # module defaults

    key = jax.random.PRNGKey(0)
    k_x, k_p = jax.random.split(key)
    P = init_params(k_p, Cin, Ch, Cout)

    x_nchw = jax.random.normal(k_x, (B, Cin, H, W), jnp.float32)  # PyTorch layout
    x_nhwc = jnp.transpose(x_nchw, (0, 2, 3, 1))

    y = aspp_pallas(x_nhwc, P, rates)
    y = jax.block_until_ready(y)

    y_nchw = jnp.transpose(y, (0, 3, 1, 2))
    y_ref = reference_forward(x_nchw, P, rates)
    # bf16 streamed operands (MXU path) vs. HIGHEST-precision f32 reference.
    np.testing.assert_allclose(np.asarray(y_nchw), np.asarray(y_ref),
                               rtol=2e-2, atol=2e-2)
    print("KERNEL_OK")
</pallas_src>

<mosaic_0001>
module attributes {stable_mosaic.version = 11 : i64} {
  func.func @kernel(%arg0: i32, %arg1: i32, %arg2: memref<2880x8xbf16, #tpu.memory_space<any>>, %arg3: memref<2x256x1xbf16, #tpu.memory_space<vmem>>, %arg4: memref<8x512xbf16, #tpu.memory_space<vmem>>, %arg5: memref<8x8x128xbf16, #tpu.memory_space<vmem>>, %arg6: memref<4x128xf32, #tpu.memory_space<vmem>>, %arg7: memref<4x128xf32, #tpu.memory_space<vmem>>, %arg8: memref<512x128xbf16, #tpu.memory_space<vmem>>, %arg9: memref<1x128xf32, #tpu.memory_space<vmem>>, %arg10: memref<1x1x128xf32, #tpu.memory_space<vmem>>, %arg11: memref<1x256x128xf32, #tpu.memory_space<vmem>>, %arg12: memref<1x1440x8xbf16, #tpu.memory_space<vmem>>, %arg13: memref<1x!tpu.dma_semaphore, #tpu.memory_space<semaphore_mem>>, %arg14: memref<256x512xbf16, #tpu.memory_space<vmem>>) attributes {dimension_semantics = [#tpu.dimension_semantics<parallel>, #tpu.dimension_semantics<arbitrary>], iteration_bounds = array<i64: 2, 1>, scalar_prefetch = 0 : i64, scratch_operands = 3 : i64, tpu.core_type = #tpu.core_type<tc>, window_params = [{}, {pipeline_mode = #tpu.pipeline_mode<synchronous>, transform_indices = @transform_1, window_bounds = array<i64: 2, 256, 1>}, {pipeline_mode = #tpu.pipeline_mode<synchronous>, transform_indices = @transform_2, window_bounds = array<i64: 8, 512>}, {pipeline_mode = #tpu.pipeline_mode<synchronous>, transform_indices = @transform_3, window_bounds = array<i64: 8, 8, 128>}, {pipeline_mode = #tpu.pipeline_mode<synchronous>, transform_indices = @transform_4, window_bounds = array<i64: 4, 128>}, {pipeline_mode = #tpu.pipeline_mode<synchronous>, transform_indices = @transform_5, window_bounds = array<i64: 4, 128>}, {pipeline_mode = #tpu.pipeline_mode<synchronous>, transform_indices = @transform_6, window_bounds = array<i64: 512, 128>}, {pipeline_mode = #tpu.pipeline_mode<synchronous>, transform_indices = @transform_7, window_bounds = array<i64: 1, 128>}, {transform_indices = @transform_8, window_bounds = array<i64: 1, 1, 128>}, {transform_indices = @transform_9, window_bounds = array<i64: 1, 256, 128>}]} {
    %c0_i32 = arith.constant 0 : i32
    %0 = arith.cmpi eq, %arg1, %c0_i32 : i32
    %1 = arith.extui %0 : i1 to i32
    %c0_i32_0 = arith.constant 0 : i32
    %2 = arith.cmpi ne, %1, %c0_i32_0 : i32
    scf.if %2 {
      %c90_i32 = arith.constant 90 : i32
      %150 = arith.muli %arg0, %c90_i32 : i32
      %c0_i32_101 = arith.constant 0 : i32
      %151 = arith.addi %150, %c0_i32_101 : i32
      %c16_i32 = arith.constant 16 : i32
      %152 = arith.muli %151, %c16_i32 : i32
      %c0_i32_102 = arith.constant 0 : i32
      %c0_i32_103 = arith.constant 0 : i32
      %c0_i32_104 = arith.constant 0 : i32
      %153 = tpu.memref_slice %arg2[%152, %c0_i32_104] : memref<2880x8xbf16, #tpu.memory_space<any>> -> memref<1440x8xbf16, #tpu.memory_space<any>>
      %c0_i32_105 = arith.constant 0 : i32
      %c0_i32_106 = arith.constant 0 : i32
      %154 = tpu.memref_slice %arg12[%c0_i32_102, %c0_i32_105, %c0_i32_106] : memref<1x1440x8xbf16, #tpu.memory_space<vmem>> -> memref<1x1440x8xbf16, #tpu.memory_space<vmem>>
      %155 = tpu.memref_squeeze %154 : memref<1x1440x8xbf16, #tpu.memory_space<vmem>> -> memref<1440x8xbf16, #tpu.memory_space<vmem>>
      %156 = tpu.memref_slice %arg13[%c0_i32_103] : memref<1x!tpu.dma_semaphore, #tpu.memory_space<semaphore_mem>> -> memref<1x!tpu.dma_semaphore, #tpu.memory_space<semaphore_mem>>
      %157 = tpu.memref_squeeze %156 : memref<1x!tpu.dma_semaphore, #tpu.memory_space<semaphore_mem>> -> memref<!tpu.dma_semaphore, #tpu.memory_space<semaphore_mem>>
      tpu.enqueue_dma source(%153 : memref<1440x8xbf16, #tpu.memory_space<any>>) target(%155 : memref<1440x8xbf16, #tpu.memory_space<vmem>>) target_semaphore(%157 : memref<!tpu.dma_semaphore, #tpu.memory_space<semaphore_mem>>)
    } else {
    }
    %c0_i32_1 = arith.constant 0 : i32
    %c0_i32_2 = arith.constant 0 : i32
    %c0_i32_3 = arith.constant 0 : i32
    %c0_i32_4 = arith.constant 0 : i32
    %3 = tpu.memref_slice %arg2[%c0_i32_3, %c0_i32_4] : memref<2880x8xbf16, #tpu.memory_space<any>> -> memref<1440x8xbf16, #tpu.memory_space<any>>
    %c0_i32_5 = arith.constant 0 : i32
    %c0_i32_6 = arith.constant 0 : i32
    %4 = tpu.memref_slice %arg12[%c0_i32_1, %c0_i32_5, %c0_i32_6] : memref<1x1440x8xbf16, #tpu.memory_space<vmem>> -> memref<1x1440x8xbf16, #tpu.memory_space<vmem>>
    %5 = tpu.memref_squeeze %4 : memref<1x1440x8xbf16, #tpu.memory_space<vmem>> -> memref<1440x8xbf16, #tpu.memory_space<vmem>>
    %6 = tpu.memref_slice %arg13[%c0_i32_2] : memref<1x!tpu.dma_semaphore, #tpu.memory_space<semaphore_mem>> -> memref<1x!tpu.dma_semaphore, #tpu.memory_space<semaphore_mem>>
    %7 = tpu.memref_squeeze %6 : memref<1x!tpu.dma_semaphore, #tpu.memory_space<semaphore_mem>> -> memref<!tpu.dma_semaphore, #tpu.memory_space<semaphore_mem>>
    tpu.wait_dma2 semaphore(%7 : memref<!tpu.dma_semaphore, #tpu.memory_space<semaphore_mem>>) src(%3 : memref<1440x8xbf16, #tpu.memory_space<any>>) dst(%5 : memref<1440x8xbf16, #tpu.memory_space<vmem>>)
    %c0 = arith.constant 0 : index
    %c0_7 = arith.constant 0 : index
    %c0_8 = arith.constant 0 : index
    %8 = vector.load %arg3[%c0, %c0_7, %c0_8] : memref<2x256x1xbf16, #tpu.memory_space<vmem>>, vector<1x256x1xbf16>
    %9 = vector.shape_cast %8 : vector<1x256x1xbf16> to vector<256x1xbf16>
    %c1 = arith.constant 1 : index
    %c0_9 = arith.constant 0 : index
    %c0_10 = arith.constant 0 : index
    %10 = vector.load %arg3[%c1, %c0_9, %c0_10] : memref<2x256x1xbf16, #tpu.memory_space<vmem>>, vector<1x256x1xbf16>
    %11 = vector.shape_cast %10 : vector<1x256x1xbf16> to vector<256x1xbf16>
    %c0_11 = arith.constant 0 : index
    %c592 = arith.constant 592 : index
    %c0_12 = arith.constant 0 : index
    %12 = vector.load %arg12[%c0_11, %c592, %c0_12] : memref<1x1440x8xbf16, #tpu.memory_space<vmem>>, vector<1x256x8xbf16>
    %13 = vector.shape_cast %12 : vector<1x256x8xbf16> to vector<256x8xbf16>
    %c0_13 = arith.constant 0 : index
    %c0_14 = arith.constant 0 : index
    %14 = vector.load %arg4[%c0_13, %c0_14] : memref<8x512xbf16, #tpu.memory_space<vmem>>, vector<8x512xbf16>
    %cst = arith.constant dense<0.000000e+00> : vector<256x512xf32>
    %15 = tpu.matmul %13, %14, %cst {dimension_numbers = #tpu.dot_dimension_numbers<[1], [0], [0], [1], [0, 0, 1, 1], [], []>} : vector<256x8xbf16>, vector<8x512xbf16>, vector<256x512xf32> -> vector<256x512xf32>
    %16 = vector.extract_strided_slice %15 {offsets = [0, 0], sizes = [256, 128], strides = [1, 1]} : vector<256x512xf32> to vector<256x128xf32>
    %17 = vector.extract_strided_slice %15 {offsets = [0, 128], sizes = [256, 128], strides = [1, 1]} : vector<256x512xf32> to vector<256x128xf32>
    %18 = vector.extract_strided_slice %15 {offsets = [0, 256], sizes = [256, 128], strides = [1, 1]} : vector<256x512xf32> to vector<256x128xf32>
    %19 = vector.extract_strided_slice %15 {offsets = [0, 384], sizes = [256, 128], strides = [1, 1]} : vector<256x512xf32> to vector<256x128xf32>
    %c0_15 = arith.constant 0 : index
    %c388 = arith.constant 388 : index
    %c0_16 = arith.constant 0 : index
    %20 = vector.load %arg12[%c0_15, %c388, %c0_16] : memref<1x1440x8xbf16, #tpu.memory_space<vmem>>, vector<1x256x8xbf16>
    %21 = vector.shape_cast %20 : vector<1x256x8xbf16> to vector<256x8xbf16>
    %22 = vector.broadcast %9 : vector<256x1xbf16> to vector<256x8xbf16>
    %23 = arith.mulf %21, %22 : vector<256x8xbf16>
    %c0_17 = arith.constant 0 : index
    %c0_18 = arith.constant 0 : index
    %c0_19 = arith.constant 0 : index
    %24 = vector.load %arg5[%c0_17, %c0_18, %c0_19] : memref<8x8x128xbf16, #tpu.memory_space<vmem>>, vector<1x8x128xbf16>
    %25 = vector.shape_cast %24 : vector<1x8x128xbf16> to vector<8x128xbf16>
    %cst_20 = arith.constant dense<0.000000e+00> : vector<256x128xf32>
    %26 = tpu.matmul %23, %25, %cst_20 {dimension_numbers = #tpu.dot_dimension_numbers<[1], [0], [0], [1], [0, 0, 1, 1], [], []>} : vector<256x8xbf16>, vector<8x128xbf16>, vector<256x128xf32> -> vector<256x128xf32>
    %27 = arith.addf %17, %26 : vector<256x128xf32>
    %c0_21 = arith.constant 0 : index
    %c400 = arith.constant 400 : index
    %c0_22 = arith.constant 0 : index
    %28 = vector.load %arg12[%c0_21, %c400, %c0_22] : memref<1x1440x8xbf16, #tpu.memory_space<vmem>>, vector<1x256x8xbf16>
    %29 = vector.shape_cast %28 : vector<1x256x8xbf16> to vector<256x8xbf16>
    %c1_23 = arith.constant 1 : index
    %c0_24 = arith.constant 0 : index
    %c0_25 = arith.constant 0 : index
    %30 = vector.load %arg5[%c1_23, %c0_24, %c0_25] : memref<8x8x128xbf16, #tpu.memory_space<vmem>>, vector<1x8x128xbf16>
    %31 = vector.shape_cast %30 : vector<1x8x128xbf16> to vector<8x128xbf16>
    %cst_26 = arith.constant dense<0.000000e+00> : vector<256x128xf32>
    %32 = tpu.matmul %29, %31, %cst_26 {dimension_numbers = #tpu.dot_dimension_numbers<[1], [0], [0], [1], [0, 0, 1, 1], [], []>} : vector<256x8xbf16>, vector<8x128xbf16>, vector<256x128xf32> -> vector<256x128xf32>
    %33 = arith.addf %27, %32 : vector<256x128xf32>
    %c0_27 = arith.constant 0 : index
    %c412 = arith.constant 412 : index
    %c0_28 = arith.constant 0 : index
    %34 = vector.load %arg12[%c0_27, %c412, %c0_28] : memref<1x1440x8xbf16, #tpu.memory_space<vmem>>, vector<1x256x8xbf16>
    %35 = vector.shape_cast %34 : vector<1x256x8xbf16> to vector<256x8xbf16>
    %36 = vector.broadcast %11 : vector<256x1xbf16> to vector<256x8xbf16>
    %37 = arith.mulf %35, %36 : vector<256x8xbf16>
    %c2 = arith.constant 2 : index
    %c0_29 = arith.constant 0 : index
    %c0_30 = arith.constant 0 : index
    %38 = vector.load %arg5[%c2, %c0_29, %c0_30] : memref<8x8x128xbf16, #tpu.memory_space<vmem>>, vector<1x8x128xbf16>
    %39 = vector.shape_cast %38 : vector<1x8x128xbf16> to vector<8x128xbf16>
    %cst_31 = arith.constant dense<0.000000e+00> : vector<256x128xf32>
    %40 = tpu.matmul %37, %39, %cst_31 {dimension_numbers = #tpu.dot_dimension_numbers<[1], [0], [0], [1], [0, 0, 1, 1], [], []>} : vector<256x8xbf16>, vector<8x128xbf16>, vector<256x128xf32> -> vector<256x128xf32>
    %41 = arith.addf %33, %40 : vector<256x128xf32>
    %c0_32 = arith.constant 0 : index
    %c580 = arith.constant 580 : index
    %c0_33 = arith.constant 0 : index
    %42 = vector.load %arg12[%c0_32, %c580, %c0_33] : memref<1x1440x8xbf16, #tpu.memory_space<vmem>>, vector<1x256x8xbf16>
    %43 = vector.shape_cast %42 : vector<1x256x8xbf16> to vector<256x8xbf16>
    %44 = vector.broadcast %9 : vector<256x1xbf16> to vector<256x8xbf16>
    %45 = arith.mulf %43, %44 : vector<256x8xbf16>
    %c3 = arith.constant 3 : index
    %c0_34 = arith.constant 0 : index
    %c0_35 = arith.constant 0 : index
    %46 = vector.load %arg5[%c3, %c0_34, %c0_35] : memref<8x8x128xbf16, #tpu.memory_space<vmem>>, vector<1x8x128xbf16>
    %47 = vector.shape_cast %46 : vector<1x8x128xbf16> to vector<8x128xbf16>
    %cst_36 = arith.constant dense<0.000000e+00> : vector<256x128xf32>
    %48 = tpu.matmul %45, %47, %cst_36 {dimension_numbers = #tpu.dot_dimension_numbers<[1], [0], [0], [1], [0, 0, 1, 1], [], []>} : vector<256x8xbf16>, vector<8x128xbf16>, vector<256x128xf32> -> vector<256x128xf32>
    %49 = arith.addf %41, %48 : vector<256x128xf32>
    %c0_37 = arith.constant 0 : index
    %c604 = arith.constant 604 : index
    %c0_38 = arith.constant 0 : index
    %50 = vector.load %arg12[%c0_37, %c604, %c0_38] : memref<1x1440x8xbf16, #tpu.memory_space<vmem>>, vector<1x256x8xbf16>
    %51 = vector.shape_cast %50 : vector<1x256x8xbf16> to vector<256x8xbf16>
    %52 = vector.broadcast %11 : vector<256x1xbf16> to vector<256x8xbf16>
    %53 = arith.mulf %51, %52 : vector<256x8xbf16>
    %c4 = arith.constant 4 : index
    %c0_39 = arith.constant 0 : index
    %c0_40 = arith.constant 0 : index
    %54 = vector.load %arg5[%c4, %c0_39, %c0_40] : memref<8x8x128xbf16, #tpu.memory_space<vmem>>, vector<1x8x128xbf16>
    %55 = vector.shape_cast %54 : vector<1x8x128xbf16> to vector<8x128xbf16>
    %cst_41 = arith.constant dense<0.000000e+00> : vector<256x128xf32>
    %56 = tpu.matmul %53, %55, %cst_41 {dimension_numbers = #tpu.dot_dimension_numbers<[1], [0], [0], [1], [0, 0, 1, 1], [], []>} : vector<256x8xbf16>, vector<8x128xbf16>, vector<256x128xf32> -> vector<256x128xf32>
    %57 = arith.addf %49, %56 : vector<256x128xf32>
    %c0_42 = arith.constant 0 : index
    %c772 = arith.constant 772 : index
    %c0_43 = arith.constant 0 : index
    %58 = vector.load %arg12[%c0_42, %c772, %c0_43] : memref<1x1440x8xbf16, #tpu.memory_space<vmem>>, vector<1x256x8xbf16>
    %59 = vector.shape_cast %58 : vector<1x256x8xbf16> to vector<256x8xbf16>
    %60 = vector.broadcast %9 : vector<256x1xbf16> to vector<256x8xbf16>
    %61 = arith.mulf %59, %60 : vector<256x8xbf16>
    %c5 = arith.constant 5 : index
    %c0_44 = arith.constant 0 : index
    %c0_45 = arith.constant 0 : index
    %62 = vector.load %arg5[%c5, %c0_44, %c0_45] : memref<8x8x128xbf16, #tpu.memory_space<vmem>>, vector<1x8x128xbf16>
    %63 = vector.shape_cast %62 : vector<1x8x128xbf16> to vector<8x128xbf16>
    %cst_46 = arith.constant dense<0.000000e+00> : vector<256x128xf32>
    %64 = tpu.matmul %61, %63, %cst_46 {dimension_numbers = #tpu.dot_dimension_numbers<[1], [0], [0], [1], [0, 0, 1, 1], [], []>} : vector<256x8xbf16>, vector<8x128xbf16>, vector<256x128xf32> -> vector<256x128xf32>
    %65 = arith.addf %57, %64 : vector<256x128xf32>
    %c0_47 = arith.constant 0 : index
    %c784 = arith.constant 784 : index
    %c0_48 = arith.constant 0 : index
    %66 = vector.load %arg12[%c0_47, %c784, %c0_48] : memref<1x1440x8xbf16, #tpu.memory_space<vmem>>, vector<1x256x8xbf16>
    %67 = vector.shape_cast %66 : vector<1x256x8xbf16> to vector<256x8xbf16>
    %c6 = arith.constant 6 : index
    %c0_49 = arith.constant 0 : index
    %c0_50 = arith.constant 0 : index
    %68 = vector.load %arg5[%c6, %c0_49, %c0_50] : memref<8x8x128xbf16, #tpu.memory_space<vmem>>, vector<1x8x128xbf16>
    %69 = vector.shape_cast %68 : vector<1x8x128xbf16> to vector<8x128xbf16>
    %cst_51 = arith.constant dense<0.000000e+00> : vector<256x128xf32>
    %70 = tpu.matmul %67, %69, %cst_51 {dimension_numbers = #tpu.dot_dimension_numbers<[1], [0], [0], [1], [0, 0, 1, 1], [], []>} : vector<256x8xbf16>, vector<8x128xbf16>, vector<256x128xf32> -> vector<256x128xf32>
    %71 = arith.addf %65, %70 : vector<256x128xf32>
    %c0_52 = arith.constant 0 : index
    %c796 = arith.constant 796 : index
    %c0_53 = arith.constant 0 : index
    %72 = vector.load %arg12[%c0_52, %c796, %c0_53] : memref<1x1440x8xbf16, #tpu.memory_space<vmem>>, vector<1x256x8xbf16>
    %73 = vector.shape_cast %72 : vector<1x256x8xbf16> to vector<256x8xbf16>
    %74 = vector.broadcast %11 : vector<256x1xbf16> to vector<256x8xbf16>
    %75 = arith.mulf %73, %74 : vector<256x8xbf16>
    %c7 = arith.constant 7 : index
    %c0_54 = arith.constant 0 : index
    %c0_55 = arith.constant 0 : index
    %76 = vector.load %arg5[%c7, %c0_54, %c0_55] : memref<8x8x128xbf16, #tpu.memory_space<vmem>>, vector<1x8x128xbf16>
    %77 = vector.shape_cast %76 : vector<1x8x128xbf16> to vector<8x128xbf16>
    %cst_56 = arith.constant dense<0.000000e+00> : vector<256x128xf32>
    %78 = tpu.matmul %75, %77, %cst_56 {dimension_numbers = #tpu.dot_dimension_numbers<[1], [0], [0], [1], [0, 0, 1, 1], [], []>} : vector<256x8xbf16>, vector<8x128xbf16>, vector<256x128xf32> -> vector<256x128xf32>
    %79 = arith.addf %71, %78 : vector<256x128xf32>
    %c0_57 = arith.constant 0 : index
    %c0_58 = arith.constant 0 : index
    %80 = vector.load %arg6[%c0_57, %c0_58] : memref<4x128xf32, #tpu.memory_space<vmem>>, vector<1x128xf32>
    %81 = vector.broadcast %80 : vector<1x128xf32> to vector<256x128xf32>
    %82 = arith.mulf %16, %81 : vector<256x128xf32>
    %c0_59 = arith.constant 0 : index
    %c0_60 = arith.constant 0 : index
    %83 = vector.load %arg7[%c0_59, %c0_60] : memref<4x128xf32, #tpu.memory_space<vmem>>, vector<1x128xf32>
    %84 = vector.broadcast %83 : vector<1x128xf32> to vector<256x128xf32>
    %85 = arith.addf %82, %84 : vector<256x128xf32>
    %cst_61 = arith.constant 0.000000e+00 : f32
    %86 = vector.broadcast %cst_61 : f32 to vector<256x128xf32>
    %87 = arith.cmpf ogt, %85, %86 : vector<256x128xf32>
    %cst_62 = arith.constant 0.00999999977 : f32
    %88 = vector.broadcast %cst_62 : f32 to vector<256x128xf32>
    %89 = arith.mulf %88, %85 : vector<256x128xf32>
    %90 = arith.select %87, %85, %89 : vector<256x128xi1>, vector<256x128xf32>
    %91 = arith.truncf %90 : vector<256x128xf32> to vector<256x128xbf16>
    %c0_63 = arith.constant 0 : index
    %c0_64 = arith.constant 0 : index
    %92 = vector.load %arg14[%c0_63, %c0_64] : memref<256x512xbf16, #tpu.memory_space<vmem>>, vector<256x128xbf16>
    tpu.vector_store %arg14[%c0_63, %c0_64], %91 {strides = array<i32>} : memref<256x512xbf16, #tpu.memory_space<vmem>>, vector<256x128xbf16>,
    %c1_65 = arith.constant 1 : index
    %c0_66 = arith.constant 0 : index
    %93 = vector.load %arg6[%c1_65, %c0_66] : memref<4x128xf32, #tpu.memory_space<vmem>>, vector<1x128xf32>
    %94 = vector.broadcast %93 : vector<1x128xf32> to vector<256x128xf32>
    %95 = arith.mulf %79, %94 : vector<256x128xf32>
    %c1_67 = arith.constant 1 : index
    %c0_68 = arith.constant 0 : index
    %96 = vector.load %arg7[%c1_67, %c0_68] : memref<4x128xf32, #tpu.memory_space<vmem>>, vector<1x128xf32>
    %97 = vector.broadcast %96 : vector<1x128xf32> to vector<256x128xf32>
    %98 = arith.addf %95, %97 : vector<256x128xf32>
    %cst_69 = arith.constant 0.000000e+00 : f32
    %99 = vector.broadcast %cst_69 : f32 to vector<256x128xf32>
    %100 = arith.cmpf ogt, %98, %99 : vector<256x128xf32>
    %cst_70 = arith.constant 0.00999999977 : f32
    %101 = vector.broadcast %cst_70 : f32 to vector<256x128xf32>
    %102 = arith.mulf %101, %98 : vector<256x128xf32>
    %103 = arith.select %100, %98, %102 : vector<256x128xi1>, vector<256x128xf32>
    %104 = arith.truncf %103 : vector<256x128xf32> to vector<256x128xbf16>
    %c0_71 = arith.constant 0 : index
    %c128 = arith.constant 128 : index
    %105 = vector.load %arg14[%c0_71, %c128] : memref<256x512xbf16, #tpu.memory_space<vmem>>, vector<256x128xbf16>
    tpu.vector_store %arg14[%c0_71, %c128], %104 {strides = array<i32>} : memref<256x512xbf16, #tpu.memory_space<vmem>>, vector<256x128xbf16>,
    %c2_72 = arith.constant 2 : index
    %c0_73 = arith.constant 0 : index
    %106 = vector.load %arg6[%c2_72, %c0_73] : memref<4x128xf32, #tpu.memory_space<vmem>>, vector<1x128xf32>
    %107 = vector.broadcast %106 : vector<1x128xf32> to vector<256x128xf32>
    %108 = arith.mulf %18, %107 : vector<256x128xf32>
    %c2_74 = arith.constant 2 : index
    %c0_75 = arith.constant 0 : index
    %109 = vector.load %arg7[%c2_74, %c0_75] : memref<4x128xf32, #tpu.memory_space<vmem>>, vector<1x128xf32>
    %110 = vector.broadcast %109 : vector<1x128xf32> to vector<256x128xf32>
    %111 = arith.addf %108, %110 : vector<256x128xf32>
    %cst_76 = arith.constant 0.000000e+00 : f32
    %112 = vector.broadcast %cst_76 : f32 to vector<256x128xf32>
    %113 = arith.cmpf ogt, %111, %112 : vector<256x128xf32>
    %cst_77 = arith.constant 0.00999999977 : f32
    %114 = vector.broadcast %cst_77 : f32 to vector<256x128xf32>
    %115 = arith.mulf %114, %111 : vector<256x128xf32>
    %116 = arith.select %113, %111, %115 : vector<256x128xi1>, vector<256x128xf32>
    %117 = arith.truncf %116 : vector<256x128xf32> to vector<256x128xbf16>
    %c0_78 = arith.constant 0 : index
    %c256 = arith.constant 256 : index
    %118 = vector.load %arg14[%c0_78, %c256] : memref<256x512xbf16, #tpu.memory_space<vmem>>, vector<256x128xbf16>
    tpu.vector_store %arg14[%c0_78, %c256], %117 {strides = array<i32>} : memref<256x512xbf16, #tpu.memory_space<vmem>>, vector<256x128xbf16>,
    %c3_79 = arith.constant 3 : index
    %c0_80 = arith.constant 0 : index
    %119 = vector.load %arg6[%c3_79, %c0_80] : memref<4x128xf32, #tpu.memory_space<vmem>>, vector<1x128xf32>
    %120 = vector.broadcast %119 : vector<1x128xf32> to vector<256x128xf32>
    %121 = arith.mulf %19, %120 : vector<256x128xf32>
    %c3_81 = arith.constant 3 : index
    %c0_82 = arith.constant 0 : index
    %122 = vector.load %arg7[%c3_81, %c0_82] : memref<4x128xf32, #tpu.memory_space<vmem>>, vector<1x128xf32>
    %123 = vector.broadcast %122 : vector<1x128xf32> to vector<256x128xf32>
    %124 = arith.addf %121, %123 : vector<256x128xf32>
    %cst_83 = arith.constant 0.000000e+00 : f32
    %125 = vector.broadcast %cst_83 : f32 to vector<256x128xf32>
    %126 = arith.cmpf ogt, %124, %125 : vector<256x128xf32>
    %cst_84 = arith.constant 0.00999999977 : f32
    %127 = vector.broadcast %cst_84 : f32 to vector<256x128xf32>
    %128 = arith.mulf %127, %124 : vector<256x128xf32>
    %129 = arith.select %126, %124, %128 : vector<256x128xi1>, vector<256x128xf32>
    %130 = arith.truncf %129 : vector<256x128xf32> to vector<256x128xbf16>
    %c0_85 = arith.constant 0 : index
    %c384 = arith.constant 384 : index
    %131 = vector.load %arg14[%c0_85, %c384] : memref<256x512xbf16, #tpu.memory_space<vmem>>, vector<256x128xbf16>
    tpu.vector_store %arg14[%c0_85, %c384], %130 {strides = array<i32>} : memref<256x512xbf16, #tpu.memory_space<vmem>>, vector<256x128xbf16>,
    %c0_86 = arith.constant 0 : index
    %c0_87 = arith.constant 0 : index
    %132 = vector.load %arg14[%c0_86, %c0_87] : memref<256x512xbf16, #tpu.memory_space<vmem>>, vector<256x512xbf16>
    %c0_88 = arith.constant 0 : index
    %c0_89 = arith.constant 0 : index
    %133 = vector.load %arg8[%c0_88, %c0_89] : memref<512x128xbf16, #tpu.memory_space<vmem>>, vector<512x128xbf16>
    %cst_90 = arith.constant dense<0.000000e+00> : vector<256x128xf32>
    %134 = tpu.matmul %132, %133, %cst_90 {dimension_numbers = #tpu.dot_dimension_numbers<[1], [0], [0], [1], [0, 0, 1, 1], [], []>} : vector<256x512xbf16>, vector<512x128xbf16>, vector<256x128xf32> -> vector<256x128xf32>
    %c0_91 = arith.constant 0 : index
    %c0_92 = arith.constant 0 : index
    %135 = vector.load %arg9[%c0_91, %c0_92] : memref<1x128xf32, #tpu.memory_space<vmem>>, vector<1x128xf32>
    %136 = vector.broadcast %135 : vector<1x128xf32> to vector<256x128xf32>
    %137 = arith.mulf %134, %136 : vector<256x128xf32>
    %c0_93 = arith.constant 0 : index
    %c0_94 = arith.constant 0 : index
    %c0_95 = arith.constant 0 : index
    %138 = vector.load %arg10[%c0_93, %c0_94, %c0_95] : memref<1x1x128xf32, #tpu.memory_space<vmem>>, vector<1x1x128xf32>
    %139 = vector.shape_cast %138 : vector<1x1x128xf32> to vector<1x128xf32>
    %140 = vector.broadcast %139 : vector<1x128xf32> to vector<256x128xf32>
    %141 = arith.addf %137, %140 : vector<256x128xf32>
    %cst_96 = arith.constant 0.000000e+00 : f32
    %142 = vector.broadcast %cst_96 : f32 to vector<256x128xf32>
    %143 = arith.cmpf ogt, %141, %142 : vector<256x128xf32>
    %cst_97 = arith.constant 0.00999999977 : f32
    %144 = vector.broadcast %cst_97 : f32 to vector<256x128xf32>
    %145 = arith.mulf %144, %141 : vector<256x128xf32>
    %146 = arith.select %143, %141, %145 : vector<256x128xi1>, vector<256x128xf32>
    %c0_98 = arith.constant 0 : index
    %c0_99 = arith.constant 0 : index
    %c0_100 = arith.constant 0 : index
    %147 = vector.load %arg11[%c0_98, %c0_99, %c0_100] : memref<1x256x128xf32, #tpu.memory_space<vmem>>, vector<1x256x128xf32>
    %148 = vector.shape_cast %147 : vector<1x256x128xf32> to vector<256x128xf32>
    %149 = vector.shape_cast %146 : vector<256x128xf32> to vector<1x256x128xf32>
    tpu.vector_store %arg11[%c0_98, %c0_99, %c0_100], %149 {strides = array<i32>} : memref<1x256x128xf32, #tpu.memory_space<vmem>>, vector<1x256x128xf32>,
    return
  }
  func.func @transform_1(%arg0: i32, %arg1: i32) -> (i32, i32, i32) {
    %c0_i32 = arith.constant 0 : i32
    %c0_i32_0 = arith.constant 0 : i32
    %c0_i32_1 = arith.constant 0 : i32
    %c0_i32_2 = arith.constant 0 : i32
    return %c0_i32, %c0_i32_0, %c0_i32_1 : i32, i32, i32
  }
  func.func @transform_2(%arg0: i32, %arg1: i32) -> (i32, i32) {
    %c0_i32 = arith.constant 0 : i32
    %c0_i32_0 = arith.constant 0 : i32
    %c0_i32_1 = arith.constant 0 : i32
    return %c0_i32, %c0_i32_0 : i32, i32
  }
  func.func @transform_3(%arg0: i32, %arg1: i32) -> (i32, i32, i32) {
    %c0_i32 = arith.constant 0 : i32
    %c0_i32_0 = arith.constant 0 : i32
    %c0_i32_1 = arith.constant 0 : i32
    %c0_i32_2 = arith.constant 0 : i32
    return %c0_i32, %c0_i32_0, %c0_i32_1 : i32, i32, i32
  }
  func.func @transform_4(%arg0: i32, %arg1: i32) -> (i32, i32) {
    %c0_i32 = arith.constant 0 : i32
    %c0_i32_0 = arith.constant 0 : i32
    %c0_i32_1 = arith.constant 0 : i32
    return %c0_i32, %c0_i32_0 : i32, i32
  }
  func.func @transform_5(%arg0: i32, %arg1: i32) -> (i32, i32) {
    %c0_i32 = arith.constant 0 : i32
    %c0_i32_0 = arith.constant 0 : i32
    %c0_i32_1 = arith.constant 0 : i32
    return %c0_i32, %c0_i32_0 : i32, i32
  }
  func.func @transform_6(%arg0: i32, %arg1: i32) -> (i32, i32) {
    %c0_i32 = arith.constant 0 : i32
    %c0_i32_0 = arith.constant 0 : i32
    %c0_i32_1 = arith.constant 0 : i32
    return %c0_i32, %c0_i32_0 : i32, i32
  }
  func.func @transform_7(%arg0: i32, %arg1: i32) -> (i32, i32) {
    %c0_i32 = arith.constant 0 : i32
    %c0_i32_0 = arith.constant 0 : i32
    %c0_i32_1 = arith.constant 0 : i32
    return %c0_i32, %c0_i32_0 : i32, i32
  }
  func.func @transform_8(%arg0: i32, %arg1: i32) -> (i32, i32, i32) {
    %c0_i32 = arith.constant 0 : i32
    %c0_i32_0 = arith.constant 0 : i32
    %c0_i32_1 = arith.constant 0 : i32
    return %arg0, %c0_i32, %c0_i32_0 : i32, i32, i32
  }
  func.func @transform_9(%arg0: i32, %arg1: i32) -> (i32, i32, i32) {
    %c0_i32 = arith.constant 0 : i32
    %c0_i32_0 = arith.constant 0 : i32
    return %arg0, %arg1, %c0_i32 : i32, i32, i32
  }
}

</mosaic_0001>

<llo_original>
// kernel: tpu_custom_call.1
$region0: #{tpu_custom_call.1}
  #allocation0 [shape = 'u32[]', space=smem, size = 0x4, offset = 0x4, fixed_abs, tag = 'smem constant byte address 0x4 - core index']
  #allocation1 [shape = 'u32[144,128]{1,0:T(1,128)}', space=vmem, size = 0x12000, scoped, tag = 'internal scratch']
  #allocation2 [shape = 'bf16[1,1440,8]{2,1,0:T(16,128)(2,1)}', space=vmem, size = 0x5a000, scoped, tag = 'scratch operand']
  #allocation3 [shape = 's32[1]{0}', space=sflag, size = 0x4, scoped, tag = 'scratch operand']
  #allocation4 [shape = 'bf16[256,512]{1,0:T(16,128)(2,1)}', space=vmem, size = 0x40000, scoped, tag = 'scratch operand']
  #allocation7 [shape = 's32[]', space=sflag, size = 0x4, offset = 0, fixed_abs, tag = 'sflag constant byte address 0x0 - dummy sync flag']
  %s0 = inlined_call_operand.vmem [shape: bf16[2880,8], index: 0, kind: input, shape index: {}]
  %s1 = inlined_call_operand.vmem [shape: bf16[2,256,1], index: 1, kind: input, shape index: {}]
  %s2 = inlined_call_operand.vmem [shape: bf16[8,512], index: 2, kind: input, shape index: {}]
  %s3 = inlined_call_operand.vmem [shape: bf16[8,8,128], index: 3, kind: input, shape index: {}]
  %s4 = inlined_call_operand.vmem [shape: f32[4,128], index: 4, kind: input, shape index: {}]
  %s5 = inlined_call_operand.vmem [shape: f32[4,128], index: 5, kind: input, shape index: {}]
  %s6 = inlined_call_operand.vmem [shape: bf16[512,128], index: 6, kind: input, shape index: {}]
  %s7 = inlined_call_operand.vmem [shape: f32[1,128], index: 7, kind: input, shape index: {}]
  %s8 = inlined_call_operand.vmem [shape: f32[2,1,128], index: 8, kind: input, shape index: {}]
  %s9 = inlined_call_operand.hbm [shape: f32[2,256,128], index: 9, kind: output, shape index: {}]
  %s10 = sld [smem:[#allocation0]]
  $region103: #{tpu_custom_call.1} parent=0
    _
  %s12 = ssub.s32 1, %s10
  %s13 = scalar_select 0, %s12, %s10
  $region1: #{tpu_custom_call.1} parent=0
    #allocation5 [shape = 'u8[262144]{0}', space=vmem, size = 0x40000, scoped, tag = 'output window, operand 0']
    #allocation6 [shape = 's32[2]{0}', space=sflag, size = 0x8, scoped, tag = 'scoped memory for tpu_custom_call.1']
    %14 = vsyncpa [#allocation6], 0
    %s15 = scalar_lea.sflag [#allocation6], 1
    %16 = vsyncpa %s15, 0
    loop: start=0, step=1, limit=4
    $region2: #{tpu_custom_call.1} parent=1 // loop_pre_header
      _
    $region3: #{tpu_custom_call.1} parent=1 // loop_header
      %s18 = sphi 0, %s22
      %p19 = scmp.ge.s32.totalorder %s18, 4
      %s25 = sphi 0, %s37
      %s26 = sphi 0, %s33
      %s27 = sphi 0, %s25
      %s28 = sphi 0, %s26
      %s29 = sphi 0, %s27
      %s30 = sphi 0, %s28
      %s38 = sphi 0, %s38
      %s40 = sphi 0, %s38
      %s41 = sphi 0, %s40
      %s55 = sphi 0, %s41
      %s59 = sphi 0, %s59
      %s61 = sphi 0, %s59
      %s62 = sphi 0, %s61
      %s76 = sphi 0, %s62
      %s80 = sphi 0, %s80
      %s82 = sphi 0, %s80
      %s83 = sphi 0, %s82
      %s97 = sphi 0, %s83
      %s101 = sphi 0, %s101
      %s103 = sphi 0, %s101
      %s104 = sphi 0, %s103
      %s118 = sphi 0, %s104
      %s122 = sphi 0, %s122
      %s124 = sphi 0, %s122
      %s125 = sphi 0, %s124
      %s139 = sphi 0, %s125
      %s143 = sphi 0, %s143
      %s145 = sphi 0, %s143
      %s146 = sphi 0, %s145
      %s160 = sphi 0, %s146
      %s164 = sphi 0, %s164
      %s166 = sphi 0, %s164
      %s167 = sphi 0, %s166
      %s181 = sphi 0, %s167
      %s187 = sphi 0, %s189
      %s190 = sphi 0, %s187
      %s191 = sphi 0, %s190
      %s207 = sphi 0, %s191
      %s215 = sphi 0, %s217
      %s218 = sphi 0, %s215
      %s219 = sphi 0, %s218
      %s235 = sphi 0, %s219
    $region4: #{tpu_custom_call.1} parent=1 // loop_header_branch
      %21 = sbr.rel (%p19) target = $region8
    $region5: #{tpu_custom_call.1} parent=1 // loop_body
      %s23 = ssub.s32 %s18, 1
      %s24 = ssub.s32 %s18, 2
      %s31 = sadd.s32 1, %s26
      %p32 = scmp.ge.s32.totalorder %s31, 1
      %s33 = scalar_select %p32, 0, %s31
      %s34 = sadd.s32 1, %s25
      %s35 = scalar_select %p32, %s34, %s25
      %p36 = scmp.ge.s32.totalorder %s35, 2
      %s37 = scalar_select %p36, 0, %s35
      %s39 = sadd.s32 %s38, 1
      %p42 = scmp.eq.s32.totalorder %s18, 1
      %p43 = scmp.ne.s32.totalorder %s38, %s40
      %p44 = scmp.eq.s32.totalorder %s18, 0
      %p45 = por %p43, %p44
      %p46 = scmp.ne.s32.totalorder %s38, %s40
      %p47 = scmp.eq.s32.totalorder %s23, 1
      %p48 = por %p46, %p47
      %p49 = scmp.ne.s32.totalorder %s40, %s41
      %p50 = scmp.eq.s32.totalorder %s23, 0
      %p51 = por %p49, %p50
      %p52 = scmp.ne.s32.totalorder %s40, %s41
      %p53 = scmp.eq.s32.totalorder %s24, 1
      %p54 = por %p52, %p53
      %p56 = scmp.ne.s32.totalorder %s41, %s55
      %p57 = scmp.eq.s32.totalorder %s24, 0
      %p58 = por %p56, %p57
      %s60 = sadd.s32 %s59, 1
      %p63 = scmp.eq.s32.totalorder %s18, 1
      %p64 = scmp.ne.s32.totalorder %s59, %s61
      %p65 = scmp.eq.s32.totalorder %s18, 0
      %p66 = por %p64, %p65
      %p67 = scmp.ne.s32.totalorder %s59, %s61
      %p68 = scmp.eq.s32.totalorder %s23, 1
      %p69 = por %p67, %p68
      %p70 = scmp.ne.s32.totalorder %s61, %s62
      %p71 = scmp.eq.s32.totalorder %s23, 0
      %p72 = por %p70, %p71
      %p73 = scmp.ne.s32.totalorder %s61, %s62
      %p74 = scmp.eq.s32.totalorder %s24, 1
      %p75 = por %p73, %p74
      %p77 = scmp.ne.s32.totalorder %s62, %s76
      %p78 = scmp.eq.s32.totalorder %s24, 0
      %p79 = por %p77, %p78
      %s81 = sadd.s32 %s80, 1
      %p84 = scmp.eq.s32.totalorder %s18, 1
      %p85 = scmp.ne.s32.totalorder %s80, %s82
      %p86 = scmp.eq.s32.totalorder %s18, 0
      %p87 = por %p85, %p86
      %p88 = scmp.ne.s32.totalorder %s80, %s82
      %p89 = scmp.eq.s32.totalorder %s23, 1
      %p90 = por %p88, %p89
      %p91 = scmp.ne.s32.totalorder %s82, %s83
      %p92 = scmp.eq.s32.totalorder %s23, 0
      %p93 = por %p91, %p92
      %p94 = scmp.ne.s32.totalorder %s82, %s83
      %p95 = scmp.eq.s32.totalorder %s24, 1
      %p96 = por %p94, %p95
      %p98 = scmp.ne.s32.totalorder %s83, %s97
      %p99 = scmp.eq.s32.totalorder %s24, 0
      %p100 = por %p98, %p99
      %s102 = sadd.s32 %s101, 1
      %p105 = scmp.eq.s32.totalorder %s18, 1
      %p106 = scmp.ne.s32.totalorder %s101, %s103
      %p107 = scmp.eq.s32.totalorder %s18, 0
      %p108 = por %p106, %p107
      %p109 = scmp.ne.s32.totalorder %s101, %s103
      %p110 = scmp.eq.s32.totalorder %s23, 1
      %p111 = por %p109, %p110
      %p112 = scmp.ne.s32.totalorder %s103, %s104
      %p113 = scmp.eq.s32.totalorder %s23, 0
      %p114 = por %p112, %p113
      %p115 = scmp.ne.s32.totalorder %s103, %s104
      %p116 = scmp.eq.s32.totalorder %s24, 1
      %p117 = por %p115, %p116
      %p119 = scmp.ne.s32.totalorder %s104, %s118
      %p120 = scmp.eq.s32.totalorder %s24, 0
      %p121 = por %p119, %p120
      %s123 = sadd.s32 %s122, 1
      %p126 = scmp.eq.s32.totalorder %s18, 1
      %p127 = scmp.ne.s32.totalorder %s122, %s124
      %p128 = scmp.eq.s32.totalorder %s18, 0
      %p129 = por %p127, %p128
      %p130 = scmp.ne.s32.totalorder %s122, %s124
      %p131 = scmp.eq.s32.totalorder %s23, 1
      %p132 = por %p130, %p131
      %p133 = scmp.ne.s32.totalorder %s124, %s125
      %p134 = scmp.eq.s32.totalorder %s23, 0
      %p135 = por %p133, %p134
      %p136 = scmp.ne.s32.totalorder %s124, %s125
      %p137 = scmp.eq.s32.totalorder %s24, 1
      %p138 = por %p136, %p137
      %p140 = scmp.ne.s32.totalorder %s125, %s139
      %p141 = scmp.eq.s32.totalorder %s24, 0
      %p142 = por %p140, %p141
      %s144 = sadd.s32 %s143, 1
      %p147 = scmp.eq.s32.totalorder %s18, 1
      %p148 = scmp.ne.s32.totalorder %s143, %s145
      %p149 = scmp.eq.s32.totalorder %s18, 0
      %p150 = por %p148, %p149
      %p151 = scmp.ne.s32.totalorder %s143, %s145
      %p152 = scmp.eq.s32.totalorder %s23, 1
      %p153 = por %p151, %p152
      %p154 = scmp.ne.s32.totalorder %s145, %s146
      %p155 = scmp.eq.s32.totalorder %s23, 0
      %p156 = por %p154, %p155
      %p157 = scmp.ne.s32.totalorder %s145, %s146
      %p158 = scmp.eq.s32.totalorder %s24, 1
      %p159 = por %p157, %p158
      %p161 = scmp.ne.s32.totalorder %s146, %s160
      %p162 = scmp.eq.s32.totalorder %s24, 0
      %p163 = por %p161, %p162
      %s165 = sadd.s32 %s164, 1
      %p168 = scmp.eq.s32.totalorder %s18, 1
      %p169 = scmp.ne.s32.totalorder %s164, %s166
      %p170 = scmp.eq.s32.totalorder %s18, 0
      %p171 = por %p169, %p170
      %p172 = scmp.ne.s32.totalorder %s164, %s166
      %p173 = scmp.eq.s32.totalorder %s23, 1
      %p174 = por %p172, %p173
      %p175 = scmp.ne.s32.totalorder %s166, %s167
      %p176 = scmp.eq.s32.totalorder %s23, 0
      %p177 = por %p175, %p176
      %p178 = scmp.ne.s32.totalorder %s166, %s167
      %p179 = scmp.eq.s32.totalorder %s24, 1
      %p180 = por %p178, %p179
      %p182 = scmp.ne.s32.totalorder %s167, %s181
      %p183 = scmp.eq.s32.totalorder %s24, 0
      %p184 = por %p182, %p183
      %s185 = ssub.s32 %s25, %s37
      %p186 = scmp.eq.s32.totalorder %s185, 0
      %s188 = sadd.s32 %s187, 1
      %s189 = scalar_select %p186, %s187, %s188
      %p192 = pneg %p186
      %p193 = scmp.eq.s32.totalorder %s18, 1
      %p194 = por %p192, %p193
      %p195 = scmp.ne.s32.totalorder %s187, %s190
      %p196 = scmp.eq.s32.totalorder %s18, 0
      %p197 = por %p195, %p196
      %p198 = scmp.ne.s32.totalorder %s187, %s190
      %p199 = scmp.eq.s32.totalorder %s23, 1
      %p200 = por %p198, %p199
      %p201 = scmp.ne.s32.totalorder %s190, %s191
      %p202 = scmp.eq.s32.totalorder %s23, 0
      %p203 = por %p201, %p202
      %p204 = scmp.ne.s32.totalorder %s190, %s191
      %p205 = scmp.eq.s32.totalorder %s24, 1
      %p206 = por %p204, %p205
      %p208 = scmp.ne.s32.totalorder %s191, %s207
      %p209 = scmp.eq.s32.totalorder %s24, 0
      %p210 = por %p208, %p209
      %s211 = ssub.s32 %s25, %s37
      %s212 = ssub.s32 %s26, %s33
      %s213 = sor.u32 %s211, %s212
      %p214 = scmp.eq.s32.totalorder %s213, 0
      %s216 = sadd.s32 %s215, 1
      %s217 = scalar_select %p214, %s215, %s216
      %p220 = pneg %p214
      %p221 = scmp.eq.s32.totalorder %s18, 1
      %p222 = por %p220, %p221
      %p223 = scmp.ne.s32.totalorder %s215, %s218
      %p224 = scmp.eq.s32.totalorder %s18, 0
      %p225 = por %p223, %p224
      %p226 = scmp.ne.s32.totalorder %s215, %s218
      %p227 = scmp.eq.s32.totalorder %s23, 1
      %p228 = por %p226, %p227
      %p229 = scmp.ne.s32.totalorder %s218, %s219
      %p230 = scmp.eq.s32.totalorder %s23, 0
      %p231 = por %p229, %p230
      %p232 = scmp.ne.s32.totalorder %s218, %s219
      %p233 = scmp.eq.s32.totalorder %s24, 1
      %p234 = por %p232, %p233
      %p236 = scmp.ne.s32.totalorder %s219, %s235
      %p237 = scmp.eq.s32.totalorder %s24, 0
      %p238 = por %p236, %p237
      %p239 = scmp.le.s32.totalorder 1, %s18
      %p240 = scmp.lt.s32.totalorder %s18, 3
      %p241 = pnand %p239, %p240
      %p242 = pneg %p241
      // Predicated region
      $region9: #{tpu_custom_call.1} parent=5 // pred_check
        _
      $region10: #{tpu_custom_call.1} parent=5 // pred_check_branch
        %244 = sbr.rel (%p241) target = $region12
      $region11: #{tpu_custom_call.1} parent=5 // pred_region
        %s245 = ssub.s32 %s18, 1
        // Predicated region
        $region13: #{tpu_custom_call.1} parent=11 // pred_check
          %p246 = pneg %p51
        $region14: #{tpu_custom_call.1} parent=11 // pred_check_branch
          %248 = sbr.rel (%p246) target = $region16
        $region15: #{tpu_custom_call.1} parent=11 // pred_region
          _
        $region16: #{tpu_custom_call.1} parent=11 // pred_fallthru
          _
        // Predicated region
        $region17: #{tpu_custom_call.1} parent=11 // pred_check
          %p249 = pneg %p72
        $region18: #{tpu_custom_call.1} parent=11 // pred_check_branch
          %251 = sbr.rel (%p249) target = $region20
        $region19: #{tpu_custom_call.1} parent=11 // pred_region
          _
        $region20: #{tpu_custom_call.1} parent=11 // pred_fallthru
          _
        // Predicated region
        $region21: #{tpu_custom_call.1} parent=11 // pred_check
          %p252 = pneg %p93
        $region22: #{tpu_custom_call.1} parent=11 // pred_check_branch
          %254 = sbr.rel (%p252) target = $region24
        $region23: #{tpu_custom_call.1} parent=11 // pred_region
          _
        $region24: #{tpu_custom_call.1} parent=11 // pred_fallthru
          _
        // Predicated region
        $region25: #{tpu_custom_call.1} parent=11 // pred_check
          %p255 = pneg %p114
        $region26: #{tpu_custom_call.1} parent=11 // pred_check_branch
          %257 = sbr.rel (%p255) target = $region28
        $region27: #{tpu_custom_call.1} parent=11 // pred_region
          _
        $region28: #{tpu_custom_call.1} parent=11 // pred_fallthru
          _
        // Predicated region
        $region29: #{tpu_custom_call.1} parent=11 // pred_check
          %p258 = pneg %p135
        $region30: #{tpu_custom_call.1} parent=11 // pred_check_branch
          %260 = sbr.rel (%p258) target = $region32
        $region31: #{tpu_custom_call.1} parent=11 // pred_region
          _
        $region32: #{tpu_custom_call.1} parent=11 // pred_fallthru
          _
        // Predicated region
        $region33: #{tpu_custom_call.1} parent=11 // pred_check
          %p261 = pneg %p156
        $region34: #{tpu_custom_call.1} parent=11 // pred_check_branch
          %263 = sbr.rel (%p261) target = $region36
        $region35: #{tpu_custom_call.1} parent=11 // pred_region
          _
        $region36: #{tpu_custom_call.1} parent=11 // pred_fallthru
          _
        // Predicated region
        $region37: #{tpu_custom_call.1} parent=11 // pred_check
          %p264 = pneg %p177
        $region38: #{tpu_custom_call.1} parent=11 // pred_check_branch
          %266 = sbr.rel (%p264) target = $region40
        $region39: #{tpu_custom_call.1} parent=11 // pred_region
          _
        $region40: #{tpu_custom_call.1} parent=11 // pred_fallthru
          _
      $region12: #{tpu_custom_call.1} parent=5 // pred_fallthru
        _
      %p267 = scmp.lt.s32.totalorder %s18, 2
      // Predicated region
      $region41: #{tpu_custom_call.1} parent=5 // pred_check
        %p268 = pneg %p267
      $region42: #{tpu_custom_call.1} parent=5 // pred_check_branch
        %270 = sbr.rel (%p268) target = $region44
      $region43: #{tpu_custom_call.1} parent=5 // pred_region
        // Predicated region
        $region45: #{tpu_custom_call.1} parent=43 // pred_check
          %p271 = pneg %p197
        $region46: #{tpu_custom_call.1} parent=43 // pred_check_branch
          %273 = sbr.rel (%p271) target = $region48
        $region47: #{tpu_custom_call.1} parent=43 // pred_region
          %p274 = scmp.lt.s32.totalorder %s25, 1
          %s275 = scalar_select %p274, %s25, 1
          %s276 = scalar_lea.vmem %s8, %s275
        $region48: #{tpu_custom_call.1} parent=43 // pred_fallthru
          _
      $region44: #{tpu_custom_call.1} parent=5 // pred_fallthru
        _
      %p277 = scmp.le.s32.totalorder 1, %s18
      %p278 = scmp.lt.s32.totalorder %s18, 3
      %p279 = pnand %p277, %p278
      %p280 = pneg %p279
      // Predicated region
      $region49: #{tpu_custom_call.1} parent=5 // pred_check
        _
      $region50: #{tpu_custom_call.1} parent=5 // pred_check_branch
        %282 = sbr.rel (%p279) target = $region52
      $region51: #{tpu_custom_call.1} parent=5 // pred_region
        %s283 = ssub.s32 %s18, 1
        %p284 = pneg %p51
        %p285 = pneg %p48
        %p286 = pneg %p72
        %p287 = pneg %p69
        %p288 = pneg %p93
        %p289 = pneg %p90
        %p290 = pneg %p114
        %p291 = pneg %p111
        %p292 = pneg %p135
        %p293 = pneg %p132
        %p294 = pneg %p156
        %p295 = pneg %p153
        %p296 = pneg %p177
        %p297 = pneg %p174
        %p298 = scmp.lt.s32.totalorder %s27, 1
        %s299 = scalar_select %p298, %s27, 1
        %s300 = scalar_lea.vmem %s8, %s299
        %p301 = pneg %p203
        %p302 = pneg %p200
        %p303 = pneg %p231
        %p304 = pneg %p228
        %s305 = sand.u32 %s218, 1
        %s306 = scalar_lea.sflag [#allocation6], %s305
        %s307 = sand.u32 %s218, 1
        %s308 = smul.addr %s307, 256
        %s309 = scalar_lea.vmem [#allocation5], %s308
        %p310 = scmp.lt.s32.totalorder %s27, 1
        %s311 = scalar_select %p310, %s27, 1
        %s312 = scalar_lea.vmem %s8, %s311
        %s313 = smul.u32 32, %s28
        %p315 = scmp.eq.s32.totalorder %s28, 0
        // Predicated region
        $region53: #{tpu_custom_call.1} parent=51 // pred_check
          %p316 = pneg %p315
        $region54: #{tpu_custom_call.1} parent=51 // pred_check_branch
          %318 = sbr.rel (%p316) target = $region56
        $region55: #{tpu_custom_call.1} parent=51 // pred_region
          %s319 = smul.u32 %s27, 1440
          %s320 = sshra.s32 %s319, 3
          %s321 = sand.u32 %s319, 7
          %s322 = smul.addr %s320, 4
          %s323 = scalar_lea.vmem %s0, %s322
          %p325 = scmp.lt.u32.totalorder 720, 8
          %p326 = pneg %p325
          // Predicated region
          $region57: #{tpu_custom_call.1} parent=55 // pred_check
            _
          $region58: #{tpu_custom_call.1} parent=55 // pred_check_branch
            %328 = sbr.rel (%p325) target = $region60
          $region59: #{tpu_custom_call.1} parent=55 // pred_region
            %s343 = sand.u32 720, 7
            %p344 = scmp.eq.s32.totalorder %s343, 0
            // Predicated region
            $region72: #{tpu_custom_call.1} parent=59 // pred_check
              %p345 = pneg %p344
            $region73: #{tpu_custom_call.1} parent=59 // pred_check_branch
              %347 = sbr.rel (%p345) target = $region75
            $region74: #{tpu_custom_call.1} parent=59 // pred_region
              loop: start=0, step=1, limit=1
              $region76: #{tpu_custom_call.1} parent=74 // loop_pre_header
                _
              $region77: #{tpu_custom_call.1} parent=74 // loop_header
                %s349 = sphi 0, %s353
                %p350 = scmp.ge.s32.totalorder %s349, 1
                %s354 = sphi %s323, %s323
                %s355 = sphi [#allocation2], [#allocation2]
              $region78: #{tpu_custom_call.1} parent=74 // loop_header_branch
                %352 = sbr.rel (%p350) target = $region82
              $region79: #{tpu_custom_call.1} parent=74 // loop_body
                %v356 = vld [vmem:[%s354] sm:$0xff]
                %357 = vst [vmem:[%s355] sm:$0xff] %v356
                %v358 = vld [vmem:[%s354 + $0x8] sm:$0xff]
                %359 = vst [vmem:[%s355 + $0x8] sm:$0xff] %v358
                %v360 = vld [vmem:[%s354 + $0x10] sm:$0xff]
                %361 = vst [vmem:[%s355 + $0x10] sm:$0xff] %v360
                %v362 = vld [vmem:[%s354 + $0x18] sm:$0xff]
                %363 = vst [vmem:[%s355 + $0x18] sm:$0xff] %v362
                %v364 = vld [vmem:[%s354 + $0x20] sm:$0xff]
                %365 = vst [vmem:[%s355 + $0x20] sm:$0xff] %v364
                %v366 = vld [vmem:[%s354 + $0x28] sm:$0xff]
                %367 = vst [vmem:[%s355 + $0x28] sm:$0xff] %v366
                %v368 = vld [vmem:[%s354 + $0x30] sm:$0xff]
                %369 = vst [vmem:[%s355 + $0x30] sm:$0xff] %v368
                %v370 = vld [vmem:[%s354 + $0x38] sm:$0xff]
                %371 = vst [vmem:[%s355 + $0x38] sm:$0xff] %v370
                %v372 = vld [vmem:[%s354 + $0x40] sm:$0xff]
                %373 = vst [vmem:[%s355 + $0x40] sm:$0xff] %v372
                %v374 = vld [vmem:[%s354 + $0x48] sm:$0xff]
                %375 = vst [vmem:[%s355 + $0x48] sm:$0xff] %v374
                %v376 = vld [vmem:[%s354 + $0x50] sm:$0xff]
                %377 = vst [vmem:[%s355 + $0x50] sm:$0xff] %v376
                %v378 = vld [vmem:[%s354 + $0x58] sm:$0xff]
                %379 = vst [vmem:[%s355 + $0x58] sm:$0xff] %v378
                %v380 = vld [vmem:[%s354 + $0x60] sm:$0xff]
                %381 = vst [vmem:[%s355 + $0x60] sm:$0xff] %v380
                %v382 = vld [vmem:[%s354 + $0x68] sm:$0xff]
                %383 = vst [vmem:[%s355 + $0x68] sm:$0xff] %v382
                %v384 = vld [vmem:[%s354 + $0x70] sm:$0xff]
                %385 = vst [vmem:[%s355 + $0x70] sm:$0xff] %v384
                %v386 = vld [vmem:[%s354 + $0x78] sm:$0xff]
                %387 = vst [vmem:[%s355 + $0x78] sm:$0xff] %v386
                %v388 = vld [vmem:[%s354 + $0x80] sm:$0xff]
                %389 = vst [vmem:[%s355 + $0x80] sm:$0xff] %v388
                %v390 = vld [vmem:[%s354 + $0x88] sm:$0xff]
                %391 = vst [vmem:[%s355 + $0x88] sm:$0xff] %v390
                %v392 = vld [vmem:[%s354 + $0x90] sm:$0xff]
                %393 = vst [vmem:[%s355 + $0x90] sm:$0xff] %v392
                %v394 = vld [vmem:[%s354 + $0x98] sm:$0xff]
                %395 = vst [vmem:[%s355 + $0x98] sm:$0xff] %v394
                %v396 = vld [vmem:[%s354 + $0xa0] sm:$0xff]
                %397 = vst [vmem:[%s355 + $0xa0] sm:$0xff] %v396
                %v398 = vld [vmem:[%s354 + $0xa8] sm:$0xff]
                %399 = vst [vmem:[%s355 + $0xa8] sm:$0xff] %v398
                %v400 = vld [vmem:[%s354 + $0xb0] sm:$0xff]
                %401 = vst [vmem:[%s355 + $0xb0] sm:$0xff] %v400
                %v402 = vld [vmem:[%s354 + $0xb8] sm:$0xff]
                %403 = vst [vmem:[%s355 + $0xb8] sm:$0xff] %v402
                %v404 = vld [vmem:[%s354 + $0xc0] sm:$0xff]
                %405 = vst [vmem:[%s355 + $0xc0] sm:$0xff] %v404
                %v406 = vld [vmem:[%s354 + $0xc8] sm:$0xff]
                %407 = vst [vmem:[%s355 + $0xc8] sm:$0xff] %v406
                %v408 = vld [vmem:[%s354 + $0xd0] sm:$0xff]
                %409 = vst [vmem:[%s355 + $0xd0] sm:$0xff] %v408
                %v410 = vld [vmem:[%s354 + $0xd8] sm:$0xff]
                %411 = vst [vmem:[%s355 + $0xd8] sm:$0xff] %v410
                %v412 = vld [vmem:[%s354 + $0xe0] sm:$0xff]
                %413 = vst [vmem:[%s355 + $0xe0] sm:$0xff] %v412
                %v414 = vld [vmem:[%s354 + $0xe8] sm:$0xff]
                %415 = vst [vmem:[%s355 + $0xe8] sm:$0xff] %v414
                %v416 = vld [vmem:[%s354 + $0xf0] sm:$0xff]
                %417 = vst [vmem:[%s355 + $0xf0] sm:$0xff] %v416
                %v418 = vld [vmem:[%s354 + $0xf8] sm:$0xff]
                %419 = vst [vmem:[%s355 + $0xf8] sm:$0xff] %v418
                %v420 = vld [vmem:[%s354 + $0x100] sm:$0xff]
                %421 = vst [vmem:[%s355 + $0x100] sm:$0xff] %v420
                %v422 = vld [vmem:[%s354 + $0x108] sm:$0xff]
                %423 = vst [vmem:[%s355 + $0x108] sm:$0xff] %v422
                %v424 = vld [vmem:[%s354 + $0x110] sm:$0xff]
                %425 = vst [vmem:[%s355 + $0x110] sm:$0xff] %v424
                %v426 = vld [vmem:[%s354 + $0x118] sm:$0xff]
                %427 = vst [vmem:[%s355 + $0x118] sm:$0xff] %v426
                %v428 = vld [vmem:[%s354 + $0x120] sm:$0xff]
                %429 = vst [vmem:[%s355 + $0x120] sm:$0xff] %v428
                %v430 = vld [vmem:[%s354 + $0x128] sm:$0xff]
                %431 = vst [vmem:[%s355 + $0x128] sm:$0xff] %v430
                %v432 = vld [vmem:[%s354 + $0x130] sm:$0xff]
                %433 = vst [vmem:[%s355 + $0x130] sm:$0xff] %v432
                %v434 = vld [vmem:[%s354 + $0x138] sm:$0xff]
                %435 = vst [vmem:[%s355 + $0x138] sm:$0xff] %v434
                %v436 = vld [vmem:[%s354 + $0x140] sm:$0xff]
                %437 = vst [vmem:[%s355 + $0x140] sm:$0xff] %v436
                %v438 = vld [vmem:[%s354 + $0x148] sm:$0xff]
                %439 = vst [vmem:[%s355 + $0x148] sm:$0xff] %v438
                %v440 = vld [vmem:[%s354 + $0x150] sm:$0xff]
                %441 = vst [vmem:[%s355 + $0x150] sm:$0xff] %v440
                %v442 = vld [vmem:[%s354 + $0x158] sm:$0xff]
                %443 = vst [vmem:[%s355 + $0x158] sm:$0xff] %v442
                %v444 = vld [vmem:[%s354 + $0x160] sm:$0xff]
                %445 = vst [vmem:[%s355 + $0x160] sm:$0xff] %v444
                %v446 = vld [vmem:[%s354 + $0x168] sm:$0xff]
                %447 = vst [vmem:[%s355 + $0x168] sm:$0xff] %v446
                %v448 = vld [vmem:[%s354 + $0x170] sm:$0xff]
                %449 = vst [vmem:[%s355 + $0x170] sm:$0xff] %v448
                %v450 = vld [vmem:[%s354 + $0x178] sm:$0xff]
                %451 = vst [vmem:[%s355 + $0x178] sm:$0xff] %v450
                %v452 = vld [vmem:[%s354 + $0x180] sm:$0xff]
                %453 = vst [vmem:[%s355 + $0x180] sm:$0xff] %v452
                %v454 = vld [vmem:[%s354 + $0x188] sm:$0xff]
                %455 = vst [vmem:[%s355 + $0x188] sm:$0xff] %v454
                %v456 = vld [vmem:[%s354 + $0x190] sm:$0xff]
                %457 = vst [vmem:[%s355 + $0x190] sm:$0xff] %v456
                %v458 = vld [vmem:[%s354 + $0x198] sm:$0xff]
                %459 = vst [vmem:[%s355 + $0x198] sm:$0xff] %v458
                %v460 = vld [vmem:[%s354 + $0x1a0] sm:$0xff]
                %461 = vst [vmem:[%s355 + $0x1a0] sm:$0xff] %v460
                %v462 = vld [vmem:[%s354 + $0x1a8] sm:$0xff]
                %463 = vst [vmem:[%s355 + $0x1a8] sm:$0xff] %v462
                %v464 = vld [vmem:[%s354 + $0x1b0] sm:$0xff]
                %465 = vst [vmem:[%s355 + $0x1b0] sm:$0xff] %v464
                %v466 = vld [vmem:[%s354 + $0x1b8] sm:$0xff]
                %467 = vst [vmem:[%s355 + $0x1b8] sm:$0xff] %v466
                %v468 = vld [vmem:[%s354 + $0x1c0] sm:$0xff]
                %469 = vst [vmem:[%s355 + $0x1c0] sm:$0xff] %v468
                %v470 = vld [vmem:[%s354 + $0x1c8] sm:$0xff]
                %471 = vst [vmem:[%s355 + $0x1c8] sm:$0xff] %v470
                %v472 = vld [vmem:[%s354 + $0x1d0] sm:$0xff]
                %473 = vst [vmem:[%s355 + $0x1d0] sm:$0xff] %v472
                %v474 = vld [vmem:[%s354 + $0x1d8] sm:$0xff]
                %475 = vst [vmem:[%s355 + $0x1d8] sm:$0xff] %v474
                %v476 = vld [vmem:[%s354 + $0x1e0] sm:$0xff]
                %477 = vst [vmem:[%s355 + $0x1e0] sm:$0xff] %v476
                %v478 = vld [vmem:[%s354 + $0x1e8] sm:$0xff]
                %479 = vst [vmem:[%s355 + $0x1e8] sm:$0xff] %v478
                %v480 = vld [vmem:[%s354 + $0x1f0] sm:$0xff]
                %481 = vst [vmem:[%s355 + $0x1f0] sm:$0xff] %v480
                %v482 = vld [vmem:[%s354 + $0x1f8] sm:$0xff]
                %483 = vst [vmem:[%s355 + $0x1f8] sm:$0xff] %v482
                %v484 = vld [vmem:[%s354 + $0x200] sm:$0xff]
                %485 = vst [vmem:[%s355 + $0x200] sm:$0xff] %v484
                %v486 = vld [vmem:[%s354 + $0x208] sm:$0xff]
                %487 = vst [vmem:[%s355 + $0x208] sm:$0xff] %v486
                %v488 = vld [vmem:[%s354 + $0x210] sm:$0xff]
                %489 = vst [vmem:[%s355 + $0x210] sm:$0xff] %v488
                %v490 = vld [vmem:[%s354 + $0x218] sm:$0xff]
                %491 = vst [vmem:[%s355 + $0x218] sm:$0xff] %v490
                %v492 = vld [vmem:[%s354 + $0x220] sm:$0xff]
                %493 = vst [vmem:[%s355 + $0x220] sm:$0xff] %v492
                %v494 = vld [vmem:[%s354 + $0x228] sm:$0xff]
                %495 = vst [vmem:[%s355 + $0x228] sm:$0xff] %v494
                %v496 = vld [vmem:[%s354 + $0x230] sm:$0xff]
                %497 = vst [vmem:[%s355 + $0x230] sm:$0xff] %v496
                %v498 = vld [vmem:[%s354 + $0x238] sm:$0xff]
                %499 = vst [vmem:[%s355 + $0x238] sm:$0xff] %v498
                %v500 = vld [vmem:[%s354 + $0x240] sm:$0xff]
                %501 = vst [vmem:[%s355 + $0x240] sm:$0xff] %v500
                %v502 = vld [vmem:[%s354 + $0x248] sm:$0xff]
                %503 = vst [vmem:[%s355 + $0x248] sm:$0xff] %v502
                %v504 = vld [vmem:[%s354 + $0x250] sm:$0xff]
                %505 = vst [vmem:[%s355 + $0x250] sm:$0xff] %v504
                %v506 = vld [vmem:[%s354 + $0x258] sm:$0xff]
                %507 = vst [vmem:[%s355 + $0x258] sm:$0xff] %v506
                %v508 = vld [vmem:[%s354 + $0x260] sm:$0xff]
                %509 = vst [vmem:[%s355 + $0x260] sm:$0xff] %v508
                %v510 = vld [vmem:[%s354 + $0x268] sm:$0xff]
                %511 = vst [vmem:[%s355 + $0x268] sm:$0xff] %v510
                %v512 = vld [vmem:[%s354 + $0x270] sm:$0xff]
                %513 = vst [vmem:[%s355 + $0x270] sm:$0xff] %v512
                %v514 = vld [vmem:[%s354 + $0x278] sm:$0xff]
                %515 = vst [vmem:[%s355 + $0x278] sm:$0xff] %v514
                %v516 = vld [vmem:[%s354 + $0x280] sm:$0xff]
                %517 = vst [vmem:[%s355 + $0x280] sm:$0xff] %v516
                %v518 = vld [vmem:[%s354 + $0x288] sm:$0xff]
                %519 = vst [vmem:[%s355 + $0x288] sm:$0xff] %v518
                %v520 = vld [vmem:[%s354 + $0x290] sm:$0xff]
                %521 = vst [vmem:[%s355 + $0x290] sm:$0xff] %v520
                %v522 = vld [vmem:[%s354 + $0x298] sm:$0xff]
                %523 = vst [vmem:[%s355 + $0x298] sm:$0xff] %v522
                %v524 = vld [vmem:[%s354 + $0x2a0] sm:$0xff]
                %525 = vst [vmem:[%s355 + $0x2a0] sm:$0xff] %v524
                %v526 = vld [vmem:[%s354 + $0x2a8] sm:$0xff]
                %527 = vst [vmem:[%s355 + $0x2a8] sm:$0xff] %v526
                %v528 = vld [vmem:[%s354 + $0x2b0] sm:$0xff]
                %529 = vst [vmem:[%s355 + $0x2b0] sm:$0xff] %v528
                %v530 = vld [vmem:[%s354 + $0x2b8] sm:$0xff]
                %531 = vst [vmem:[%s355 + $0x2b8] sm:$0xff] %v530
                %v532 = vld [vmem:[%s354 + $0x2c0] sm:$0xff]
                %533 = vst [vmem:[%s355 + $0x2c0] sm:$0xff] %v532
                %v534 = vld [vmem:[%s354 + $0x2c8] sm:$0xff]
                %535 = vst [vmem:[%s355 + $0x2c8] sm:$0xff] %v534
              $region80: #{tpu_custom_call.1} parent=74 // loop_footer
                %s353 = sadd.s32 1, %s349
              $region81: #{tpu_custom_call.1} parent=74 // loop_footer_branch
                %348 = sbr.rel target = $region77
              $region82: #{tpu_custom_call.1} parent=74 // loop_exit
                _
            $region75: #{tpu_custom_call.1} parent=59 // pred_fallthru
              _
            %p536 = pneg %p344
            // Predicated region
            $region83: #{tpu_custom_call.1} parent=59 // pred_check
              _
            $region84: #{tpu_custom_call.1} parent=59 // pred_check_branch
              %538 = sbr.rel (%p344) target = $region86
            $region85: #{tpu_custom_call.1} parent=59 // pred_region
              %s539 = sand.u32 720, 7
            $region86: #{tpu_custom_call.1} parent=59 // pred_fallthru
              _
          $region60: #{tpu_custom_call.1} parent=55 // pred_fallthru
            _
          // Predicated region
          $region61: #{tpu_custom_call.1} parent=55 // pred_check
            %p329 = pneg %p325
          $region62: #{tpu_custom_call.1} parent=55 // pred_check_branch
            %331 = sbr.rel (%p329) target = $region64
          $region63: #{tpu_custom_call.1} parent=55 // pred_region
            %s332 = sshllo.u32 0, 720
            loop: start=0, step=1, limit=1
            $region65: #{tpu_custom_call.1} parent=63 // loop_pre_header
              _
            $region66: #{tpu_custom_call.1} parent=63 // loop_header
              %s334 = sphi 0, %s338
              %p335 = scmp.ge.s32.totalorder %s334, 1
              %s339 = sphi %s323, %s323
              %s340 = sphi [#allocation2], [#allocation2]
            $region67: #{tpu_custom_call.1} parent=63 // loop_header_branch
              %337 = sbr.rel (%p335) target = $region71
            $region68: #{tpu_custom_call.1} parent=63 // loop_body
              %v341 = vld [vmem:[%s339] sm:%s332]
              %342 = vst [vmem:[%s340] sm:%s332] %v341
            $region69: #{tpu_custom_call.1} parent=63 // loop_footer
              %s338 = sadd.s32 1, %s334
            $region70: #{tpu_custom_call.1} parent=63 // loop_footer_branch
              %333 = sbr.rel target = $region66
            $region71: #{tpu_custom_call.1} parent=63 // loop_exit
              _
          $region64: #{tpu_custom_call.1} parent=55 // pred_fallthru
            _
          // Predicated region
          $region87: #{tpu_custom_call.1} parent=55 // pred_check
            _
          $region88: #{tpu_custom_call.1} parent=55 // pred_check_branch
            %542 = sbr.rel (0) target = $region90
          $region89: #{tpu_custom_call.1} parent=55 // pred_region
            %543 = vsyncadd [#allocation3], 11520
          $region90: #{tpu_custom_call.1} parent=55 // pred_fallthru
            _
        $region56: #{tpu_custom_call.1} parent=51 // pred_fallthru
          _
        %s544 = smul.u32 4, 180
        %s545 = smul.u32 %s544, 1
        %s546 = sshll.u32 %s545, 4
        %547 = dma.done [#allocation3], %s546
        %v548 = vld [vmem:[%s1] sm:$0xf]
        %v549 = vld [vmem:[%s1 + $0x4] sm:$0xf]
        %v550 = vld [vmem:[%s1 + $0x8] sm:$0xf]
        %v551 = vld [vmem:[%s1 + $0xc] sm:$0xf]
        %v552 = vld [vmem:[%s1 + $0x10] sm:$0xf]
        %v553 = vld [vmem:[%s1 + $0x14] sm:$0xf]
        %v554 = vld [vmem:[%s1 + $0x18] sm:$0xf]
        %v555 = vld [vmem:[%s1 + $0x1c] sm:$0xf]
        %v556 = vld [vmem:[%s1 + $0x20] sm:$0xf]
        %v557 = vld [vmem:[%s1 + $0x24] sm:$0xf]
        %v558 = vld [vmem:[%s1 + $0x28] sm:$0xf]
        %v559 = vld [vmem:[%s1 + $0x2c] sm:$0xf]
        %v560 = vld [vmem:[%s1 + $0x30] sm:$0xf]
        %v561 = vld [vmem:[%s1 + $0x34] sm:$0xf]
        %v562 = vld [vmem:[%s1 + $0x38] sm:$0xf]
        %v563 = vld [vmem:[%s1 + $0x3c] sm:$0xf]
        %v564 = vld [vmem:[%s1 + $0x40] sm:$0xf]
        %v565 = vld [vmem:[%s1 + $0x44] sm:$0xf]
        %v566 = vld [vmem:[%s1 + $0x48] sm:$0xf]
        %v567 = vld [vmem:[%s1 + $0x4c] sm:$0xf]
        %v568 = vld [vmem:[%s1 + $0x50] sm:$0xf]
        %v569 = vld [vmem:[%s1 + $0x54] sm:$0xf]
        %v570 = vld [vmem:[%s1 + $0x58] sm:$0xf]
        %v571 = vld [vmem:[%s1 + $0x5c] sm:$0xf]
        %v572 = vld [vmem:[%s1 + $0x60] sm:$0xf]
        %v573 = vld [vmem:[%s1 + $0x64] sm:$0xf]
        %v574 = vld [vmem:[%s1 + $0x68] sm:$0xf]
        %v575 = vld [vmem:[%s1 + $0x6c] sm:$0xf]
        %v576 = vld [vmem:[%s1 + $0x70] sm:$0xf]
        %v577 = vld [vmem:[%s1 + $0x74] sm:$0xf]
        %v578 = vld [vmem:[%s1 + $0x78] sm:$0xf]
        %v579 = vld [vmem:[%s1 + $0x7c] sm:$0xf]
        %s580 = scalar_lea.vmem %s1, 128
        %v581 = vld [vmem:[%s580] sm:$0xf]
        %v582 = vld [vmem:[%s580 + $0x4] sm:$0xf]
        %v583 = vld [vmem:[%s580 + $0x8] sm:$0xf]
        %v584 = vld [vmem:[%s580 + $0xc] sm:$0xf]
        %v585 = vld [vmem:[%s580 + $0x10] sm:$0xf]
        %v586 = vld [vmem:[%s580 + $0x14] sm:$0xf]
        %v587 = vld [vmem:[%s580 + $0x18] sm:$0xf]
        %v588 = vld [vmem:[%s580 + $0x1c] sm:$0xf]
        %v589 = vld [vmem:[%s580 + $0x20] sm:$0xf]
        %v590 = vld [vmem:[%s580 + $0x24] sm:$0xf]
        %v591 = vld [vmem:[%s580 + $0x28] sm:$0xf]
        %v592 = vld [vmem:[%s580 + $0x2c] sm:$0xf]
        %v593 = vld [vmem:[%s580 + $0x30] sm:$0xf]
        %v594 = vld [vmem:[%s580 + $0x34] sm:$0xf]
        %v595 = vld [vmem:[%s580 + $0x38] sm:$0xf]
        %v596 = vld [vmem:[%s580 + $0x3c] sm:$0xf]
        %v597 = vld [vmem:[%s580 + $0x40] sm:$0xf]
        %v598 = vld [vmem:[%s580 + $0x44] sm:$0xf]
        %v599 = vld [vmem:[%s580 + $0x48] sm:$0xf]
        %v600 = vld [vmem:[%s580 + $0x4c] sm:$0xf]
        %v601 = vld [vmem:[%s580 + $0x50] sm:$0xf]
        %v602 = vld [vmem:[%s580 + $0x54] sm:$0xf]
        %v603 = vld [vmem:[%s580 + $0x58] sm:$0xf]
        %v604 = vld [vmem:[%s580 + $0x5c] sm:$0xf]
        %v605 = vld [vmem:[%s580 + $0x60] sm:$0xf]
        %v606 = vld [vmem:[%s580 + $0x64] sm:$0xf]
        %v607 = vld [vmem:[%s580 + $0x68] sm:$0xf]
        %v608 = vld [vmem:[%s580 + $0x6c] sm:$0xf]
        %v609 = vld [vmem:[%s580 + $0x70] sm:$0xf]
        %v610 = vld [vmem:[%s580 + $0x74] sm:$0xf]
        %v611 = vld [vmem:[%s580 + $0x78] sm:$0xf]
        %v612 = vld [vmem:[%s580 + $0x7c] sm:$0xf]
        %v613 = vld [vmem:[#allocation2 + $0x128] sm:$0xff]
        %v614 = vld [vmem:[#allocation2 + $0x130] sm:$0xff]
        %v615 = vld [vmem:[#allocation2 + $0x138] sm:$0xff]
        %v616 = vld [vmem:[#allocation2 + $0x140] sm:$0xff]
        %v617 = vld [vmem:[#allocation2 + $0x148] sm:$0xff]
        %v618 = vld [vmem:[#allocation2 + $0x150] sm:$0xff]
        %v619 = vld [vmem:[#allocation2 + $0x158] sm:$0xff]
        %v620 = vld [vmem:[#allocation2 + $0x160] sm:$0xff]
        %v621 = vld [vmem:[#allocation2 + $0x168] sm:$0xff]
        %v622 = vld [vmem:[#allocation2 + $0x170] sm:$0xff]
        %v623 = vld [vmem:[#allocation2 + $0x178] sm:$0xff]
        %v624 = vld [vmem:[#allocation2 + $0x180] sm:$0xff]
        %v625 = vld [vmem:[#allocation2 + $0x188] sm:$0xff]
        %v626 = vld [vmem:[#allocation2 + $0x190] sm:$0xff]
        %v627 = vld [vmem:[#allocation2 + $0x198] sm:$0xff]
        %v628 = vld [vmem:[#allocation2 + $0x1a0] sm:$0xff]
        %v629 = vld [vmem:[%s2] sm:$0xff]
        %v630 = vld [vmem:[%s2 + $0x8] sm:$0xff]
        %v633 = vunpack.c.l.b16 %v629
        %v634 = vunpack.c.h.b16 %v629
        %v635 = vunpack.c.l.b16 %v630
        %v636 = vunpack.c.h.b16 %v630
        %v637 = vpack.c.b16 %v633, %v633
        %v638 = vpack.c.b16 %v634, %v634
        %v639 = vpack.c.b16 %v635, %v635
        %v640 = vpack.c.b16 %v636, %v636
        %vm641 = vcmask 64512
        %v643 = vsel %vm641, %v613, 0
        %v646 = vsel %vm641, %v614, 0
        %v649 = vsel %vm641, %v615, 0
        %v652 = vsel %vm641, %v616, 0
        %v655 = vsel %vm641, %v617, 0
        %v658 = vsel %vm641, %v618, 0
        %v661 = vsel %vm641, %v619, 0
        %v664 = vsel %vm641, %v620, 0
        %v667 = vsel %vm641, %v621, 0
        %v670 = vsel %vm641, %v622, 0
        %v673 = vsel %vm641, %v623, 0
        %v676 = vsel %vm641, %v624, 0
        %v679 = vsel %vm641, %v625, 0
        %v682 = vsel %vm641, %v626, 0
        %v685 = vsel %vm641, %v627, 0
        %v688 = vsel %vm641, %v628, 0
        %vm690 = vcmask 1043456
        %v692 = vsel %vm690, %v637, 0
        %v695 = vsel %vm690, %v638, 0
        %v698 = vsel %vm690, %v639, 0
        %v701 = vsel %vm690, %v640, 0
        %703 = vmatprep.subr.bf16.mxu0 %v695
        %704 = vmatpush1.bf16.msra.mxu0 %v692
        %705 = vmatprep.subr.bf16.mxu0 0
        %706 = vmatpush1.bf16.msra.mxu0 0
        %707 = vmatprep.subr.bf16.mxu0 0
        %708 = vmatpush1.bf16.msra.mxu0 0
        %709 = vmatprep.subr.bf16.mxu0 0
        %710 = vmatpush1.bf16.msra.mxu0 0
        %711 = vmatprep.subr.bf16.mxu0 0
        %712 = vmatpush1.bf16.msra.mxu0 0
        %713 = vmatprep.subr.bf16.mxu0 0
        %714 = vmatpush1.bf16.msra.mxu0 0
        %715 = vmatprep.subr.bf16.mxu0 0
        %716 = vmatpush1.bf16.msra.mxu0 0
        %717 = vmatprep.subr.bf16.mxu0 0
        %718 = vmatpush1.bf16.msra.mxu0 0
        %719 = vmatprep.subr.bf16.mxu0 0
        %720 = vmatpush1.bf16.msra.mxu0 0
        %721 = vmatprep.subr.bf16.mxu0 0
        %722 = vmatpush1.bf16.msra.mxu0 0
        %723 = vmatprep.subr.bf16.mxu0 0
        %724 = vmatpush1.bf16.msra.mxu0 0
        %725 = vmatprep.subr.bf16.mxu0 0
        %726 = vmatpush1.bf16.msra.mxu0 0
        %727 = vmatprep.subr.bf16.mxu0 0
        %728 = vmatpush1.bf16.msra.mxu0 0
        %729 = vmatprep.subr.bf16.mxu0 0
        %730 = vmatpush1.bf16.msra.mxu0 0
        %731 = vmatprep.subr.bf16.mxu0 0
        %732 = vmatpush1.bf16.msra.mxu0 0
        %733 = vmatprep.subr.bf16.mxu0 0
        %734 = vmatpush1.bf16.msra.mxu0 0
        %735 = vmatprep.mubr.bf16.mxu0 0
        %736 = vmatmul.mubr.bf16.gmra.mrb[0].mxu0 %v643
        %v737 = vpop.f32.mrb[0].mxu0
        %v738 = vadd.f32 0.0, %v737
        %v739 = vpop.f32.mrb[0].mxu0
        %v740 = vadd.f32 0.0, %v739
        %v741 = vpop.f32.mrb[0].mxu0
        %v742 = vadd.f32 0.0, %v741
        %v743 = vpop.f32.mrb[0].mxu0
        %v744 = vadd.f32 0.0, %v743
        %745 = vmatprep.mubr.bf16.mxu0 0
        %746 = vmatmul.mubr.bf16.gmra.mrb[0].mxu0 %v646
        %v747 = vpop.f32.mrb[0].mxu0
        %v748 = vadd.f32 0.0, %v747
        %v749 = vpop.f32.mrb[0].mxu0
        %v750 = vadd.f32 0.0, %v749
        %v751 = vpop.f32.mrb[0].mxu0
        %v752 = vadd.f32 0.0, %v751
        %v753 = vpop.f32.mrb[0].mxu0
        %v754 = vadd.f32 0.0, %v753
        %755 = vmatprep.mubr.bf16.mxu0 0
        %756 = vmatmul.mubr.bf16.gmra.mrb[0].mxu0 %v649
        %v757 = vpop.f32.mrb[0].mxu0
        %v758 = vadd.f32 0.0, %v757
        %v759 = vpop.f32.mrb[0].mxu0
        %v760 = vadd.f32 0.0, %v759
        %v761 = vpop.f32.mrb[0].mxu0
        %v762 = vadd.f32 0.0, %v761
        %v763 = vpop.f32.mrb[0].mxu0
        %v764 = vadd.f32 0.0, %v763
        %765 = vmatprep.mubr.bf16.mxu0 0
        %766 = vmatmul.mubr.bf16.gmra.mrb[0].mxu0 %v652
        %v767 = vpop.f32.mrb[0].mxu0
        %v768 = vadd.f32 0.0, %v767
        %v769 = vpop.f32.mrb[0].mxu0
        %v770 = vadd.f32 0.0, %v769
        %v771 = vpop.f32.mrb[0].mxu0
        %v772 = vadd.f32 0.0, %v771
        %v773 = vpop.f32.mrb[0].mxu0
        %v774 = vadd.f32 0.0, %v773
        %775 = vmatprep.mubr.bf16.mxu0 0
        %776 = vmatmul.mubr.bf16.gmra.mrb[0].mxu0 %v655
        %v777 = vpop.f32.mrb[0].mxu0
        %v778 = vadd.f32 0.0, %v777
        %v779 = vpop.f32.mrb[0].mxu0
        %v780 = vadd.f32 0.0, %v779
        %v781 = vpop.f32.mrb[0].mxu0
        %v782 = vadd.f32 0.0, %v781
        %v783 = vpop.f32.mrb[0].mxu0
        %v784 = vadd.f32 0.0, %v783
        %785 = vmatprep.mubr.bf16.mxu0 0
        %786 = vmatmul.mubr.bf16.gmra.mrb[0].mxu0 %v658
        %v787 = vpop.f32.mrb[0].mxu0
        %v788 = vadd.f32 0.0, %v787
        %v789 = vpop.f32.mrb[0].mxu0
        %v790 = vadd.f32 0.0, %v789
        %v791 = vpop.f32.mrb[0].mxu0
        %v792 = vadd.f32 0.0, %v791
        %v793 = vpop.f32.mrb[0].mxu0
        %v794 = vadd.f32 0.0, %v793
        %795 = vmatprep.mubr.bf16.mxu0 0
        %796 = vmatmul.mubr.bf16.gmra.mrb[0].mxu0 %v661
        %v797 = vpop.f32.mrb[0].mxu0
        %v798 = vadd.f32 0.0, %v797
        %v799 = vpop.f32.mrb[0].mxu0
        %v800 = vadd.f32 0.0, %v799
        %v801 = vpop.f32.mrb[0].mxu0
        %v802 = vadd.f32 0.0, %v801
        %v803 = vpop.f32.mrb[0].mxu0
        %v804 = vadd.f32 0.0, %v803
        %805 = vmatprep.mubr.bf16.mxu0 0
        %806 = vmatmul.mubr.bf16.gmra.mrb[0].mxu0 %v664
        %v807 = vpop.f32.mrb[0].mxu0
        %v808 = vadd.f32 0.0, %v807
        %v809 = vpop.f32.mrb[0].mxu0
        %v810 = vadd.f32 0.0, %v809
        %v811 = vpop.f32.mrb[0].mxu0
        %v812 = vadd.f32 0.0, %v811
        %v813 = vpop.f32.mrb[0].mxu0
        %v814 = vadd.f32 0.0, %v813
        %815 = vmatprep.mubr.bf16.mxu0 0
        %816 = vmatmul.mubr.bf16.gmra.mrb[0].mxu0 %v667
        %v817 = vpop.f32.mrb[0].mxu0
        %v818 = vadd.f32 0.0, %v817
        %v819 = vpop.f32.mrb[0].mxu0
        %v820 = vadd.f32 0.0, %v819
        %v821 = vpop.f32.mrb[0].mxu0
        %v822 = vadd.f32 0.0, %v821
        %v823 = vpop.f32.mrb[0].mxu0
        %v824 = vadd.f32 0.0, %v823
        %825 = vmatprep.mubr.bf16.mxu0 0
        %826 = vmatmul.mubr.bf16.gmra.mrb[0].mxu0 %v670
        %v827 = vpop.f32.mrb[0].mxu0
        %v828 = vadd.f32 0.0, %v827
        %v829 = vpop.f32.mrb[0].mxu0
        %v830 = vadd.f32 0.0, %v829
        %v831 = vpop.f32.mrb[0].mxu0
        %v832 = vadd.f32 0.0, %v831
        %v833 = vpop.f32.mrb[0].mxu0
        %v834 = vadd.f32 0.0, %v833
        %835 = vmatprep.mubr.bf16.mxu0 0
        %836 = vmatmul.mubr.bf16.gmra.mrb[0].mxu0 %v673
        %v837 = vpop.f32.mrb[0].mxu0
        %v838 = vadd.f32 0.0, %v837
        %v839 = vpop.f32.mrb[0].mxu0
        %v840 = vadd.f32 0.0, %v839
        %v841 = vpop.f32.mrb[0].mxu0
        %v842 = vadd.f32 0.0, %v841
        %v843 = vpop.f32.mrb[0].mxu0
        %v844 = vadd.f32 0.0, %v843
        %845 = vmatprep.mubr.bf16.mxu0 0
        %846 = vmatmul.mubr.bf16.gmra.mrb[0].mxu0 %v676
        %v847 = vpop.f32.mrb[0].mxu0
        %v848 = vadd.f32 0.0, %v847
        %v849 = vpop.f32.mrb[0].mxu0
        %v850 = vadd.f32 0.0, %v849
        %v851 = vpop.f32.mrb[0].mxu0
        %v852 = vadd.f32 0.0, %v851
        %v853 = vpop.f32.mrb[0].mxu0
        %v854 = vadd.f32 0.0, %v853
        %855 = vmatprep.mubr.bf16.mxu0 0
        %856 = vmatmul.mubr.bf16.gmra.mrb[0].mxu0 %v679
        %v857 = vpop.f32.mrb[0].mxu0
        %v858 = vadd.f32 0.0, %v857
        %v859 = vpop.f32.mrb[0].mxu0
        %v860 = vadd.f32 0.0, %v859
        %v861 = vpop.f32.mrb[0].mxu0
        %v862 = vadd.f32 0.0, %v861
        %v863 = vpop.f32.mrb[0].mxu0
        %v864 = vadd.f32 0.0, %v863
        %865 = vmatprep.mubr.bf16.mxu0 0
        %866 = vmatmul.mubr.bf16.gmra.mrb[0].mxu0 %v682
        %v867 = vpop.f32.mrb[0].mxu0
        %v868 = vadd.f32 0.0, %v867
        %v869 = vpop.f32.mrb[0].mxu0
        %v870 = vadd.f32 0.0, %v869
        %v871 = vpop.f32.mrb[0].mxu0
        %v872 = vadd.f32 0.0, %v871
        %v873 = vpop.f32.mrb[0].mxu0
        %v874 = vadd.f32 0.0, %v873
        %875 = vmatprep.mubr.bf16.mxu0 0
        %876 = vmatmul.mubr.bf16.gmra.mrb[0].mxu0 %v685
        %v877 = vpop.f32.mrb[0].mxu0
        %v878 = vadd.f32 0.0, %v877
        %v879 = vpop.f32.mrb[0].mxu0
        %v880 = vadd.f32 0.0, %v879
        %v881 = vpop.f32.mrb[0].mxu0
        %v882 = vadd.f32 0.0, %v881
        %v883 = vpop.f32.mrb[0].mxu0
        %v884 = vadd.f32 0.0, %v883
        %885 = vmatprep.mubr.bf16.mxu0 0
        %886 = vmatmul.mubr.bf16.gmra.mrb[0].mxu0 %v688
        %v887 = vpop.f32.mrb[0].mxu0
        %v888 = vadd.f32 0.0, %v887
        %v889 = vpop.f32.mrb[0].mxu0
        %v890 = vadd.f32 0.0, %v889
        %v891 = vpop.f32.mrb[0].mxu0
        %v892 = vadd.f32 0.0, %v891
        %v893 = vpop.f32.mrb[0].mxu0
        %v894 = vadd.f32 0.0, %v893
        %895 = vdwg.mxu0
        %896 = vmatprep.subr.bf16.mxu0 %v701
        %897 = vmatpush1.bf16.msra.mxu0 %v698
        %898 = vmatprep.subr.bf16.mxu0 0
        %899 = vmatpush1.bf16.msra.mxu0 0
        %900 = vmatprep.subr.bf16.mxu0 0
        %901 = vmatpush1.bf16.msra.mxu0 0
        %902 = vmatprep.subr.bf16.mxu0 0
        %903 = vmatpush1.bf16.msra.mxu0 0
        %904 = vmatprep.subr.bf16.mxu0 0
        %905 = vmatpush1.bf16.msra.mxu0 0
        %906 = vmatprep.subr.bf16.mxu0 0
        %907 = vmatpush1.bf16.msra.mxu0 0
        %908 = vmatprep.subr.bf16.mxu0 0
        %909 = vmatpush1.bf16.msra.mxu0 0
        %910 = vmatprep.subr.bf16.mxu0 0
        %911 = vmatpush1.bf16.msra.mxu0 0
        %912 = vmatprep.subr.bf16.mxu0 0
        %913 = vmatpush1.bf16.msra.mxu0 0
        %914 = vmatprep.subr.bf16.mxu0 0
        %915 = vmatpush1.bf16.msra.mxu0 0
        %916 = vmatprep.subr.bf16.mxu0 0
        %917 = vmatpush1.bf16.msra.mxu0 0
        %918 = vmatprep.subr.bf16.mxu0 0
        %919 = vmatpush1.bf16.msra.mxu0 0
        %920 = vmatprep.subr.bf16.mxu0 0
        %921 = vmatpush1.bf16.msra.mxu0 0
        %922 = vmatprep.subr.bf16.mxu0 0
        %923 = vmatpush1.bf16.msra.mxu0 0
        %924 = vmatprep.subr.bf16.mxu0 0
        %925 = vmatpush1.bf16.msra.mxu0 0
        %926 = vmatprep.subr.bf16.mxu0 0
        %927 = vmatpush1.bf16.msra.mxu0 0
        %928 = vmatprep.mubr.bf16.mxu0 0
        %929 = vmatmul.mubr.bf16.gmra.mrb[0].mxu0 %v643
        %v930 = vpop.f32.mrb[0].mxu0
        %v931 = vadd.f32 0.0, %v930
        %v932 = vpop.f32.mrb[0].mxu0
        %v933 = vadd.f32 0.0, %v932
        %v934 = vpop.f32.mrb[0].mxu0
        %v935 = vadd.f32 0.0, %v934
        %v936 = vpop.f32.mrb[0].mxu0
        %v937 = vadd.f32 0.0, %v936
        %938 = vmatprep.mubr.bf16.mxu0 0
        %939 = vmatmul.mubr.bf16.gmra.mrb[0].mxu0 %v646
        %v940 = vpop.f32.mrb[0].mxu0
        %v941 = vadd.f32 0.0, %v940
        %v942 = vpop.f32.mrb[0].mxu0
        %v943 = vadd.f32 0.0, %v942
        %v944 = vpop.f32.mrb[0].mxu0
        %v945 = vadd.f32 0.0, %v944
        %v946 = vpop.f32.mrb[0].mxu0
        %v947 = vadd.f32 0.0, %v946
        %948 = vmatprep.mubr.bf16.mxu0 0
        %949 = vmatmul.mubr.bf16.gmra.mrb[0].mxu0 %v649
        %v950 = vpop.f32.mrb[0].mxu0
        %v951 = vadd.f32 0.0, %v950
        %v952 = vpop.f32.mrb[0].mxu0
        %v953 = vadd.f32 0.0, %v952
        %v954 = vpop.f32.mrb[0].mxu0
        %v955 = vadd.f32 0.0, %v954
        %v956 = vpop.f32.mrb[0].mxu0
        %v957 = vadd.f32 0.0, %v956
        %958 = vmatprep.mubr.bf16.mxu0 0
        %959 = vmatmul.mubr.bf16.gmra.mrb[0].mxu0 %v652
        %v960 = vpop.f32.mrb[0].mxu0
        %v961 = vadd.f32 0.0, %v960
        %v962 = vpop.f32.mrb[0].mxu0
        %v963 = vadd.f32 0.0, %v962
        %v964 = vpop.f32.mrb[0].mxu0
        %v965 = vadd.f32 0.0, %v964
        %v966 = vpop.f32.mrb[0].mxu0
        %v967 = vadd.f32 0.0, %v966
        %968 = vmatprep.mubr.bf16.mxu0 0
        %969 = vmatmul.mubr.bf16.gmra.mrb[0].mxu0 %v655
        %v970 = vpop.f32.mrb[0].mxu0
        %v971 = vadd.f32 0.0, %v970
        %v972 = vpop.f32.mrb[0].mxu0
        %v973 = vadd.f32 0.0, %v972
        %v974 = vpop.f32.mrb[0].mxu0
        %v975 = vadd.f32 0.0, %v974
        %v976 = vpop.f32.mrb[0].mxu0
        %v977 = vadd.f32 0.0, %v976
        %978 = vmatprep.mubr.bf16.mxu0 0
        %979 = vmatmul.mubr.bf16.gmra.mrb[0].mxu0 %v658
        %v980 = vpop.f32.mrb[0].mxu0
        %v981 = vadd.f32 0.0, %v980
        %v982 = vpop.f32.mrb[0].mxu0
        %v983 = vadd.f32 0.0, %v982
        %v984 = vpop.f32.mrb[0].mxu0
        %v985 = vadd.f32 0.0, %v984
        %v986 = vpop.f32.mrb[0].mxu0
        %v987 = vadd.f32 0.0, %v986
        %988 = vmatprep.mubr.bf16.mxu0 0
        %989 = vmatmul.mubr.bf16.gmra.mrb[0].mxu0 %v661
        %v990 = vpop.f32.mrb[0].mxu0
        %v991 = vadd.f32 0.0, %v990
        %v992 = vpop.f32.mrb[0].mxu0
        %v993 = vadd.f32 0.0, %v992
        %v994 = vpop.f32.mrb[0].mxu0
        %v995 = vadd.f32 0.0, %v994
        %v996 = vpop.f32.mrb[0].mxu0
        %v997 = vadd.f32 0.0, %v996
        %998 = vmatprep.mubr.bf16.mxu0 0
        %999 = vmatmul.mubr.bf16.gmra.mrb[0].mxu0 %v664
        %v1000 = vpop.f32.mrb[0].mxu0
        %v1001 = vadd.f32 0.0, %v1000
        %v1002 = vpop.f32.mrb[0].mxu0
        %v1003 = vadd.f32 0.0, %v1002
        %v1004 = vpop.f32.mrb[0].mxu0
        %v1005 = vadd.f32 0.0, %v1004
        %v1006 = vpop.f32.mrb[0].mxu0
        %v1007 = vadd.f32 0.0, %v1006
        %1008 = vmatprep.mubr.bf16.mxu0 0
        %1009 = vmatmul.mubr.bf16.gmra.mrb[0].mxu0 %v667
        %v1010 = vpop.f32.mrb[0].mxu0
        %v1011 = vadd.f32 0.0, %v1010
        %v1012 = vpop.f32.mrb[0].mxu0
        %v1013 = vadd.f32 0.0, %v1012
        %v1014 = vpop.f32.mrb[0].mxu0
        %v1015 = vadd.f32 0.0, %v1014
        %v1016 = vpop.f32.mrb[0].mxu0
        %v1017 = vadd.f32 0.0, %v1016
        %1018 = vmatprep.mubr.bf16.mxu0 0
        %1019 = vmatmul.mubr.bf16.gmra.mrb[0].mxu0 %v670
        %v1020 = vpop.f32.mrb[0].mxu0
        %v1021 = vadd.f32 0.0, %v1020
        %v1022 = vpop.f32.mrb[0].mxu0
        %v1023 = vadd.f32 0.0, %v1022
        %v1024 = vpop.f32.mrb[0].mxu0
        %v1025 = vadd.f32 0.0, %v1024
        %v1026 = vpop.f32.mrb[0].mxu0
        %v1027 = vadd.f32 0.0, %v1026
        %1028 = vmatprep.mubr.bf16.mxu0 0
        %1029 = vmatmul.mubr.bf16.gmra.mrb[0].mxu0 %v673
        %v1030 = vpop.f32.mrb[0].mxu0
        %v1031 = vadd.f32 0.0, %v1030
        %v1032 = vpop.f32.mrb[0].mxu0
        %v1033 = vadd.f32 0.0, %v1032
        %v1034 = vpop.f32.mrb[0].mxu0
        %v1035 = vadd.f32 0.0, %v1034
        %v1036 = vpop.f32.mrb[0].mxu0
        %v1037 = vadd.f32 0.0, %v1036
        %1038 = vmatprep.mubr.bf16.mxu0 0
        %1039 = vmatmul.mubr.bf16.gmra.mrb[0].mxu0 %v676
        %v1040 = vpop.f32.mrb[0].mxu0
        %v1041 = vadd.f32 0.0, %v1040
        %v1042 = vpop.f32.mrb[0].mxu0
        %v1043 = vadd.f32 0.0, %v1042
        %v1044 = vpop.f32.mrb[0].mxu0
        %v1045 = vadd.f32 0.0, %v1044
        %v1046 = vpop.f32.mrb[0].mxu0
        %v1047 = vadd.f32 0.0, %v1046
        %1048 = vmatprep.mubr.bf16.mxu0 0
        %1049 = vmatmul.mubr.bf16.gmra.mrb[0].mxu0 %v679
        %v1050 = vpop.f32.mrb[0].mxu0
        %v1051 = vadd.f32 0.0, %v1050
        %v1052 = vpop.f32.mrb[0].mxu0
        %v1053 = vadd.f32 0.0, %v1052
        %v1054 = vpop.f32.mrb[0].mxu0
        %v1055 = vadd.f32 0.0, %v1054
        %v1056 = vpop.f32.mrb[0].mxu0
        %v1057 = vadd.f32 0.0, %v1056
        %1058 = vmatprep.mubr.bf16.mxu0 0
        %1059 = vmatmul.mubr.bf16.gmra.mrb[0].mxu0 %v682
        %v1060 = vpop.f32.mrb[0].mxu0
        %v1061 = vadd.f32 0.0, %v1060
        %v1062 = vpop.f32.mrb[0].mxu0
        %v1063 = vadd.f32 0.0, %v1062
        %v1064 = vpop.f32.mrb[0].mxu0
        %v1065 = vadd.f32 0.0, %v1064
        %v1066 = vpop.f32.mrb[0].mxu0
        %v1067 = vadd.f32 0.0, %v1066
        %1068 = vmatprep.mubr.bf16.mxu0 0
        %1069 = vmatmul.mubr.bf16.gmra.mrb[0].mxu0 %v685
        %v1070 = vpop.f32.mrb[0].mxu0
        %v1071 = vadd.f32 0.0, %v1070
        %v1072 = vpop.f32.mrb[0].mxu0
        %v1073 = vadd.f32 0.0, %v1072
        %v1074 = vpop.f32.mrb[0].mxu0
        %v1075 = vadd.f32 0.0, %v1074
        %v1076 = vpop.f32.mrb[0].mxu0
        %v1077 = vadd.f32 0.0, %v1076
        %1078 = vmatprep.mubr.bf16.mxu0 0
        %1079 = vmatmul.mubr.bf16.gmra.mrb[0].mxu0 %v688
        %v1080 = vpop.f32.mrb[0].mxu0
        %v1081 = vadd.f32 0.0, %v1080
        %v1082 = vpop.f32.mrb[0].mxu0
        %v1083 = vadd.f32 0.0, %v1082
        %v1084 = vpop.f32.mrb[0].mxu0
        %v1085 = vadd.f32 0.0, %v1084
        %v1086 = vpop.f32.mrb[0].mxu0
        %v1087 = vadd.f32 0.0, %v1086
        %1088 = vdwg.mxu0
        %v1089 = vld [vmem:[#allocation2 + $0xc0] sm:$0xfc]
        %v1090 = vld [vmem:[#allocation2 + $0xc8] sm:$0xff]
        %v1091 = vld [vmem:[#allocation2 + $0xd0] sm:$0xff]
        %v1092 = vld [vmem:[#allocation2 + $0xd8] sm:$0xff]
        %v1093 = vld [vmem:[#allocation2 + $0xe0] sm:$0xff]
        %v1094 = vld [vmem:[#allocation2 + $0xe8] sm:$0xff]
        %v1095 = vld [vmem:[#allocation2 + $0xf0] sm:$0xff]
        %v1096 = vld [vmem:[#allocation2 + $0xf8] sm:$0xff]
        %v1097 = vld [vmem:[#allocation2 + $0x100] sm:$0xff]
        %v1098 = vld [vmem:[#allocation2 + $0x108] sm:$0xff]
        %v1099 = vld [vmem:[#allocation2 + $0x110] sm:$0xff]
        %v1100 = vld [vmem:[#allocation2 + $0x118] sm:$0xff]
        %v1101 = vld [vmem:[#allocation2 + $0x120] sm:$0xff]
        %v1102 = vld [vmem:[#allocation2 + $0x128] sm:$0xff]
        %v1103 = vld [vmem:[#allocation2 + $0x130] sm:$0xff]
        %v1104 = vld [vmem:[#allocation2 + $0x138] sm:$0xff]
        %v1105 = vld [vmem:[#allocation2 + $0x140] sm:$0x3]
        %1107 = vset.pattern.permute.xlu0 0
        %1108 = vperm.xlu0 %1107, %v548
        %v1109 = vpop.permute.xlu0 %1108
        %v1112 = vunpack.c.l.s4 839922192
        %v1113 = vunpack.c.0.s8 %v1112
        %v1114 = vlaneseq
        %v1115 = vshrl.u32 %v1114, 7
        %v1116 = vsub.s32 %v1113, %v1115
        %v1117 = vrot.slane %v1109, %v1116
        %1119 = vset.pattern.permute.xlu0 0
        %1120 = vperm.xlu0 %1119, %v549
        %v1121 = vpop.permute.xlu0 %1120
        %v1124 = vunpack.c.l.s4 839922192
        %v1125 = vunpack.c.0.s8 %v1124
        %v1126 = vlaneseq
        %v1127 = vshrl.u32 %v1126, 7
        %v1128 = vsub.s32 %v1125, %v1127
        %v1129 = vrot.slane %v1121, %v1128
        %1131 = vset.pattern.permute.xlu0 0
        %1132 = vperm.xlu0 %1131, %v550
        %v1133 = vpop.permute.xlu0 %1132
        %v1136 = vunpack.c.l.s4 839922192
        %v1137 = vunpack.c.0.s8 %v1136
        %v1138 = vlaneseq
        %v1139 = vshrl.u32 %v1138, 7
        %v1140 = vsub.s32 %v1137, %v1139
        %v1141 = vrot.slane %v1133, %v1140
        %1143 = vset.pattern.permute.xlu0 0
        %1144 = vperm.xlu0 %1143, %v551
        %v1145 = vpop.permute.xlu0 %1144
        %v1148 = vunpack.c.l.s4 839922192
        %v1149 = vunpack.c.0.s8 %v1148
        %v1150 = vlaneseq
        %v1151 = vshrl.u32 %v1150, 7
        %v1152 = vsub.s32 %v1149, %v1151
        %v1153 = vrot.slane %v1145, %v1152
        %1155 = vset.pattern.permute.xlu0 0
        %1156 = vperm.xlu0 %1155, %v552
        %v1157 = vpop.permute.xlu0 %1156
        %v1160 = vunpack.c.l.s4 839922192
        %v1161 = vunpack.c.0.s8 %v1160
        %v1162 = vlaneseq
        %v1163 = vshrl.u32 %v1162, 7
        %v1164 = vsub.s32 %v1161, %v1163
        %v1165 = vrot.slane %v1157, %v1164
        %1167 = vset.pattern.permute.xlu0 0
        %1168 = vperm.xlu0 %1167, %v553
        %v1169 = vpop.permute.xlu0 %1168
        %v1172 = vunpack.c.l.s4 839922192
        %v1173 = vunpack.c.0.s8 %v1172
        %v1174 = vlaneseq
        %v1175 = vshrl.u32 %v1174, 7
        %v1176 = vsub.s32 %v1173, %v1175
        %v1177 = vrot.slane %v1169, %v1176
        %1179 = vset.pattern.permute.xlu0 0
        %1180 = vperm.xlu0 %1179, %v554
        %v1181 = vpop.permute.xlu0 %1180
        %v1184 = vunpack.c.l.s4 839922192
        %v1185 = vunpack.c.0.s8 %v1184
        %v1186 = vlaneseq
        %v1187 = vshrl.u32 %v1186, 7
        %v1188 = vsub.s32 %v1185, %v1187
        %v1189 = vrot.slane %v1181, %v1188
        %1191 = vset.pattern.permute.xlu0 0
        %1192 = vperm.xlu0 %1191, %v555
        %v1193 = vpop.permute.xlu0 %1192
        %v1196 = vunpack.c.l.s4 839922192
        %v1197 = vunpack.c.0.s8 %v1196
        %v1198 = vlaneseq
        %v1199 = vshrl.u32 %v1198, 7
        %v1200 = vsub.s32 %v1197, %v1199
        %v1201 = vrot.slane %v1193, %v1200
        %1203 = vset.pattern.permute.xlu0 0
        %1204 = vperm.xlu0 %1203, %v556
        %v1205 = vpop.permute.xlu0 %1204
        %v1208 = vunpack.c.l.s4 839922192
        %v1209 = vunpack.c.0.s8 %v1208
        %v1210 = vlaneseq
        %v1211 = vshrl.u32 %v1210, 7
        %v1212 = vsub.s32 %v1209, %v1211
        %v1213 = vrot.slane %v1205, %v1212
        %1215 = vset.pattern.permute.xlu0 0
        %1216 = vperm.xlu0 %1215, %v557
        %v1217 = vpop.permute.xlu0 %1216
        %v1220 = vunpack.c.l.s4 839922192
        %v1221 = vunpack.c.0.s8 %v1220
        %v1222 = vlaneseq
        %v1223 = vshrl.u32 %v1222, 7
        %v1224 = vsub.s32 %v1221, %v1223
        %v1225 = vrot.slane %v1217, %v1224
        %1227 = vset.pattern.permute.xlu0 0
        %1228 = vperm.xlu0 %1227, %v558
        %v1229 = vpop.permute.xlu0 %1228
        %v1232 = vunpack.c.l.s4 839922192
        %v1233 = vunpack.c.0.s8 %v1232
        %v1234 = vlaneseq
        %v1235 = vshrl.u32 %v1234, 7
        %v1236 = vsub.s32 %v1233, %v1235
        %v1237 = vrot.slane %v1229, %v1236
        %1239 = vset.pattern.permute.xlu0 0
        %1240 = vperm.xlu0 %1239, %v559
        %v1241 = vpop.permute.xlu0 %1240
        %v1244 = vunpack.c.l.s4 839922192
        %v1245 = vunpack.c.0.s8 %v1244
        %v1246 = vlaneseq
        %v1247 = vshrl.u32 %v1246, 7
        %v1248 = vsub.s32 %v1245, %v1247
        %v1249 = vrot.slane %v1241, %v1248
        %1251 = vset.pattern.permute.xlu0 0
        %1252 = vperm.xlu0 %1251, %v560
        %v1253 = vpop.permute.xlu0 %1252
        %v1256 = vunpack.c.l.s4 839922192
        %v1257 = vunpack.c.0.s8 %v1256
        %v1258 = vlaneseq
        %v1259 = vshrl.u32 %v1258, 7
        %v1260 = vsub.s32 %v1257, %v1259
        %v1261 = vrot.slane %v1253, %v1260
        %1263 = vset.pattern.permute.xlu0 0
        %1264 = vperm.xlu0 %1263, %v561
        %v1265 = vpop.permute.xlu0 %1264
        %v1268 = vunpack.c.l.s4 839922192
        %v1269 = vunpack.c.0.s8 %v1268
        %v1270 = vlaneseq
        %v1271 = vshrl.u32 %v1270, 7
        %v1272 = vsub.s32 %v1269, %v1271
        %v1273 = vrot.slane %v1265, %v1272
        %1275 = vset.pattern.permute.xlu0 0
        %1276 = vperm.xlu0 %1275, %v562
        %v1277 = vpop.permute.xlu0 %1276
        %v1280 = vunpack.c.l.s4 839922192
        %v1281 = vunpack.c.0.s8 %v1280
        %v1282 = vlaneseq
        %v1283 = vshrl.u32 %v1282, 7
        %v1284 = vsub.s32 %v1281, %v1283
        %v1285 = vrot.slane %v1277, %v1284
        %1287 = vset.pattern.permute.xlu0 0
        %1288 = vperm.xlu0 %1287, %v563
        %v1289 = vpop.permute.xlu0 %1288
        %v1292 = vunpack.c.l.s4 839922192
        %v1293 = vunpack.c.0.s8 %v1292
        %v1294 = vlaneseq
        %v1295 = vshrl.u32 %v1294, 7
        %v1296 = vsub.s32 %v1293, %v1295
        %v1297 = vrot.slane %v1289, %v1296
        %1299 = vset.pattern.permute.xlu0 0
        %1300 = vperm.xlu0 %1299, %v564
        %v1301 = vpop.permute.xlu0 %1300
        %v1304 = vunpack.c.l.s4 839922192
        %v1305 = vunpack.c.0.s8 %v1304
        %v1306 = vlaneseq
        %v1307 = vshrl.u32 %v1306, 7
        %v1308 = vsub.s32 %v1305, %v1307
        %v1309 = vrot.slane %v1301, %v1308
        %1311 = vset.pattern.permute.xlu0 0
        %1312 = vperm.xlu0 %1311, %v565
        %v1313 = vpop.permute.xlu0 %1312
        %v1316 = vunpack.c.l.s4 839922192
        %v1317 = vunpack.c.0.s8 %v1316
        %v1318 = vlaneseq
        %v1319 = vshrl.u32 %v1318, 7
        %v1320 = vsub.s32 %v1317, %v1319
        %v1321 = vrot.slane %v1313, %v1320
        %1323 = vset.pattern.permute.xlu0 0
        %1324 = vperm.xlu0 %1323, %v566
        %v1325 = vpop.permute.xlu0 %1324
        %v1328 = vunpack.c.l.s4 839922192
        %v1329 = vunpack.c.0.s8 %v1328
        %v1330 = vlaneseq
        %v1331 = vshrl.u32 %v1330, 7
        %v1332 = vsub.s32 %v1329, %v1331
        %v1333 = vrot.slane %v1325, %v1332
        %1335 = vset.pattern.permute.xlu0 0
        %1336 = vperm.xlu0 %1335, %v567
        %v1337 = vpop.permute.xlu0 %1336
        %v1340 = vunpack.c.l.s4 839922192
        %v1341 = vunpack.c.0.s8 %v1340
        %v1342 = vlaneseq
        %v1343 = vshrl.u32 %v1342, 7
        %v1344 = vsub.s32 %v1341, %v1343
        %v1345 = vrot.slane %v1337, %v1344
        %1347 = vset.pattern.permute.xlu0 0
        %1348 = vperm.xlu0 %1347, %v568
        %v1349 = vpop.permute.xlu0 %1348
        %v1352 = vunpack.c.l.s4 839922192
        %v1353 = vunpack.c.0.s8 %v1352
        %v1354 = vlaneseq
        %v1355 = vshrl.u32 %v1354, 7
        %v1356 = vsub.s32 %v1353, %v1355
        %v1357 = vrot.slane %v1349, %v1356
        %1359 = vset.pattern.permute.xlu0 0
        %1360 = vperm.xlu0 %1359, %v569
        %v1361 = vpop.permute.xlu0 %1360
        %v1364 = vunpack.c.l.s4 839922192
        %v1365 = vunpack.c.0.s8 %v1364
        %v1366 = vlaneseq
        %v1367 = vshrl.u32 %v1366, 7
        %v1368 = vsub.s32 %v1365, %v1367
        %v1369 = vrot.slane %v1361, %v1368
        %1371 = vset.pattern.permute.xlu0 0
        %1372 = vperm.xlu0 %1371, %v570
        %v1373 = vpop.permute.xlu0 %1372
        %v1376 = vunpack.c.l.s4 839922192
        %v1377 = vunpack.c.0.s8 %v1376
        %v1378 = vlaneseq
        %v1379 = vshrl.u32 %v1378, 7
        %v1380 = vsub.s32 %v1377, %v1379
        %v1381 = vrot.slane %v1373, %v1380
        %1383 = vset.pattern.permute.xlu0 0
        %1384 = vperm.xlu0 %1383, %v571
        %v1385 = vpop.permute.xlu0 %1384
        %v1388 = vunpack.c.l.s4 839922192
        %v1389 = vunpack.c.0.s8 %v1388
        %v1390 = vlaneseq
        %v1391 = vshrl.u32 %v1390, 7
        %v1392 = vsub.s32 %v1389, %v1391
        %v1393 = vrot.slane %v1385, %v1392
        %1395 = vset.pattern.permute.xlu0 0
        %1396 = vperm.xlu0 %1395, %v572
        %v1397 = vpop.permute.xlu0 %1396
        %v1400 = vunpack.c.l.s4 839922192
        %v1401 = vunpack.c.0.s8 %v1400
        %v1402 = vlaneseq
        %v1403 = vshrl.u32 %v1402, 7
        %v1404 = vsub.s32 %v1401, %v1403
        %v1405 = vrot.slane %v1397, %v1404
        %1407 = vset.pattern.permute.xlu0 0
        %1408 = vperm.xlu0 %1407, %v573
        %v1409 = vpop.permute.xlu0 %1408
        %v1412 = vunpack.c.l.s4 839922192
        %v1413 = vunpack.c.0.s8 %v1412
        %v1414 = vlaneseq
        %v1415 = vshrl.u32 %v1414, 7
        %v1416 = vsub.s32 %v1413, %v1415
        %v1417 = vrot.slane %v1409, %v1416
        %1419 = vset.pattern.permute.xlu0 0
        %1420 = vperm.xlu0 %1419, %v574
        %v1421 = vpop.permute.xlu0 %1420
        %v1424 = vunpack.c.l.s4 839922192
        %v1425 = vunpack.c.0.s8 %v1424
        %v1426 = vlaneseq
        %v1427 = vshrl.u32 %v1426, 7
        %v1428 = vsub.s32 %v1425, %v1427
        %v1429 = vrot.slane %v1421, %v1428
        %1431 = vset.pattern.permute.xlu0 0
        %1432 = vperm.xlu0 %1431, %v575
        %v1433 = vpop.permute.xlu0 %1432
        %v1436 = vunpack.c.l.s4 839922192
        %v1437 = vunpack.c.0.s8 %v1436
        %v1438 = vlaneseq
        %v1439 = vshrl.u32 %v1438, 7
        %v1440 = vsub.s32 %v1437, %v1439
        %v1441 = vrot.slane %v1433, %v1440
        %1443 = vset.pattern.permute.xlu0 0
        %1444 = vperm.xlu0 %1443, %v576
        %v1445 = vpop.permute.xlu0 %1444
        %v1448 = vunpack.c.l.s4 839922192
        %v1449 = vunpack.c.0.s8 %v1448
        %v1450 = vlaneseq
        %v1451 = vshrl.u32 %v1450, 7
        %v1452 = vsub.s32 %v1449, %v1451
        %v1453 = vrot.slane %v1445, %v1452
        %1455 = vset.pattern.permute.xlu0 0
        %1456 = vperm.xlu0 %1455, %v577
        %v1457 = vpop.permute.xlu0 %1456
        %v1460 = vunpack.c.l.s4 839922192
        %v1461 = vunpack.c.0.s8 %v1460
        %v1462 = vlaneseq
        %v1463 = vshrl.u32 %v1462, 7
        %v1464 = vsub.s32 %v1461, %v1463
        %v1465 = vrot.slane %v1457, %v1464
        %1467 = vset.pattern.permute.xlu0 0
        %1468 = vperm.xlu0 %1467, %v578
        %v1469 = vpop.permute.xlu0 %1468
        %v1472 = vunpack.c.l.s4 839922192
        %v1473 = vunpack.c.0.s8 %v1472
        %v1474 = vlaneseq
        %v1475 = vshrl.u32 %v1474, 7
        %v1476 = vsub.s32 %v1473, %v1475
        %v1477 = vrot.slane %v1469, %v1476
        %1479 = vset.pattern.permute.xlu0 0
        %1480 = vperm.xlu0 %1479, %v579
        %v1481 = vpop.permute.xlu0 %1480
        %v1484 = vunpack.c.l.s4 839922192
        %v1485 = vunpack.c.0.s8 %v1484
        %v1486 = vlaneseq
        %v1487 = vshrl.u32 %v1486, 7
        %v1488 = vsub.s32 %v1485, %v1487
        %v1489 = vrot.slane %v1481, %v1488
        %v1522 = vunpack.c.l.b16 %v1117
        %v1523 = vunpack.c.l.b16 %v1129
        %v1524 = vunpack.c.l.b16 %v1141
        %v1525 = vunpack.c.l.b16 %v1153
        %v1526 = vunpack.c.l.b16 %v1165
        %v1527 = vunpack.c.l.b16 %v1177
        %v1528 = vunpack.c.l.b16 %v1189
        %v1529 = vunpack.c.l.b16 %v1201
        %v1530 = vunpack.c.l.b16 %v1213
        %v1531 = vunpack.c.l.b16 %v1225
        %v1532 = vunpack.c.l.b16 %v1237
        %v1533 = vunpack.c.l.b16 %v1249
        %v1534 = vunpack.c.l.b16 %v1261
        %v1535 = vunpack.c.l.b16 %v1273
        %v1536 = vunpack.c.l.b16 %v1285
        %v1537 = vunpack.c.l.b16 %v1297
        %v1538 = vunpack.c.l.b16 %v1309
        %v1539 = vunpack.c.l.b16 %v1321
        %v1540 = vunpack.c.l.b16 %v1333
        %v1541 = vunpack.c.l.b16 %v1345
        %v1542 = vunpack.c.l.b16 %v1357
        %v1543 = vunpack.c.l.b16 %v1369
        %v1544 = vunpack.c.l.b16 %v1381
        %v1545 = vunpack.c.l.b16 %v1393
        %v1546 = vunpack.c.l.b16 %v1405
        %v1547 = vunpack.c.l.b16 %v1417
        %v1548 = vunpack.c.l.b16 %v1429
        %v1549 = vunpack.c.l.b16 %v1441
        %v1550 = vunpack.c.l.b16 %v1453
        %v1551 = vunpack.c.l.b16 %v1465
        %v1552 = vunpack.c.l.b16 %v1477
        %v1553 = vunpack.c.l.b16 %v1489
        %v1554 = vpack.c.b16 %v1523, %v1522
        %v1555 = vpack.c.b16 %v1525, %v1524
        %v1556 = vpack.c.b16 %v1527, %v1526
        %v1557 = vpack.c.b16 %v1529, %v1528
        %v1558 = vpack.c.b16 %v1531, %v1530
        %v1559 = vpack.c.b16 %v1533, %v1532
        %v1560 = vpack.c.b16 %v1535, %v1534
        %v1561 = vpack.c.b16 %v1537, %v1536
        %v1562 = vpack.c.b16 %v1539, %v1538
        %v1563 = vpack.c.b16 %v1541, %v1540
        %v1564 = vpack.c.b16 %v1543, %v1542
        %v1565 = vpack.c.b16 %v1545, %v1544
        %v1566 = vpack.c.b16 %v1547, %v1546
        %v1567 = vpack.c.b16 %v1549, %v1548
        %v1568 = vpack.c.b16 %v1551, %v1550
        %v1569 = vpack.c.b16 %v1553, %v1552
        %vm1570 = vcmask 1041408
        %v1571 = vrot.slane %v1554, 6
        %v1572 = vrot.slane %v1555, 6
        %v1573 = vsel %vm1570, %v1571, %v1572
        %v1574 = vrot.slane %v1556, 6
        %v1575 = vsel %vm1570, %v1572, %v1574
        %v1576 = vrot.slane %v1557, 6
        %v1577 = vsel %vm1570, %v1574, %v1576
        %v1578 = vrot.slane %v1558, 6
        %v1579 = vsel %vm1570, %v1576, %v1578
        %v1580 = vrot.slane %v1559, 6
        %v1581 = vsel %vm1570, %v1578, %v1580
        %v1582 = vrot.slane %v1560, 6
        %v1583 = vsel %vm1570, %v1580, %v1582
        %v1584 = vrot.slane %v1561, 6
        %v1585 = vsel %vm1570, %v1582, %v1584
        %v1586 = vrot.slane %v1562, 6
        %v1587 = vsel %vm1570, %v1584, %v1586
        %v1588 = vrot.slane %v1563, 6
        %v1589 = vsel %vm1570, %v1586, %v1588
        %v1590 = vrot.slane %v1564, 6
        %v1591 = vsel %vm1570, %v1588, %v1590
        %v1592 = vrot.slane %v1565, 6
        %v1593 = vsel %vm1570, %v1590, %v1592
        %v1594 = vrot.slane %v1566, 6
        %v1595 = vsel %vm1570, %v1592, %v1594
        %v1596 = vrot.slane %v1567, 6
        %v1597 = vsel %vm1570, %v1594, %v1596
        %v1598 = vrot.slane %v1568, 6
        %v1599 = vsel %vm1570, %v1596, %v1598
        %v1600 = vrot.slane %v1569, 6
        %v1601 = vsel %vm1570, %v1598, %v1600
        %v1619 = vmul.bf16 %v1089, %v1571
        %v1620 = vmul.bf16 %v1090, %v1573
        %v1621 = vmul.bf16 %v1091, %v1575
        %v1622 = vmul.bf16 %v1092, %v1577
        %v1623 = vmul.bf16 %v1093, %v1579
        %v1624 = vmul.bf16 %v1094, %v1581
        %v1625 = vmul.bf16 %v1095, %v1583
        %v1626 = vmul.bf16 %v1096, %v1585
        %v1627 = vmul.bf16 %v1097, %v1587
        %v1628 = vmul.bf16 %v1098, %v1589
        %v1629 = vmul.bf16 %v1099, %v1591
        %v1630 = vmul.bf16 %v1100, %v1593
        %v1631 = vmul.bf16 %v1101, %v1595
        %v1632 = vmul.bf16 %v1102, %v1597
        %v1633 = vmul.bf16 %v1103, %v1599
        %v1634 = vmul.bf16 %v1104, %v1601
        %v1635 = vmul.bf16 %v1105, %v1600
        %v1636 = vld [vmem:[%s3] sm:$0xf]
        %vm1654 = vcmask 1045504
        %v1655 = vrot.slane %v1619, 2
        %v1656 = vrot.slane %v1620, 2
        %v1657 = vsel %vm1654, %v1655, %v1656
        %v1658 = vrot.slane %v1621, 2
        %v1659 = vsel %vm1654, %v1656, %v1658
        %v1660 = vrot.slane %v1622, 2
        %v1661 = vsel %vm1654, %v1658, %v1660
        %v1662 = vrot.slane %v1623, 2
        %v1663 = vsel %vm1654, %v1660, %v1662
        %v1664 = vrot.slane %v1624, 2
        %v1665 = vsel %vm1654, %v1662, %v1664
        %v1666 = vrot.slane %v1625, 2
        %v1667 = vsel %vm1654, %v1664, %v1666
        %v1668 = vrot.slane %v1626, 2
        %v1669 = vsel %vm1654, %v1666, %v1668
        %v1670 = vrot.slane %v1627, 2
        %v1671 = vsel %vm1654, %v1668, %v1670
        %v1672 = vrot.slane %v1628, 2
        %v1673 = vsel %vm1654, %v1670, %v1672
        %v1674 = vrot.slane %v1629, 2
        %v1675 = vsel %vm1654, %v1672, %v1674
        %v1676 = vrot.slane %v1630, 2
        %v1677 = vsel %vm1654, %v1674, %v1676
        %v1678 = vrot.slane %v1631, 2
        %v1679 = vsel %vm1654, %v1676, %v1678
        %v1680 = vrot.slane %v1632, 2
        %v1681 = vsel %vm1654, %v1678, %v1680
        %v1682 = vrot.slane %v1633, 2
        %v1683 = vsel %vm1654, %v1680, %v1682
        %v1684 = vrot.slane %v1634, 2
        %v1685 = vsel %vm1654, %v1682, %v1684
        %v1686 = vrot.slane %v1635, 2
        %v1687 = vsel %vm1654, %v1684, %v1686
        %v1689 = vsel %vm641, %v1657, 0
        %v1692 = vsel %vm641, %v1659, 0
        %v1695 = vsel %vm641, %v1661, 0
        %v1698 = vsel %vm641, %v1663, 0
        %v1701 = vsel %vm641, %v1665, 0
        %v1704 = vsel %vm641, %v1667, 0
        %v1707 = vsel %vm641, %v1669, 0
        %v1710 = vsel %vm641, %v1671, 0
        %v1713 = vsel %vm641, %v1673, 0
        %v1716 = vsel %vm641, %v1675, 0
        %v1719 = vsel %vm641, %v1677, 0
        %v1722 = vsel %vm641, %v1679, 0
        %v1725 = vsel %vm641, %v1681, 0
        %v1728 = vsel %vm641, %v1683, 0
        %v1731 = vsel %vm641, %v1685, 0
        %v1734 = vsel %vm641, %v1687, 0
        %v1737 = vsel %vm690, %v1636, 0
        %1739 = vmatprep.subr.bf16.mxu0 0
        %1740 = vmatpush1.bf16.msra.mxu0 %v1737
        %1741 = vmatprep.subr.bf16.mxu0 0
        %1742 = vmatpush1.bf16.msra.mxu0 0
        %1743 = vmatprep.subr.bf16.mxu0 0
        %1744 = vmatpush1.bf16.msra.mxu0 0
        %1745 = vmatprep.subr.bf16.mxu0 0
        %1746 = vmatpush1.bf16.msra.mxu0 0
        %1747 = vmatprep.subr.bf16.mxu0 0
        %1748 = vmatpush1.bf16.msra.mxu0 0
        %1749 = vmatprep.subr.bf16.mxu0 0
        %1750 = vmatpush1.bf16.msra.mxu0 0
        %1751 = vmatprep.subr.bf16.mxu0 0
        %1752 = vmatpush1.bf16.msra.mxu0 0
        %1753 = vmatprep.subr.bf16.mxu0 0
        %1754 = vmatpush1.bf16.msra.mxu0 0
        %1755 = vmatprep.subr.bf16.mxu0 0
        %1756 = vmatpush1.bf16.msra.mxu0 0
        %1757 = vmatprep.subr.bf16.mxu0 0
        %1758 = vmatpush1.bf16.msra.mxu0 0
        %1759 = vmatprep.subr.bf16.mxu0 0
        %1760 = vmatpush1.bf16.msra.mxu0 0
        %1761 = vmatprep.subr.bf16.mxu0 0
        %1762 = vmatpush1.bf16.msra.mxu0 0
        %1763 = vmatprep.subr.bf16.mxu0 0
        %1764 = vmatpush1.bf16.msra.mxu0 0
        %1765 = vmatprep.subr.bf16.mxu0 0
        %1766 = vmatpush1.bf16.msra.mxu0 0
        %1767 = vmatprep.subr.bf16.mxu0 0
        %1768 = vmatpush1.bf16.msra.mxu0 0
        %1769 = vmatprep.subr.bf16.mxu0 0
        %1770 = vmatpush1.bf16.msra.mxu0 0
        %1771 = vmatprep.mubr.bf16.mxu0 0
        %1772 = vmatmul.mubr.bf16.gmra.mrb[0].mxu0 %v1689
        %v1773 = vpop.f32.mrb[0].mxu0
        %v1774 = vadd.f32 0.0, %v1773
        %v1775 = vpop.f32.mrb[0].mxu0
        %v1776 = vpop.f32.mrb[0].mxu0
        %v1777 = vadd.f32 0.0, %v1776
        %v1778 = vpop.f32.mrb[0].mxu0
        %1779 = vmatprep.mubr.bf16.mxu0 0
        %1780 = vmatmul.mubr.bf16.gmra.mrb[0].mxu0 %v1692
        %v1781 = vpop.f32.mrb[0].mxu0
        %v1782 = vadd.f32 0.0, %v1781
        %v1783 = vpop.f32.mrb[0].mxu0
        %v1784 = vpop.f32.mrb[0].mxu0
        %v1785 = vadd.f32 0.0, %v1784
        %v1786 = vpop.f32.mrb[0].mxu0
        %1787 = vmatprep.mubr.bf16.mxu0 0
        %1788 = vmatmul.mubr.bf16.gmra.mrb[0].mxu0 %v1695
        %v1789 = vpop.f32.mrb[0].mxu0
        %v1790 = vadd.f32 0.0, %v1789
        %v1791 = vpop.f32.mrb[0].mxu0
        %v1792 = vpop.f32.mrb[0].mxu0
        %v1793 = vadd.f32 0.0, %v1792
        %v1794 = vpop.f32.mrb[0].mxu0
        %1795 = vmatprep.mubr.bf16.mxu0 0
        %1796 = vmatmul.mubr.bf16.gmra.mrb[0].mxu0 %v1698
        %v1797 = vpop.f32.mrb[0].mxu0
        %v1798 = vadd.f32 0.0, %v1797
        %v1799 = vpop.f32.mrb[0].mxu0
        %v1800 = vpop.f32.mrb[0].mxu0
        %v1801 = vadd.f32 0.0, %v1800
        %v1802 = vpop.f32.mrb[0].mxu0
        %1803 = vmatprep.mubr.bf16.mxu0 0
        %1804 = vmatmul.mubr.bf16.gmra.mrb[0].mxu0 %v1701
        %v1805 = vpop.f32.mrb[0].mxu0
        %v1806 = vadd.f32 0.0, %v1805
        %v1807 = vpop.f32.mrb[0].mxu0
        %v1808 = vpop.f32.mrb[0].mxu0
        %v1809 = vadd.f32 0.0, %v1808
        %v1810 = vpop.f32.mrb[0].mxu0
        %1811 = vmatprep.mubr.bf16.mxu0 0
        %1812 = vmatmul.mubr.bf16.gmra.mrb[0].mxu0 %v1704
        %v1813 = vpop.f32.mrb[0].mxu0
        %v1814 = vadd.f32 0.0, %v1813
        %v1815 = vpop.f32.mrb[0].mxu0
        %v1816 = vpop.f32.mrb[0].mxu0
        %v1817 = vadd.f32 0.0, %v1816
        %v1818 = vpop.f32.mrb[0].mxu0
        %1819 = vmatprep.mubr.bf16.mxu0 0
        %1820 = vmatmul.mubr.bf16.gmra.mrb[0].mxu0 %v1707
        %v1821 = vpop.f32.mrb[0].mxu0
        %v1822 = vadd.f32 0.0, %v1821
        %v1823 = vpop.f32.mrb[0].mxu0
        %v1824 = vpop.f32.mrb[0].mxu0
        %v1825 = vadd.f32 0.0, %v1824
        %v1826 = vpop.f32.mrb[0].mxu0
        %1827 = vmatprep.mubr.bf16.mxu0 0
        %1828 = vmatmul.mubr.bf16.gmra.mrb[0].mxu0 %v1710
        %v1829 = vpop.f32.mrb[0].mxu0
        %v1830 = vadd.f32 0.0, %v1829
        %v1831 = vpop.f32.mrb[0].mxu0
        %v1832 = vpop.f32.mrb[0].mxu0
        %v1833 = vadd.f32 0.0, %v1832
        %v1834 = vpop.f32.mrb[0].mxu0
        %1835 = vmatprep.mubr.bf16.mxu0 0
        %1836 = vmatmul.mubr.bf16.gmra.mrb[0].mxu0 %v1713
        %v1837 = vpop.f32.mrb[0].mxu0
        %v1838 = vadd.f32 0.0, %v1837
        %v1839 = vpop.f32.mrb[0].mxu0
        %v1840 = vpop.f32.mrb[0].mxu0
        %v1841 = vadd.f32 0.0, %v1840
        %v1842 = vpop.f32.mrb[0].mxu0
        %1843 = vmatprep.mubr.bf16.mxu0 0
        %1844 = vmatmul.mubr.bf16.gmra.mrb[0].mxu0 %v1716
        %v1845 = vpop.f32.mrb[0].mxu0
        %v1846 = vadd.f32 0.0, %v1845
        %v1847 = vpop.f32.mrb[0].mxu0
        %v1848 = vpop.f32.mrb[0].mxu0
        %v1849 = vadd.f32 0.0, %v1848
        %v1850 = vpop.f32.mrb[0].mxu0
        %1851 = vmatprep.mubr.bf16.mxu0 0
        %1852 = vmatmul.mubr.bf16.gmra.mrb[0].mxu0 %v1719
        %v1853 = vpop.f32.mrb[0].mxu0
        %v1854 = vadd.f32 0.0, %v1853
        %v1855 = vpop.f32.mrb[0].mxu0
        %v1856 = vpop.f32.mrb[0].mxu0
        %v1857 = vadd.f32 0.0, %v1856
        %v1858 = vpop.f32.mrb[0].mxu0
        %1859 = vmatprep.mubr.bf16.mxu0 0
        %1860 = vmatmul.mubr.bf16.gmra.mrb[0].mxu0 %v1722
        %v1861 = vpop.f32.mrb[0].mxu0
        %v1862 = vadd.f32 0.0, %v1861
        %v1863 = vpop.f32.mrb[0].mxu0
        %v1864 = vpop.f32.mrb[0].mxu0
        %v1865 = vadd.f32 0.0, %v1864
        %v1866 = vpop.f32.mrb[0].mxu0
        %1867 = vmatprep.mubr.bf16.mxu0 0
        %1868 = vmatmul.mubr.bf16.gmra.mrb[0].mxu0 %v1725
        %v1869 = vpop.f32.mrb[0].mxu0
        %v1870 = vadd.f32 0.0, %v1869
        %v1871 = vpop.f32.mrb[0].mxu0
        %v1872 = vpop.f32.mrb[0].mxu0
        %v1873 = vadd.f32 0.0, %v1872
        %v1874 = vpop.f32.mrb[0].mxu0
        %1875 = vmatprep.mubr.bf16.mxu0 0
        %1876 = vmatmul.mubr.bf16.gmra.mrb[0].mxu0 %v1728
        %v1877 = vpop.f32.mrb[0].mxu0
        %v1878 = vadd.f32 0.0, %v1877
        %v1879 = vpop.f32.mrb[0].mxu0
        %v1880 = vpop.f32.mrb[0].mxu0
        %v1881 = vadd.f32 0.0, %v1880
        %v1882 = vpop.f32.mrb[0].mxu0
        %1883 = vmatprep.mubr.bf16.mxu0 0
        %1884 = vmatmul.mubr.bf16.gmra.mrb[0].mxu0 %v1731
        %v1885 = vpop.f32.mrb[0].mxu0
        %v1886 = vadd.f32 0.0, %v1885
        %v1887 = vpop.f32.mrb[0].mxu0
        %v1888 = vpop.f32.mrb[0].mxu0
        %v1889 = vadd.f32 0.0, %v1888
        %v1890 = vpop.f32.mrb[0].mxu0
        %1891 = vmatprep.mubr.bf16.mxu0 0
        %1892 = vmatmul.mubr.bf16.gmra.mrb[0].mxu0 %v1734
        %v1893 = vpop.f32.mrb[0].mxu0
        %v1894 = vadd.f32 0.0, %v1893
        %v1895 = vpop.f32.mrb[0].mxu0
        %v1896 = vpop.f32.mrb[0].mxu0
        %v1897 = vadd.f32 0.0, %v1896
        %v1898 = vpop.f32.mrb[0].mxu0
        %1899 = vdwg.mxu0
        %v1900 = vadd.f32 %v740, %v1774
        %v1901 = vadd.f32 %v744, %v1777
        %v1902 = vadd.f32 %v750, %v1782
        %v1903 = vadd.f32 %v754, %v1785
        %v1904 = vadd.f32 %v760, %v1790
        %v1905 = vadd.f32 %v764, %v1793
        %v1906 = vadd.f32 %v770, %v1798
        %v1907 = vadd.f32 %v774, %v1801
        %v1908 = vadd.f32 %v780, %v1806
        %v1909 = vadd.f32 %v784, %v1809
        %v1910 = vadd.f32 %v790, %v1814
        %v1911 = vadd.f32 %v794, %v1817
        %v1912 = vadd.f32 %v800, %v1822
        %v1913 = vadd.f32 %v804, %v1825
        %v1914 = vadd.f32 %v810, %v1830
        %v1915 = vadd.f32 %v814, %v1833
        %v1916 = vadd.f32 %v820, %v1838
        %v1917 = vadd.f32 %v824, %v1841
        %v1918 = vadd.f32 %v830, %v1846
        %v1919 = vadd.f32 %v834, %v1849
        %v1920 = vadd.f32 %v840, %v1854
        %v1921 = vadd.f32 %v844, %v1857
        %v1922 = vadd.f32 %v850, %v1862
        %v1923 = vadd.f32 %v854, %v1865
        %v1924 = vadd.f32 %v860, %v1870
        %v1925 = vadd.f32 %v864, %v1873
        %v1926 = vadd.f32 %v870, %v1878
        %v1927 = vadd.f32 %v874, %v1881
        %v1928 = vadd.f32 %v880, %v1886
        %v1929 = vadd.f32 %v884, %v1889
        %v1930 = vadd.f32 %v890, %v1894
        %v1931 = vadd.f32 %v894, %v1897
        %v1932 = vld [vmem:[#allocation2 + $0x140] sm:$0xff]
        %s1933 = scalar_lea.vmem %s3, 4
        %v1934 = vld [vmem:[%s1933] sm:$0xf]
        %v1936 = vsel %vm641, %v1090, 0
        %v1939 = vsel %vm641, %v1091, 0
        %v1942 = vsel %vm641, %v1092, 0
        %v1945 = vsel %vm641, %v1093, 0
        %v1948 = vsel %vm641, %v1094, 0
        %v1951 = vsel %vm641, %v1095, 0
        %v1954 = vsel %vm641, %v1096, 0
        %v1957 = vsel %vm641, %v1097, 0
        %v1960 = vsel %vm641, %v1098, 0
        %v1963 = vsel %vm641, %v1099, 0
        %v1966 = vsel %vm641, %v1100, 0
        %v1969 = vsel %vm641, %v1101, 0
        %v1972 = vsel %vm641, %v1102, 0
        %v1975 = vsel %vm641, %v1103, 0
        %v1978 = vsel %vm641, %v1104, 0
        %v1981 = vsel %vm641, %v1932, 0
        %v1984 = vsel %vm690, %v1934, 0
        %1986 = vmatprep.subr.bf16.mxu0 0
        %1987 = vmatpush1.bf16.msra.mxu0 %v1984
        %1988 = vmatprep.subr.bf16.mxu0 0
        %1989 = vmatpush1.bf16.msra.mxu0 0
        %1990 = vmatprep.subr.bf16.mxu0 0
        %1991 = vmatpush1.bf16.msra.mxu0 0
        %1992 = vmatprep.subr.bf16.mxu0 0
        %1993 = vmatpush1.bf16.msra.mxu0 0
        %1994 = vmatprep.subr.bf16.mxu0 0
        %1995 = vmatpush1.bf16.msra.mxu0 0
        %1996 = vmatprep.subr.bf16.mxu0 0
        %1997 = vmatpush1.bf16.msra.mxu0 0
        %1998 = vmatprep.subr.bf16.mxu0 0
        %1999 = vmatpush1.bf16.msra.mxu0 0
        %2000 = vmatprep.subr.bf16.mxu0 0
        %2001 = vmatpush1.bf16.msra.mxu0 0
        %2002 = vmatprep.subr.bf16.mxu0 0
        %2003 = vmatpush1.bf16.msra.mxu0 0
        %2004 = vmatprep.subr.bf16.mxu0 0
        %2005 = vmatpush1.bf16.msra.mxu0 0
        %2006 = vmatprep.subr.bf16.mxu0 0
        %2007 = vmatpush1.bf16.msra.mxu0 0
        %2008 = vmatprep.subr.bf16.mxu0 0
        %2009 = vmatpush1.bf16.msra.mxu0 0
        %2010 = vmatprep.subr.bf16.mxu0 0
        %2011 = vmatpush1.bf16.msra.mxu0 0
        %2012 = vmatprep.subr.bf16.mxu0 0
        %2013 = vmatpush1.bf16.msra.mxu0 0
        %2014 = vmatprep.subr.bf16.mxu0 0
        %2015 = vmatpush1.bf16.msra.mxu0 0
        %2016 = vmatprep.subr.bf16.mxu0 0
        %2017 = vmatpush1.bf16.msra.mxu0 0
        %2018 = vmatprep.mubr.bf16.mxu0 0
        %2019 = vmatmul.mubr.bf16.gmra.mrb[0].mxu0 %v1936
        %v2020 = vpop.f32.mrb[0].mxu0
        %v2021 = vadd.f32 0.0, %v2020
        %v2022 = vpop.f32.mrb[0].mxu0
        %v2023 = vpop.f32.mrb[0].mxu0
        %v2024 = vadd.f32 0.0, %v2023
        %v2025 = vpop.f32.mrb[0].mxu0
        %2026 = vmatprep.mubr.bf16.mxu0 0
        %2027 = vmatmul.mubr.bf16.gmra.mrb[0].mxu0 %v1939
        %v2028 = vpop.f32.mrb[0].mxu0
        %v2029 = vadd.f32 0.0, %v2028
        %v2030 = vpop.f32.mrb[0].mxu0
        %v2031 = vpop.f32.mrb[0].mxu0
        %v2032 = vadd.f32 0.0, %v2031
        %v2033 = vpop.f32.mrb[0].mxu0
        %2034 = vmatprep.mubr.bf16.mxu0 0
        %2035 = vmatmul.mubr.bf16.gmra.mrb[0].mxu0 %v1942
        %v2036 = vpop.f32.mrb[0].mxu0
        %v2037 = vadd.f32 0.0, %v2036
        %v2038 = vpop.f32.mrb[0].mxu0
        %v2039 = vpop.f32.mrb[0].mxu0
        %v2040 = vadd.f32 0.0, %v2039
        %v2041 = vpop.f32.mrb[0].mxu0
        %2042 = vmatprep.mubr.bf16.mxu0 0
        %2043 = vmatmul.mubr.bf16.gmra.mrb[0].mxu0 %v1945
        %v2044 = vpop.f32.mrb[0].mxu0
        %v2045 = vadd.f32 0.0, %v2044
        %v2046 = vpop.f32.mrb[0].mxu0
        %v2047 = vpop.f32.mrb[0].mxu0
        %v2048 = vadd.f32 0.0, %v2047
        %v2049 = vpop.f32.mrb[0].mxu0
        %2050 = vmatprep.mubr.bf16.mxu0 0
        %2051 = vmatmul.mubr.bf16.gmra.mrb[0].mxu0 %v1948
        %v2052 = vpop.f32.mrb[0].mxu0
        %v2053 = vadd.f32 0.0, %v2052
        %v2054 = vpop.f32.mrb[0].mxu0
        %v2055 = vpop.f32.mrb[0].mxu0
        %v2056 = vadd.f32 0.0, %v2055
        %v2057 = vpop.f32.mrb[0].mxu0
        %2058 = vmatprep.mubr.bf16.mxu0 0
        %2059 = vmatmul.mubr.bf16.gmra.mrb[0].mxu0 %v1951
        %v2060 = vpop.f32.mrb[0].mxu0
        %v2061 = vadd.f32 0.0, %v2060
        %v2062 = vpop.f32.mrb[0].mxu0
        %v2063 = vpop.f32.mrb[0].mxu0
        %v2064 = vadd.f32 0.0, %v2063
        %v2065 = vpop.f32.mrb[0].mxu0
        %2066 = vmatprep.mubr.bf16.mxu0 0
        %2067 = vmatmul.mubr.bf16.gmra.mrb[0].mxu0 %v1954
        %v2068 = vpop.f32.mrb[0].mxu0
        %v2069 = vadd.f32 0.0, %v2068
        %v2070 = vpop.f32.mrb[0].mxu0
        %v2071 = vpop.f32.mrb[0].mxu0
        %v2072 = vadd.f32 0.0, %v2071
        %v2073 = vpop.f32.mrb[0].mxu0
        %2074 = vmatprep.mubr.bf16.mxu0 0
        %2075 = vmatmul.mubr.bf16.gmra.mrb[0].mxu0 %v1957
        %v2076 = vpop.f32.mrb[0].mxu0
        %v2077 = vadd.f32 0.0, %v2076
        %v2078 = vpop.f32.mrb[0].mxu0
        %v2079 = vpop.f32.mrb[0].mxu0
        %v2080 = vadd.f32 0.0, %v2079
        %v2081 = vpop.f32.mrb[0].mxu0
        %2082 = vmatprep.mubr.bf16.mxu0 0
        %2083 = vmatmul.mubr.bf16.gmra.mrb[0].mxu0 %v1960
        %v2084 = vpop.f32.mrb[0].mxu0
        %v2085 = vadd.f32 0.0, %v2084
        %v2086 = vpop.f32.mrb[0].mxu0
        %v2087 = vpop.f32.mrb[0].mxu0
        %v2088 = vadd.f32 0.0, %v2087
        %v2089 = vpop.f32.mrb[0].mxu0
        %2090 = vmatprep.mubr.bf16.mxu0 0
        %2091 = vmatmul.mubr.bf16.gmra.mrb[0].mxu0 %v1963
        %v2092 = vpop.f32.mrb[0].mxu0
        %v2093 = vadd.f32 0.0, %v2092
        %v2094 = vpop.f32.mrb[0].mxu0
        %v2095 = vpop.f32.mrb[0].mxu0
        %v2096 = vadd.f32 0.0, %v2095
        %v2097 = vpop.f32.mrb[0].mxu0
        %2098 = vmatprep.mubr.bf16.mxu0 0
        %2099 = vmatmul.mubr.bf16.gmra.mrb[0].mxu0 %v1966
        %v2100 = vpop.f32.mrb[0].mxu0
        %v2101 = vadd.f32 0.0, %v2100
        %v2102 = vpop.f32.mrb[0].mxu0
        %v2103 = vpop.f32.mrb[0].mxu0
        %v2104 = vadd.f32 0.0, %v2103
        %v2105 = vpop.f32.mrb[0].mxu0
        %2106 = vmatprep.mubr.bf16.mxu0 0
        %2107 = vmatmul.mubr.bf16.gmra.mrb[0].mxu0 %v1969
        %v2108 = vpop.f32.mrb[0].mxu0
        %v2109 = vadd.f32 0.0, %v2108
        %v2110 = vpop.f32.mrb[0].mxu0
        %v2111 = vpop.f32.mrb[0].mxu0
        %v2112 = vadd.f32 0.0, %v2111
        %v2113 = vpop.f32.mrb[0].mxu0
        %2114 = vmatprep.mubr.bf16.mxu0 0
        %2115 = vmatmul.mubr.bf16.gmra.mrb[0].mxu0 %v1972
        %v2116 = vpop.f32.mrb[0].mxu0
        %v2117 = vadd.f32 0.0, %v2116
        %v2118 = vpop.f32.mrb[0].mxu0
        %v2119 = vpop.f32.mrb[0].mxu0
        %v2120 = vadd.f32 0.0, %v2119
        %v2121 = vpop.f32.mrb[0].mxu0
        %2122 = vmatprep.mubr.bf16.mxu0 0
        %2123 = vmatmul.mubr.bf16.gmra.mrb[0].mxu0 %v1975
        %v2124 = vpop.f32.mrb[0].mxu0
        %v2125 = vadd.f32 0.0, %v2124
        %v2126 = vpop.f32.mrb[0].mxu0
        %v2127 = vpop.f32.mrb[0].mxu0
        %v2128 = vadd.f32 0.0, %v2127
        %v2129 = vpop.f32.mrb[0].mxu0
        %2130 = vmatprep.mubr.bf16.mxu0 0
        %2131 = vmatmul.mubr.bf16.gmra.mrb[0].mxu0 %v1978
        %v2132 = vpop.f32.mrb[0].mxu0
        %v2133 = vadd.f32 0.0, %v2132
        %v2134 = vpop.f32.mrb[0].mxu0
        %v2135 = vpop.f32.mrb[0].mxu0
        %v2136 = vadd.f32 0.0, %v2135
        %v2137 = vpop.f32.mrb[0].mxu0
        %2138 = vmatprep.mubr.bf16.mxu0 0
        %2139 = vmatmul.mubr.bf16.gmra.mrb[0].mxu0 %v1981
        %v2140 = vpop.f32.mrb[0].mxu0
        %v2141 = vadd.f32 0.0, %v2140
        %v2142 = vpop.f32.mrb[0].mxu0
        %v2143 = vpop.f32.mrb[0].mxu0
        %v2144 = vadd.f32 0.0, %v2143
        %v2145 = vpop.f32.mrb[0].mxu0
        %2146 = vdwg.mxu0
        %v2147 = vadd.f32 %v1900, %v2021
        %v2148 = vadd.f32 %v1901, %v2024
        %v2149 = vadd.f32 %v1902, %v2029
        %v2150 = vadd.f32 %v1903, %v2032
        %v2151 = vadd.f32 %v1904, %v2037
        %v2152 = vadd.f32 %v1905, %v2040
        %v2153 = vadd.f32 %v1906, %v2045
        %v2154 = vadd.f32 %v1907, %v2048
        %v2155 = vadd.f32 %v1908, %v2053
        %v2156 = vadd.f32 %v1909, %v2056
        %v2157 = vadd.f32 %v1910, %v2061
        %v2158 = vadd.f32 %v1911, %v2064
        %v2159 = vadd.f32 %v1912, %v2069
        %v2160 = vadd.f32 %v1913, %v2072
        %v2161 = vadd.f32 %v1914, %v2077
        %v2162 = vadd.f32 %v1915, %v2080
        %v2163 = vadd.f32 %v1916, %v2085
        %v2164 = vadd.f32 %v1917, %v2088
        %v2165 = vadd.f32 %v1918, %v2093
        %v2166 = vadd.f32 %v1919, %v2096
        %v2167 = vadd.f32 %v1920, %v2101
        %v2168 = vadd.f32 %v1921, %v2104
        %v2169 = vadd.f32 %v1922, %v2109
        %v2170 = vadd.f32 %v1923, %v2112
        %v2171 = vadd.f32 %v1924, %v2117
        %v2172 = vadd.f32 %v1925, %v2120
        %v2173 = vadd.f32 %v1926, %v2125
        %v2174 = vadd.f32 %v1927, %v2128
        %v2175 = vadd.f32 %v1928, %v2133
        %v2176 = vadd.f32 %v1929, %v2136
        %v2177 = vadd.f32 %v1930, %v2141
        %v2178 = vadd.f32 %v1931, %v2144
        %v2179 = vld [vmem:[#allocation2 + $0xc8] sm:$0xc0]
        %v2180 = vld [vmem:[#allocation2 + $0xd0] sm:$0xff]
        %v2181 = vld [vmem:[#allocation2 + $0xd8] sm:$0xff]
        %v2182 = vld [vmem:[#allocation2 + $0xe0] sm:$0xff]
        %v2183 = vld [vmem:[#allocation2 + $0xe8] sm:$0xff]
        %v2184 = vld [vmem:[#allocation2 + $0xf0] sm:$0xff]
        %v2185 = vld [vmem:[#allocation2 + $0xf8] sm:$0xff]
        %v2186 = vld [vmem:[#allocation2 + $0x100] sm:$0xff]
        %v2187 = vld [vmem:[#allocation2 + $0x108] sm:$0xff]
        %v2188 = vld [vmem:[#allocation2 + $0x110] sm:$0xff]
        %v2189 = vld [vmem:[#allocation2 + $0x118] sm:$0xff]
        %v2190 = vld [vmem:[#allocation2 + $0x120] sm:$0xff]
        %v2191 = vld [vmem:[#allocation2 + $0x128] sm:$0xff]
        %v2192 = vld [vmem:[#allocation2 + $0x130] sm:$0xff]
        %v2193 = vld [vmem:[#allocation2 + $0x138] sm:$0xff]
        %v2194 = vld [vmem:[#allocation2 + $0x140] sm:$0xff]
        %v2195 = vld [vmem:[#allocation2 + $0x148] sm:$0x3f]
        %2197 = vset.pattern.permute.xlu0 0
        %2198 = vperm.xlu0 %2197, %v581
        %v2199 = vpop.permute.xlu0 %2198
        %v2202 = vunpack.c.l.s4 839922192
        %v2203 = vunpack.c.0.s8 %v2202
        %v2204 = vlaneseq
        %v2205 = vshrl.u32 %v2204, 7
        %v2206 = vsub.s32 %v2203, %v2205
        %v2207 = vrot.slane %v2199, %v2206
        %2209 = vset.pattern.permute.xlu0 0
        %2210 = vperm.xlu0 %2209, %v582
        %v2211 = vpop.permute.xlu0 %2210
        %v2214 = vunpack.c.l.s4 839922192
        %v2215 = vunpack.c.0.s8 %v2214
        %v2216 = vlaneseq
        %v2217 = vshrl.u32 %v2216, 7
        %v2218 = vsub.s32 %v2215, %v2217
        %v2219 = vrot.slane %v2211, %v2218
        %2221 = vset.pattern.permute.xlu0 0
        %2222 = vperm.xlu0 %2221, %v583
        %v2223 = vpop.permute.xlu0 %2222
        %v2226 = vunpack.c.l.s4 839922192
        %v2227 = vunpack.c.0.s8 %v2226
        %v2228 = vlaneseq
        %v2229 = vshrl.u32 %v2228, 7
        %v2230 = vsub.s32 %v2227, %v2229
        %v2231 = vrot.slane %v2223, %v2230
        %2233 = vset.pattern.permute.xlu0 0
        %2234 = vperm.xlu0 %2233, %v584
        %v2235 = vpop.permute.xlu0 %2234
        %v2238 = vunpack.c.l.s4 839922192
        %v2239 = vunpack.c.0.s8 %v2238
        %v2240 = vlaneseq
        %v2241 = vshrl.u32 %v2240, 7
        %v2242 = vsub.s32 %v2239, %v2241
        %v2243 = vrot.slane %v2235, %v2242
        %2245 = vset.pattern.permute.xlu0 0
        %2246 = vperm.xlu0 %2245, %v585
        %v2247 = vpop.permute.xlu0 %2246
        %v2250 = vunpack.c.l.s4 839922192
        %v2251 = vunpack.c.0.s8 %v2250
        %v2252 = vlaneseq
        %v2253 = vshrl.u32 %v2252, 7
        %v2254 = vsub.s32 %v2251, %v2253
        %v2255 = vrot.slane %v2247, %v2254
        %2257 = vset.pattern.permute.xlu0 0
        %2258 = vperm.xlu0 %2257, %v586
        %v2259 = vpop.permute.xlu0 %2258
        %v2262 = vunpack.c.l.s4 839922192
        %v2263 = vunpack.c.0.s8 %v2262
        %v2264 = vlaneseq
        %v2265 = vshrl.u32 %v2264, 7
        %v2266 = vsub.s32 %v2263, %v2265
        %v2267 = vrot.slane %v2259, %v2266
        %2269 = vset.pattern.permute.xlu0 0
        %2270 = vperm.xlu0 %2269, %v587
        %v2271 = vpop.permute.xlu0 %2270
        %v2274 = vunpack.c.l.s4 839922192
        %v2275 = vunpack.c.0.s8 %v2274
        %v2276 = vlaneseq
        %v2277 = vshrl.u32 %v2276, 7
        %v2278 = vsub.s32 %v2275, %v2277
        %v2279 = vrot.slane %v2271, %v2278
        %2281 = vset.pattern.permute.xlu0 0
        %2282 = vperm.xlu0 %2281, %v588
        %v2283 = vpop.permute.xlu0 %2282
        %v2286 = vunpack.c.l.s4 839922192
        %v2287 = vunpack.c.0.s8 %v2286
        %v2288 = vlaneseq
        %v2289 = vshrl.u32 %v2288, 7
        %v2290 = vsub.s32 %v2287, %v2289
        %v2291 = vrot.slane %v2283, %v2290
        %2293 = vset.pattern.permute.xlu0 0
        %2294 = vperm.xlu0 %2293, %v589
        %v2295 = vpop.permute.xlu0 %2294
        %v2298 = vunpack.c.l.s4 839922192
        %v2299 = vunpack.c.0.s8 %v2298
        %v2300 = vlaneseq
        %v2301 = vshrl.u32 %v2300, 7
        %v2302 = vsub.s32 %v2299, %v2301
        %v2303 = vrot.slane %v2295, %v2302
        %2305 = vset.pattern.permute.xlu0 0
        %2306 = vperm.xlu0 %2305, %v590
        %v2307 = vpop.permute.xlu0 %2306
        %v2310 = vunpack.c.l.s4 839922192
        %v2311 = vunpack.c.0.s8 %v2310
        %v2312 = vlaneseq
        %v2313 = vshrl.u32 %v2312, 7
        %v2314 = vsub.s32 %v2311, %v2313
        %v2315 = vrot.slane %v2307, %v2314
        %2317 = vset.pattern.permute.xlu0 0
        %2318 = vperm.xlu0 %2317, %v591
        %v2319 = vpop.permute.xlu0 %2318
        %v2322 = vunpack.c.l.s4 839922192
        %v2323 = vunpack.c.0.s8 %v2322
        %v2324 = vlaneseq
        %v2325 = vshrl.u32 %v2324, 7
        %v2326 = vsub.s32 %v2323, %v2325
        %v2327 = vrot.slane %v2319, %v2326
        %2329 = vset.pattern.permute.xlu0 0
        %2330 = vperm.xlu0 %2329, %v592
        %v2331 = vpop.permute.xlu0 %2330
        %v2334 = vunpack.c.l.s4 839922192
        %v2335 = vunpack.c.0.s8 %v2334
        %v2336 = vlaneseq
        %v2337 = vshrl.u32 %v2336, 7
        %v2338 = vsub.s32 %v2335, %v2337
        %v2339 = vrot.slane %v2331, %v2338
        %2341 = vset.pattern.permute.xlu0 0
        %2342 = vperm.xlu0 %2341, %v593
        %v2343 = vpop.permute.xlu0 %2342
        %v2346 = vunpack.c.l.s4 839922192
        %v2347 = vunpack.c.0.s8 %v2346
        %v2348 = vlaneseq
        %v2349 = vshrl.u32 %v2348, 7
        %v2350 = vsub.s32 %v2347, %v2349
        %v2351 = vrot.slane %v2343, %v2350
        %2353 = vset.pattern.permute.xlu0 0
        %2354 = vperm.xlu0 %2353, %v594
        %v2355 = vpop.permute.xlu0 %2354
        %v2358 = vunpack.c.l.s4 839922192
        %v2359 = vunpack.c.0.s8 %v2358
        %v2360 = vlaneseq
        %v2361 = vshrl.u32 %v2360, 7
        %v2362 = vsub.s32 %v2359, %v2361
        %v2363 = vrot.slane %v2355, %v2362
        %2365 = vset.pattern.permute.xlu0 0
        %2366 = vperm.xlu0 %2365, %v595
        %v2367 = vpop.permute.xlu0 %2366
        %v2370 = vunpack.c.l.s4 839922192
        %v2371 = vunpack.c.0.s8 %v2370
        %v2372 = vlaneseq
        %v2373 = vshrl.u32 %v2372, 7
        %v2374 = vsub.s32 %v2371, %v2373
        %v2375 = vrot.slane %v2367, %v2374
        %2377 = vset.pattern.permute.xlu0 0
        %2378 = vperm.xlu0 %2377, %v596
        %v2379 = vpop.permute.xlu0 %2378
        %v2382 = vunpack.c.l.s4 839922192
        %v2383 = vunpack.c.0.s8 %v2382
        %v2384 = vlaneseq
        %v2385 = vshrl.u32 %v2384, 7
        %v2386 = vsub.s32 %v2383, %v2385
        %v2387 = vrot.slane %v2379, %v2386
        %2389 = vset.pattern.permute.xlu0 0
        %2390 = vperm.xlu0 %2389, %v597
        %v2391 = vpop.permute.xlu0 %2390
        %v2394 = vunpack.c.l.s4 839922192
        %v2395 = vunpack.c.0.s8 %v2394
        %v2396 = vlaneseq
        %v2397 = vshrl.u32 %v2396, 7
        %v2398 = vsub.s32 %v2395, %v2397
        %v2399 = vrot.slane %v2391, %v2398
        %2401 = vset.pattern.permute.xlu0 0
        %2402 = vperm.xlu0 %2401, %v598
        %v2403 = vpop.permute.xlu0 %2402
        %v2406 = vunpack.c.l.s4 839922192
        %v2407 = vunpack.c.0.s8 %v2406
        %v2408 = vlaneseq
        %v2409 = vshrl.u32 %v2408, 7
        %v2410 = vsub.s32 %v2407, %v2409
        %v2411 = vrot.slane %v2403, %v2410
        %2413 = vset.pattern.permute.xlu0 0
        %2414 = vperm.xlu0 %2413, %v599
        %v2415 = vpop.permute.xlu0 %2414
        %v2418 = vunpack.c.l.s4 839922192
        %v2419 = vunpack.c.0.s8 %v2418
        %v2420 = vlaneseq
        %v2421 = vshrl.u32 %v2420, 7
        %v2422 = vsub.s32 %v2419, %v2421
        %v2423 = vrot.slane %v2415, %v2422
        %2425 = vset.pattern.permute.xlu0 0
        %2426 = vperm.xlu0 %2425, %v600
        %v2427 = vpop.permute.xlu0 %2426
        %v2430 = vunpack.c.l.s4 839922192
        %v2431 = vunpack.c.0.s8 %v2430
        %v2432 = vlaneseq
        %v2433 = vshrl.u32 %v2432, 7
        %v2434 = vsub.s32 %v2431, %v2433
        %v2435 = vrot.slane %v2427, %v2434
        %2437 = vset.pattern.permute.xlu0 0
        %2438 = vperm.xlu0 %2437, %v601
        %v2439 = vpop.permute.xlu0 %2438
        %v2442 = vunpack.c.l.s4 839922192
        %v2443 = vunpack.c.0.s8 %v2442
        %v2444 = vlaneseq
        %v2445 = vshrl.u32 %v2444, 7
        %v2446 = vsub.s32 %v2443, %v2445
        %v2447 = vrot.slane %v2439, %v2446
        %2449 = vset.pattern.permute.xlu0 0
        %2450 = vperm.xlu0 %2449, %v602
        %v2451 = vpop.permute.xlu0 %2450
        %v2454 = vunpack.c.l.s4 839922192
        %v2455 = vunpack.c.0.s8 %v2454
        %v2456 = vlaneseq
        %v2457 = vshrl.u32 %v2456, 7
        %v2458 = vsub.s32 %v2455, %v2457
        %v2459 = vrot.slane %v2451, %v2458
        %2461 = vset.pattern.permute.xlu0 0
        %2462 = vperm.xlu0 %2461, %v603
        %v2463 = vpop.permute.xlu0 %2462
        %v2466 = vunpack.c.l.s4 839922192
        %v2467 = vunpack.c.0.s8 %v2466
        %v2468 = vlaneseq
        %v2469 = vshrl.u32 %v2468, 7
        %v2470 = vsub.s32 %v2467, %v2469
        %v2471 = vrot.slane %v2463, %v2470
        %2473 = vset.pattern.permute.xlu0 0
        %2474 = vperm.xlu0 %2473, %v604
        %v2475 = vpop.permute.xlu0 %2474
        %v2478 = vunpack.c.l.s4 839922192
        %v2479 = vunpack.c.0.s8 %v2478
        %v2480 = vlaneseq
        %v2481 = vshrl.u32 %v2480, 7
        %v2482 = vsub.s32 %v2479, %v2481
        %v2483 = vrot.slane %v2475, %v2482
        %2485 = vset.pattern.permute.xlu0 0
        %2486 = vperm.xlu0 %2485, %v605
        %v2487 = vpop.permute.xlu0 %2486
        %v2490 = vunpack.c.l.s4 839922192
        %v2491 = vunpack.c.0.s8 %v2490
        %v2492 = vlaneseq
        %v2493 = vshrl.u32 %v2492, 7
        %v2494 = vsub.s32 %v2491, %v2493
        %v2495 = vrot.slane %v2487, %v2494
        %2497 = vset.pattern.permute.xlu0 0
        %2498 = vperm.xlu0 %2497, %v606
        %v2499 = vpop.permute.xlu0 %2498
        %v2502 = vunpack.c.l.s4 839922192
        %v2503 = vunpack.c.0.s8 %v2502
        %v2504 = vlaneseq
        %v2505 = vshrl.u32 %v2504, 7
        %v2506 = vsub.s32 %v2503, %v2505
        %v2507 = vrot.slane %v2499, %v2506
        %2509 = vset.pattern.permute.xlu0 0
        %2510 = vperm.xlu0 %2509, %v607
        %v2511 = vpop.permute.xlu0 %2510
        %v2514 = vunpack.c.l.s4 839922192
        %v2515 = vunpack.c.0.s8 %v2514
        %v2516 = vlaneseq
        %v2517 = vshrl.u32 %v2516, 7
        %v2518 = vsub.s32 %v2515, %v2517
        %v2519 = vrot.slane %v2511, %v2518
        %2521 = vset.pattern.permute.xlu0 0
        %2522 = vperm.xlu0 %2521, %v608
        %v2523 = vpop.permute.xlu0 %2522
        %v2526 = vunpack.c.l.s4 839922192
        %v2527 = vunpack.c.0.s8 %v2526
        %v2528 = vlaneseq
        %v2529 = vshrl.u32 %v2528, 7
        %v2530 = vsub.s32 %v2527, %v2529
        %v2531 = vrot.slane %v2523, %v2530
        %2533 = vset.pattern.permute.xlu0 0
        %2534 = vperm.xlu0 %2533, %v609
        %v2535 = vpop.permute.xlu0 %2534
        %v2538 = vunpack.c.l.s4 839922192
        %v2539 = vunpack.c.0.s8 %v2538
        %v2540 = vlaneseq
        %v2541 = vshrl.u32 %v2540, 7
        %v2542 = vsub.s32 %v2539, %v2541
        %v2543 = vrot.slane %v2535, %v2542
        %2545 = vset.pattern.permute.xlu0 0
        %2546 = vperm.xlu0 %2545, %v610
        %v2547 = vpop.permute.xlu0 %2546
        %v2550 = vunpack.c.l.s4 839922192
        %v2551 = vunpack.c.0.s8 %v2550
        %v2552 = vlaneseq
        %v2553 = vshrl.u32 %v2552, 7
        %v2554 = vsub.s32 %v2551, %v2553
        %v2555 = vrot.slane %v2547, %v2554
        %2557 = vset.pattern.permute.xlu0 0
        %2558 = vperm.xlu0 %2557, %v611
        %v2559 = vpop.permute.xlu0 %2558
        %v2562 = vunpack.c.l.s4 839922192
        %v2563 = vunpack.c.0.s8 %v2562
        %v2564 = vlaneseq
        %v2565 = vshrl.u32 %v2564, 7
        %v2566 = vsub.s32 %v2563, %v2565
        %v2567 = vrot.slane %v2559, %v2566
        %2569 = vset.pattern.permute.xlu0 0
        %2570 = vperm.xlu0 %2569, %v612
        %v2571 = vpop.permute.xlu0 %2570
        %v2574 = vunpack.c.l.s4 839922192
        %v2575 = vunpack.c.0.s8 %v2574
        %v2576 = vlaneseq
        %v2577 = vshrl.u32 %v2576, 7
        %v2578 = vsub.s32 %v2575, %v2577
        %v2579 = vrot.slane %v2571, %v2578
        %v2612 = vunpack.c.l.b16 %v2207
        %v2613 = vunpack.c.l.b16 %v2219
        %v2614 = vunpack.c.l.b16 %v2231
        %v2615 = vunpack.c.l.b16 %v2243
        %v2616 = vunpack.c.l.b16 %v2255
        %v2617 = vunpack.c.l.b16 %v2267
        %v2618 = vunpack.c.l.b16 %v2279
        %v2619 = vunpack.c.l.b16 %v2291
        %v2620 = vunpack.c.l.b16 %v2303
        %v2621 = vunpack.c.l.b16 %v2315
        %v2622 = vunpack.c.l.b16 %v2327
        %v2623 = vunpack.c.l.b16 %v2339
        %v2624 = vunpack.c.l.b16 %v2351
        %v2625 = vunpack.c.l.b16 %v2363
        %v2626 = vunpack.c.l.b16 %v2375
        %v2627 = vunpack.c.l.b16 %v2387
        %v2628 = vunpack.c.l.b16 %v2399
        %v2629 = vunpack.c.l.b16 %v2411
        %v2630 = vunpack.c.l.b16 %v2423
        %v2631 = vunpack.c.l.b16 %v2435
        %v2632 = vunpack.c.l.b16 %v2447
        %v2633 = vunpack.c.l.b16 %v2459
        %v2634 = vunpack.c.l.b16 %v2471
        %v2635 = vunpack.c.l.b16 %v2483
        %v2636 = vunpack.c.l.b16 %v2495
        %v2637 = vunpack.c.l.b16 %v2507
        %v2638 = vunpack.c.l.b16 %v2519
        %v2639 = vunpack.c.l.b16 %v2531
        %v2640 = vunpack.c.l.b16 %v2543
        %v2641 = vunpack.c.l.b16 %v2555
        %v2642 = vunpack.c.l.b16 %v2567
        %v2643 = vunpack.c.l.b16 %v2579
        %v2644 = vpack.c.b16 %v2613, %v2612
        %v2645 = vpack.c.b16 %v2615, %v2614
        %v2646 = vpack.c.b16 %v2617, %v2616
        %v2647 = vpack.c.b16 %v2619, %v2618
        %v2648 = vpack.c.b16 %v2621, %v2620
        %v2649 = vpack.c.b16 %v2623, %v2622
        %v2650 = vpack.c.b16 %v2625, %v2624
        %v2651 = vpack.c.b16 %v2627, %v2626
        %v2652 = vpack.c.b16 %v2629, %v2628
        %v2653 = vpack.c.b16 %v2631, %v2630
        %v2654 = vpack.c.b16 %v2633, %v2632
        %v2655 = vpack.c.b16 %v2635, %v2634
        %v2656 = vpack.c.b16 %v2637, %v2636
        %v2657 = vpack.c.b16 %v2639, %v2638
        %v2658 = vpack.c.b16 %v2641, %v2640
        %v2659 = vpack.c.b16 %v2643, %v2642
        %v2660 = vrot.slane %v2644, 2
        %v2661 = vrot.slane %v2645, 2
        %v2662 = vsel %vm1654, %v2660, %v2661
        %v2663 = vrot.slane %v2646, 2
        %v2664 = vsel %vm1654, %v2661, %v2663
        %v2665 = vrot.slane %v2647, 2
        %v2666 = vsel %vm1654, %v2663, %v2665
        %v2667 = vrot.slane %v2648, 2
        %v2668 = vsel %vm1654, %v2665, %v2667
        %v2669 = vrot.slane %v2649, 2
        %v2670 = vsel %vm1654, %v2667, %v2669
        %v2671 = vrot.slane %v2650, 2
        %v2672 = vsel %vm1654, %v2669, %v2671
        %v2673 = vrot.slane %v2651, 2
        %v2674 = vsel %vm1654, %v2671, %v2673
        %v2675 = vrot.slane %v2652, 2
        %v2676 = vsel %vm1654, %v2673, %v2675
        %v2677 = vrot.slane %v2653, 2
        %v2678 = vsel %vm1654, %v2675, %v2677
        %v2679 = vrot.slane %v2654, 2
        %v2680 = vsel %vm1654, %v2677, %v2679
        %v2681 = vrot.slane %v2655, 2
        %v2682 = vsel %vm1654, %v2679, %v2681
        %v2683 = vrot.slane %v2656, 2
        %v2684 = vsel %vm1654, %v2681, %v2683
        %v2685 = vrot.slane %v2657, 2
        %v2686 = vsel %vm1654, %v2683, %v2685
        %v2687 = vrot.slane %v2658, 2
        %v2688 = vsel %vm1654, %v2685, %v2687
        %v2689 = vrot.slane %v2659, 2
        %v2690 = vsel %vm1654, %v2687, %v2689
        %v2708 = vmul.bf16 %v2179, %v2660
        %v2709 = vmul.bf16 %v2180, %v2662
        %v2710 = vmul.bf16 %v2181, %v2664
        %v2711 = vmul.bf16 %v2182, %v2666
        %v2712 = vmul.bf16 %v2183, %v2668
        %v2713 = vmul.bf16 %v2184, %v2670
        %v2714 = vmul.bf16 %v2185, %v2672
        %v2715 = vmul.bf16 %v2186, %v2674
        %v2716 = vmul.bf16 %v2187, %v2676
        %v2717 = vmul.bf16 %v2188, %v2678
        %v2718 = vmul.bf16 %v2189, %v2680
        %v2719 = vmul.bf16 %v2190, %v2682
        %v2720 = vmul.bf16 %v2191, %v2684
        %v2721 = vmul.bf16 %v2192, %v2686
        %v2722 = vmul.bf16 %v2193, %v2688
        %v2723 = vmul.bf16 %v2194, %v2690
        %v2724 = vmul.bf16 %v2195, %v2689
        %s2725 = scalar_lea.vmem %s3, 8
        %v2726 = vld [vmem:[%s2725] sm:$0xf]
        %v2744 = vrot.slane %v2708, 6
        %v2745 = vrot.slane %v2709, 6
        %v2746 = vsel %vm1570, %v2744, %v2745
        %v2747 = vrot.slane %v2710, 6
        %v2748 = vsel %vm1570, %v2745, %v2747
        %v2749 = vrot.slane %v2711, 6
        %v2750 = vsel %vm1570, %v2747, %v2749
        %v2751 = vrot.slane %v2712, 6
        %v2752 = vsel %vm1570, %v2749, %v2751
        %v2753 = vrot.slane %v2713, 6
        %v2754 = vsel %vm1570, %v2751, %v2753
        %v2755 = vrot.slane %v2714, 6
        %v2756 = vsel %vm1570, %v2753, %v2755
        %v2757 = vrot.slane %v2715, 6
        %v2758 = vsel %vm1570, %v2755, %v2757
        %v2759 = vrot.slane %v2716, 6
        %v2760 = vsel %vm1570, %v2757, %v2759
        %v2761 = vrot.slane %v2717, 6
        %v2762 = vsel %vm1570, %v2759, %v2761
        %v2763 = vrot.slane %v2718, 6
        %v2764 = vsel %vm1570, %v2761, %v2763
        %v2765 = vrot.slane %v2719, 6
        %v2766 = vsel %vm1570, %v2763, %v2765
        %v2767 = vrot.slane %v2720, 6
        %v2768 = vsel %vm1570, %v2765, %v2767
        %v2769 = vrot.slane %v2721, 6
        %v2770 = vsel %vm1570, %v2767, %v2769
        %v2771 = vrot.slane %v2722, 6
        %v2772 = vsel %vm1570, %v2769, %v2771
        %v2773 = vrot.slane %v2723, 6
        %v2774 = vsel %vm1570, %v2771, %v2773
        %v2775 = vrot.slane %v2724, 6
        %v2776 = vsel %vm1570, %v2773, %v2775
        %v2778 = vsel %vm641, %v2746, 0
        %v2781 = vsel %vm641, %v2748, 0
        %v2784 = vsel %vm641, %v2750, 0
        %v2787 = vsel %vm641, %v2752, 0
        %v2790 = vsel %vm641, %v2754, 0
        %v2793 = vsel %vm641, %v2756, 0
        %v2796 = vsel %vm641, %v2758, 0
        %v2799 = vsel %vm641, %v2760, 0
        %v2802 = vsel %vm641, %v2762, 0
        %v2805 = vsel %vm641, %v2764, 0
        %v2808 = vsel %vm641, %v2766, 0
        %v2811 = vsel %vm641, %v2768, 0
        %v2814 = vsel %vm641, %v2770, 0
        %v2817 = vsel %vm641, %v2772, 0
        %v2820 = vsel %vm641, %v2774, 0
        %v2823 = vsel %vm641, %v2776, 0
        %v2826 = vsel %vm690, %v2726, 0
        %2828 = vmatprep.subr.bf16.mxu0 0
        %2829 = vmatpush1.bf16.msra.mxu0 %v2826
        %2830 = vmatprep.subr.bf16.mxu0 0
        %2831 = vmatpush1.bf16.msra.mxu0 0
        %2832 = vmatprep.subr.bf16.mxu0 0
        %2833 = vmatpush1.bf16.msra.mxu0 0
        %2834 = vmatprep.subr.bf16.mxu0 0
        %2835 = vmatpush1.bf16.msra.mxu0 0
        %2836 = vmatprep.subr.bf16.mxu0 0
        %2837 = vmatpush1.bf16.msra.mxu0 0
        %2838 = vmatprep.subr.bf16.mxu0 0
        %2839 = vmatpush1.bf16.msra.mxu0 0
        %2840 = vmatprep.subr.bf16.mxu0 0
        %2841 = vmatpush1.bf16.msra.mxu0 0
        %2842 = vmatprep.subr.bf16.mxu0 0
        %2843 = vmatpush1.bf16.msra.mxu0 0
        %2844 = vmatprep.subr.bf16.mxu0 0
        %2845 = vmatpush1.bf16.msra.mxu0 0
        %2846 = vmatprep.subr.bf16.mxu0 0
        %2847 = vmatpush1.bf16.msra.mxu0 0
        %2848 = vmatprep.subr.bf16.mxu0 0
        %2849 = vmatpush1.bf16.msra.mxu0 0
        %2850 = vmatprep.subr.bf16.mxu0 0
        %2851 = vmatpush1.bf16.msra.mxu0 0
        %2852 = vmatprep.subr.bf16.mxu0 0
        %2853 = vmatpush1.bf16.msra.mxu0 0
        %2854 = vmatprep.subr.bf16.mxu0 0
        %2855 = vmatpush1.bf16.msra.mxu0 0
        %2856 = vmatprep.subr.bf16.mxu0 0
        %2857 = vmatpush1.bf16.msra.mxu0 0
        %2858 = vmatprep.subr.bf16.mxu0 0
        %2859 = vmatpush1.bf16.msra.mxu0 0
        %2860 = vmatprep.mubr.bf16.mxu0 0
        %2861 = vmatmul.mubr.bf16.gmra.mrb[0].mxu0 %v2778
        %v2862 = vpop.f32.mrb[0].mxu0
        %v2863 = vadd.f32 0.0, %v2862
        %v2864 = vpop.f32.mrb[0].mxu0
        %v2865 = vpop.f32.mrb[0].mxu0
        %v2866 = vadd.f32 0.0, %v2865
        %v2867 = vpop.f32.mrb[0].mxu0
        %2868 = vmatprep.mubr.bf16.mxu0 0
        %2869 = vmatmul.mubr.bf16.gmra.mrb[0].mxu0 %v2781
        %v2870 = vpop.f32.mrb[0].mxu0
        %v2871 = vadd.f32 0.0, %v2870
        %v2872 = vpop.f32.mrb[0].mxu0
        %v2873 = vpop.f32.mrb[0].mxu0
        %v2874 = vadd.f32 0.0, %v2873
        %v2875 = vpop.f32.mrb[0].mxu0
        %2876 = vmatprep.mubr.bf16.mxu0 0
        %2877 = vmatmul.mubr.bf16.gmra.mrb[0].mxu0 %v2784
        %v2878 = vpop.f32.mrb[0].mxu0
        %v2879 = vadd.f32 0.0, %v2878
        %v2880 = vpop.f32.mrb[0].mxu0
        %v2881 = vpop.f32.mrb[0].mxu0
        %v2882 = vadd.f32 0.0, %v2881
        %v2883 = vpop.f32.mrb[0].mxu0
        %2884 = vmatprep.mubr.bf16.mxu0 0
        %2885 = vmatmul.mubr.bf16.gmra.mrb[0].mxu0 %v2787
        %v2886 = vpop.f32.mrb[0].mxu0
        %v2887 = vadd.f32 0.0, %v2886
        %v2888 = vpop.f32.mrb[0].mxu0
        %v2889 = vpop.f32.mrb[0].mxu0
        %v2890 = vadd.f32 0.0, %v2889
        %v2891 = vpop.f32.mrb[0].mxu0
        %2892 = vmatprep.mubr.bf16.mxu0 0
        %2893 = vmatmul.mubr.bf16.gmra.mrb[0].mxu0 %v2790
        %v2894 = vpop.f32.mrb[0].mxu0
        %v2895 = vadd.f32 0.0, %v2894
        %v2896 = vpop.f32.mrb[0].mxu0
        %v2897 = vpop.f32.mrb[0].mxu0
        %v2898 = vadd.f32 0.0, %v2897
        %v2899 = vpop.f32.mrb[0].mxu0
        %2900 = vmatprep.mubr.bf16.mxu0 0
        %2901 = vmatmul.mubr.bf16.gmra.mrb[0].mxu0 %v2793
        %v2902 = vpop.f32.mrb[0].mxu0
        %v2903 = vadd.f32 0.0, %v2902
        %v2904 = vpop.f32.mrb[0].mxu0
        %v2905 = vpop.f32.mrb[0].mxu0
        %v2906 = vadd.f32 0.0, %v2905
        %v2907 = vpop.f32.mrb[0].mxu0
        %2908 = vmatprep.mubr.bf16.mxu0 0
        %2909 = vmatmul.mubr.bf16.gmra.mrb[0].mxu0 %v2796
        %v2910 = vpop.f32.mrb[0].mxu0
        %v2911 = vadd.f32 0.0, %v2910
        %v2912 = vpop.f32.mrb[0].mxu0
        %v2913 = vpop.f32.mrb[0].mxu0
        %v2914 = vadd.f32 0.0, %v2913
        %v2915 = vpop.f32.mrb[0].mxu0
        %2916 = vmatprep.mubr.bf16.mxu0 0
        %2917 = vmatmul.mubr.bf16.gmra.mrb[0].mxu0 %v2799
        %v2918 = vpop.f32.mrb[0].mxu0
        %v2919 = vadd.f32 0.0, %v2918
        %v2920 = vpop.f32.mrb[0].mxu0
        %v2921 = vpop.f32.mrb[0].mxu0
        %v2922 = vadd.f32 0.0, %v2921
        %v2923 = vpop.f32.mrb[0].mxu0
        %2924 = vmatprep.mubr.bf16.mxu0 0
        %2925 = vmatmul.mubr.bf16.gmra.mrb[0].mxu0 %v2802
        %v2926 = vpop.f32.mrb[0].mxu0
        %v2927 = vadd.f32 0.0, %v2926
        %v2928 = vpop.f32.mrb[0].mxu0
        %v2929 = vpop.f32.mrb[0].mxu0
        %v2930 = vadd.f32 0.0, %v2929
        %v2931 = vpop.f32.mrb[0].mxu0
        %2932 = vmatprep.mubr.bf16.mxu0 0
        %2933 = vmatmul.mubr.bf16.gmra.mrb[0].mxu0 %v2805
        %v2934 = vpop.f32.mrb[0].mxu0
        %v2935 = vadd.f32 0.0, %v2934
        %v2936 = vpop.f32.mrb[0].mxu0
        %v2937 = vpop.f32.mrb[0].mxu0
        %v2938 = vadd.f32 0.0, %v2937
        %v2939 = vpop.f32.mrb[0].mxu0
        %2940 = vmatprep.mubr.bf16.mxu0 0
        %2941 = vmatmul.mubr.bf16.gmra.mrb[0].mxu0 %v2808
        %v2942 = vpop.f32.mrb[0].mxu0
        %v2943 = vadd.f32 0.0, %v2942
        %v2944 = vpop.f32.mrb[0].mxu0
        %v2945 = vpop.f32.mrb[0].mxu0
        %v2946 = vadd.f32 0.0, %v2945
        %v2947 = vpop.f32.mrb[0].mxu0
        %2948 = vmatprep.mubr.bf16.mxu0 0
        %2949 = vmatmul.mubr.bf16.gmra.mrb[0].mxu0 %v2811
        %v2950 = vpop.f32.mrb[0].mxu0
        %v2951 = vadd.f32 0.0, %v2950
        %v2952 = vpop.f32.mrb[0].mxu0
        %v2953 = vpop.f32.mrb[0].mxu0
        %v2954 = vadd.f32 0.0, %v2953
        %v2955 = vpop.f32.mrb[0].mxu0
        %2956 = vmatprep.mubr.bf16.mxu0 0
        %2957 = vmatmul.mubr.bf16.gmra.mrb[0].mxu0 %v2814
        %v2958 = vpop.f32.mrb[0].mxu0
        %v2959 = vadd.f32 0.0, %v2958
        %v2960 = vpop.f32.mrb[0].mxu0
        %v2961 = vpop.f32.mrb[0].mxu0
        %v2962 = vadd.f32 0.0, %v2961
        %v2963 = vpop.f32.mrb[0].mxu0
        %2964 = vmatprep.mubr.bf16.mxu0 0
        %2965 = vmatmul.mubr.bf16.gmra.mrb[0].mxu0 %v2817
        %v2966 = vpop.f32.mrb[0].mxu0
        %v2967 = vadd.f32 0.0, %v2966
        %v2968 = vpop.f32.mrb[0].mxu0
        %v2969 = vpop.f32.mrb[0].mxu0
        %v2970 = vadd.f32 0.0, %v2969
        %v2971 = vpop.f32.mrb[0].mxu0
        %2972 = vmatprep.mubr.bf16.mxu0 0
        %2973 = vmatmul.mubr.bf16.gmra.mrb[0].mxu0 %v2820
        %v2974 = vpop.f32.mrb[0].mxu0
        %v2975 = vadd.f32 0.0, %v2974
        %v2976 = vpop.f32.mrb[0].mxu0
        %v2977 = vpop.f32.mrb[0].mxu0
        %v2978 = vadd.f32 0.0, %v2977
        %v2979 = vpop.f32.mrb[0].mxu0
        %2980 = vmatprep.mubr.bf16.mxu0 0
        %2981 = vmatmul.mubr.bf16.gmra.mrb[0].mxu0 %v2823
        %v2982 = vpop.f32.mrb[0].mxu0
        %v2983 = vadd.f32 0.0, %v2982
        %v2984 = vpop.f32.mrb[0].mxu0
        %v2985 = vpop.f32.mrb[0].mxu0
        %v2986 = vadd.f32 0.0, %v2985
        %v2987 = vpop.f32.mrb[0].mxu0
        %2988 = vdwg.mxu0
        %v2989 = vadd.f32 %v2147, %v2863
        %v2990 = vadd.f32 %v2148, %v2866
        %v2991 = vadd.f32 %v2149, %v2871
        %v2992 = vadd.f32 %v2150, %v2874
        %v2993 = vadd.f32 %v2151, %v2879
        %v2994 = vadd.f32 %v2152, %v2882
        %v2995 = vadd.f32 %v2153, %v2887
        %v2996 = vadd.f32 %v2154, %v2890
        %v2997 = vadd.f32 %v2155, %v2895
        %v2998 = vadd.f32 %v2156, %v2898
        %v2999 = vadd.f32 %v2157, %v2903
        %v3000 = vadd.f32 %v2158, %v2906
        %v3001 = vadd.f32 %v2159, %v2911
        %v3002 = vadd.f32 %v2160, %v2914
        %v3003 = vadd.f32 %v2161, %v2919
        %v3004 = vadd.f32 %v2162, %v2922
        %v3005 = vadd.f32 %v2163, %v2927
        %v3006 = vadd.f32 %v2164, %v2930
        %v3007 = vadd.f32 %v2165, %v2935
        %v3008 = vadd.f32 %v2166, %v2938
        %v3009 = vadd.f32 %v2167, %v2943
        %v3010 = vadd.f32 %v2168, %v2946
        %v3011 = vadd.f32 %v2169, %v2951
        %v3012 = vadd.f32 %v2170, %v2954
        %v3013 = vadd.f32 %v2171, %v2959
        %v3014 = vadd.f32 %v2172, %v2962
        %v3015 = vadd.f32 %v2173, %v2967
        %v3016 = vadd.f32 %v2174, %v2970
        %v3017 = vadd.f32 %v2175, %v2975
        %v3018 = vadd.f32 %v2176, %v2978
        %v3019 = vadd.f32 %v2177, %v2983
        %v3020 = vadd.f32 %v2178, %v2986
        %v3021 = vld [vmem:[#allocation2 + $0x120] sm:$0xfc]
        %v3022 = vld [vmem:[#allocation2 + $0x1a0] sm:$0x3]
        %v3023 = vmul.bf16 %v3021, %v1571
        %v3024 = vmul.bf16 %v613, %v1573
        %v3025 = vmul.bf16 %v614, %v1575
        %v3026 = vmul.bf16 %v615, %v1577
        %v3027 = vmul.bf16 %v616, %v1579
        %v3028 = vmul.bf16 %v617, %v1581
        %v3029 = vmul.bf16 %v618, %v1583
        %v3030 = vmul.bf16 %v619, %v1585
        %v3031 = vmul.bf16 %v620, %v1587
        %v3032 = vmul.bf16 %v621, %v1589
        %v3033 = vmul.bf16 %v622, %v1591
        %v3034 = vmul.bf16 %v623, %v1593
        %v3035 = vmul.bf16 %v624, %v1595
        %v3036 = vmul.bf16 %v625, %v1597
        %v3037 = vmul.bf16 %v626, %v1599
        %v3038 = vmul.bf16 %v627, %v1601
        %v3039 = vmul.bf16 %v3022, %v1600
        %s3040 = scalar_lea.vmem %s3, 12
        %v3041 = vld [vmem:[%s3040] sm:$0xf]
        %v3059 = vrot.slane %v3023, 2
        %v3060 = vrot.slane %v3024, 2
        %v3061 = vsel %vm1654, %v3059, %v3060
        %v3062 = vrot.slane %v3025, 2
        %v3063 = vsel %vm1654, %v3060, %v3062
        %v3064 = vrot.slane %v3026, 2
        %v3065 = vsel %vm1654, %v3062, %v3064
        %v3066 = vrot.slane %v3027, 2
        %v3067 = vsel %vm1654, %v3064, %v3066
        %v3068 = vrot.slane %v3028, 2
        %v3069 = vsel %vm1654, %v3066, %v3068
        %v3070 = vrot.slane %v3029, 2
        %v3071 = vsel %vm1654, %v3068, %v3070
        %v3072 = vrot.slane %v3030, 2
        %v3073 = vsel %vm1654, %v3070, %v3072
        %v3074 = vrot.slane %v3031, 2
        %v3075 = vsel %vm1654, %v3072, %v3074
        %v3076 = vrot.slane %v3032, 2
        %v3077 = vsel %vm1654, %v3074, %v3076
        %v3078 = vrot.slane %v3033, 2
        %v3079 = vsel %vm1654, %v3076, %v3078
        %v3080 = vrot.slane %v3034, 2
        %v3081 = vsel %vm1654, %v3078, %v3080
        %v3082 = vrot.slane %v3035, 2
        %v3083 = vsel %vm1654, %v3080, %v3082
        %v3084 = vrot.slane %v3036, 2
        %v3085 = vsel %vm1654, %v3082, %v3084
        %v3086 = vrot.slane %v3037, 2
        %v3087 = vsel %vm1654, %v3084, %v3086
        %v3088 = vrot.slane %v3038, 2
        %v3089 = vsel %vm1654, %v3086, %v3088
        %v3090 = vrot.slane %v3039, 2
        %v3091 = vsel %vm1654, %v3088, %v3090
        %v3093 = vsel %vm641, %v3061, 0
        %v3096 = vsel %vm641, %v3063, 0
        %v3099 = vsel %vm641, %v3065, 0
        %v3102 = vsel %vm641, %v3067, 0
        %v3105 = vsel %vm641, %v3069, 0
        %v3108 = vsel %vm641, %v3071, 0
        %v3111 = vsel %vm641, %v3073, 0
        %v3114 = vsel %vm641, %v3075, 0
        %v3117 = vsel %vm641, %v3077, 0
        %v3120 = vsel %vm641, %v3079, 0
        %v3123 = vsel %vm641, %v3081, 0
        %v3126 = vsel %vm641, %v3083, 0
        %v3129 = vsel %vm641, %v3085, 0
        %v3132 = vsel %vm641, %v3087, 0
        %v3135 = vsel %vm641, %v3089, 0
        %v3138 = vsel %vm641, %v3091, 0
        %v3141 = vsel %vm690, %v3041, 0
        %3143 = vmatprep.subr.bf16.mxu0 0
        %3144 = vmatpush1.bf16.msra.mxu0 %v3141
        %3145 = vmatprep.subr.bf16.mxu0 0
        %3146 = vmatpush1.bf16.msra.mxu0 0
        %3147 = vmatprep.subr.bf16.mxu0 0
        %3148 = vmatpush1.bf16.msra.mxu0 0
        %3149 = vmatprep.subr.bf16.mxu0 0
        %3150 = vmatpush1.bf16.msra.mxu0 0
        %3151 = vmatprep.subr.bf16.mxu0 0
        %3152 = vmatpush1.bf16.msra.mxu0 0
        %3153 = vmatprep.subr.bf16.mxu0 0
        %3154 = vmatpush1.bf16.msra.mxu0 0
        %3155 = vmatprep.subr.bf16.mxu0 0
        %3156 = vmatpush1.bf16.msra.mxu0 0
        %3157 = vmatprep.subr.bf16.mxu0 0
        %3158 = vmatpush1.bf16.msra.mxu0 0
        %3159 = vmatprep.subr.bf16.mxu0 0
        %3160 = vmatpush1.bf16.msra.mxu0 0
        %3161 = vmatprep.subr.bf16.mxu0 0
        %3162 = vmatpush1.bf16.msra.mxu0 0
        %3163 = vmatprep.subr.bf16.mxu0 0
        %3164 = vmatpush1.bf16.msra.mxu0 0
        %3165 = vmatprep.subr.bf16.mxu0 0
        %3166 = vmatpush1.bf16.msra.mxu0 0
        %3167 = vmatprep.subr.bf16.mxu0 0
        %3168 = vmatpush1.bf16.msra.mxu0 0
        %3169 = vmatprep.subr.bf16.mxu0 0
        %3170 = vmatpush1.bf16.msra.mxu0 0
        %3171 = vmatprep.subr.bf16.mxu0 0
        %3172 = vmatpush1.bf16.msra.mxu0 0
        %3173 = vmatprep.subr.bf16.mxu0 0
        %3174 = vmatpush1.bf16.msra.mxu0 0
        %3175 = vmatprep.mubr.bf16.mxu0 0
        %3176 = vmatmul.mubr.bf16.gmra.mrb[0].mxu0 %v3093
        %v3177 = vpop.f32.mrb[0].mxu0
        %v3178 = vadd.f32 0.0, %v3177
        %v3179 = vpop.f32.mrb[0].mxu0
        %v3180 = vpop.f32.mrb[0].mxu0
        %v3181 = vadd.f32 0.0, %v3180
        %v3182 = vpop.f32.mrb[0].mxu0
        %3183 = vmatprep.mubr.bf16.mxu0 0
        %3184 = vmatmul.mubr.bf16.gmra.mrb[0].mxu0 %v3096
        %v3185 = vpop.f32.mrb[0].mxu0
        %v3186 = vadd.f32 0.0, %v3185
        %v3187 = vpop.f32.mrb[0].mxu0
        %v3188 = vpop.f32.mrb[0].mxu0
        %v3189 = vadd.f32 0.0, %v3188
        %v3190 = vpop.f32.mrb[0].mxu0
        %3191 = vmatprep.mubr.bf16.mxu0 0
        %3192 = vmatmul.mubr.bf16.gmra.mrb[0].mxu0 %v3099
        %v3193 = vpop.f32.mrb[0].mxu0
        %v3194 = vadd.f32 0.0, %v3193
        %v3195 = vpop.f32.mrb[0].mxu0
        %v3196 = vpop.f32.mrb[0].mxu0
        %v3197 = vadd.f32 0.0, %v3196
        %v3198 = vpop.f32.mrb[0].mxu0
        %3199 = vmatprep.mubr.bf16.mxu0 0
        %3200 = vmatmul.mubr.bf16.gmra.mrb[0].mxu0 %v3102
        %v3201 = vpop.f32.mrb[0].mxu0
        %v3202 = vadd.f32 0.0, %v3201
        %v3203 = vpop.f32.mrb[0].mxu0
        %v3204 = vpop.f32.mrb[0].mxu0
        %v3205 = vadd.f32 0.0, %v3204
        %v3206 = vpop.f32.mrb[0].mxu0
        %3207 = vmatprep.mubr.bf16.mxu0 0
        %3208 = vmatmul.mubr.bf16.gmra.mrb[0].mxu0 %v3105
        %v3209 = vpop.f32.mrb[0].mxu0
        %v3210 = vadd.f32 0.0, %v3209
        %v3211 = vpop.f32.mrb[0].mxu0
        %v3212 = vpop.f32.mrb[0].mxu0
        %v3213 = vadd.f32 0.0, %v3212
        %v3214 = vpop.f32.mrb[0].mxu0
        %3215 = vmatprep.mubr.bf16.mxu0 0
        %3216 = vmatmul.mubr.bf16.gmra.mrb[0].mxu0 %v3108
        %v3217 = vpop.f32.mrb[0].mxu0
        %v3218 = vadd.f32 0.0, %v3217
        %v3219 = vpop.f32.mrb[0].mxu0
        %v3220 = vpop.f32.mrb[0].mxu0
        %v3221 = vadd.f32 0.0, %v3220
        %v3222 = vpop.f32.mrb[0].mxu0
        %3223 = vmatprep.mubr.bf16.mxu0 0
        %3224 = vmatmul.mubr.bf16.gmra.mrb[0].mxu0 %v3111
        %v3225 = vpop.f32.mrb[0].mxu0
        %v3226 = vadd.f32 0.0, %v3225
        %v3227 = vpop.f32.mrb[0].mxu0
        %v3228 = vpop.f32.mrb[0].mxu0
        %v3229 = vadd.f32 0.0, %v3228
        %v3230 = vpop.f32.mrb[0].mxu0
        %3231 = vmatprep.mubr.bf16.mxu0 0
        %3232 = vmatmul.mubr.bf16.gmra.mrb[0].mxu0 %v3114
        %v3233 = vpop.f32.mrb[0].mxu0
        %v3234 = vadd.f32 0.0, %v3233
        %v3235 = vpop.f32.mrb[0].mxu0
        %v3236 = vpop.f32.mrb[0].mxu0
        %v3237 = vadd.f32 0.0, %v3236
        %v3238 = vpop.f32.mrb[0].mxu0
        %3239 = vmatprep.mubr.bf16.mxu0 0
        %3240 = vmatmul.mubr.bf16.gmra.mrb[0].mxu0 %v3117
        %v3241 = vpop.f32.mrb[0].mxu0
        %v3242 = vadd.f32 0.0, %v3241
        %v3243 = vpop.f32.mrb[0].mxu0
        %v3244 = vpop.f32.mrb[0].mxu0
        %v3245 = vadd.f32 0.0, %v3244
        %v3246 = vpop.f32.mrb[0].mxu0
        %3247 = vmatprep.mubr.bf16.mxu0 0
        %3248 = vmatmul.mubr.bf16.gmra.mrb[0].mxu0 %v3120
        %v3249 = vpop.f32.mrb[0].mxu0
        %v3250 = vadd.f32 0.0, %v3249
        %v3251 = vpop.f32.mrb[0].mxu0
        %v3252 = vpop.f32.mrb[0].mxu0
        %v3253 = vadd.f32 0.0, %v3252
        %v3254 = vpop.f32.mrb[0].mxu0
        %3255 = vmatprep.mubr.bf16.mxu0 0
        %3256 = vmatmul.mubr.bf16.gmra.mrb[0].mxu0 %v3123
        %v3257 = vpop.f32.mrb[0].mxu0
        %v3258 = vadd.f32 0.0, %v3257
        %v3259 = vpop.f32.mrb[0].mxu0
        %v3260 = vpop.f32.mrb[0].mxu0
        %v3261 = vadd.f32 0.0, %v3260
        %v3262 = vpop.f32.mrb[0].mxu0
        %3263 = vmatprep.mubr.bf16.mxu0 0
        %3264 = vmatmul.mubr.bf16.gmra.mrb[0].mxu0 %v3126
        %v3265 = vpop.f32.mrb[0].mxu0
        %v3266 = vadd.f32 0.0, %v3265
        %v3267 = vpop.f32.mrb[0].mxu0
        %v3268 = vpop.f32.mrb[0].mxu0
        %v3269 = vadd.f32 0.0, %v3268
        %v3270 = vpop.f32.mrb[0].mxu0
        %3271 = vmatprep.mubr.bf16.mxu0 0
        %3272 = vmatmul.mubr.bf16.gmra.mrb[0].mxu0 %v3129
        %v3273 = vpop.f32.mrb[0].mxu0
        %v3274 = vadd.f32 0.0, %v3273
        %v3275 = vpop.f32.mrb[0].mxu0
        %v3276 = vpop.f32.mrb[0].mxu0
        %v3277 = vadd.f32 0.0, %v3276
        %v3278 = vpop.f32.mrb[0].mxu0
        %3279 = vmatprep.mubr.bf16.mxu0 0
        %3280 = vmatmul.mubr.bf16.gmra.mrb[0].mxu0 %v3132
        %v3281 = vpop.f32.mrb[0].mxu0
        %v3282 = vadd.f32 0.0, %v3281
        %v3283 = vpop.f32.mrb[0].mxu0
        %v3284 = vpop.f32.mrb[0].mxu0
        %v3285 = vadd.f32 0.0, %v3284
        %v3286 = vpop.f32.mrb[0].mxu0
        %3287 = vmatprep.mubr.bf16.mxu0 0
        %3288 = vmatmul.mubr.bf16.gmra.mrb[0].mxu0 %v3135
        %v3289 = vpop.f32.mrb[0].mxu0
        %v3290 = vadd.f32 0.0, %v3289
        %v3291 = vpop.f32.mrb[0].mxu0
        %v3292 = vpop.f32.mrb[0].mxu0
        %v3293 = vadd.f32 0.0, %v3292
        %v3294 = vpop.f32.mrb[0].mxu0
        %3295 = vmatprep.mubr.bf16.mxu0 0
        %3296 = vmatmul.mubr.bf16.gmra.mrb[0].mxu0 %v3138
        %v3297 = vpop.f32.mrb[0].mxu0
        %v3298 = vadd.f32 0.0, %v3297
        %v3299 = vpop.f32.mrb[0].mxu0
        %v3300 = vpop.f32.mrb[0].mxu0
        %v3301 = vadd.f32 0.0, %v3300
        %v3302 = vpop.f32.mrb[0].mxu0
        %3303 = vdwg.mxu0
        %v3304 = vadd.f32 %v2989, %v3178
        %v3305 = vadd.f32 %v2990, %v3181
        %v3306 = vadd.f32 %v2991, %v3186
        %v3307 = vadd.f32 %v2992, %v3189
        %v3308 = vadd.f32 %v2993, %v3194
        %v3309 = vadd.f32 %v2994, %v3197
        %v3310 = vadd.f32 %v2995, %v3202
        %v3311 = vadd.f32 %v2996, %v3205
        %v3312 = vadd.f32 %v2997, %v3210
        %v3313 = vadd.f32 %v2998, %v3213
        %v3314 = vadd.f32 %v2999, %v3218
        %v3315 = vadd.f32 %v3000, %v3221
        %v3316 = vadd.f32 %v3001, %v3226
        %v3317 = vadd.f32 %v3002, %v3229
        %v3318 = vadd.f32 %v3003, %v3234
        %v3319 = vadd.f32 %v3004, %v3237
        %v3320 = vadd.f32 %v3005, %v3242
        %v3321 = vadd.f32 %v3006, %v3245
        %v3322 = vadd.f32 %v3007, %v3250
        %v3323 = vadd.f32 %v3008, %v3253
        %v3324 = vadd.f32 %v3009, %v3258
        %v3325 = vadd.f32 %v3010, %v3261
        %v3326 = vadd.f32 %v3011, %v3266
        %v3327 = vadd.f32 %v3012, %v3269
        %v3328 = vadd.f32 %v3013, %v3274
        %v3329 = vadd.f32 %v3014, %v3277
        %v3330 = vadd.f32 %v3015, %v3282
        %v3331 = vadd.f32 %v3016, %v3285
        %v3332 = vadd.f32 %v3017, %v3290
        %v3333 = vadd.f32 %v3018, %v3293
        %v3334 = vadd.f32 %v3019, %v3298
        %v3335 = vadd.f32 %v3020, %v3301
        %v3336 = vld [vmem:[#allocation2 + $0x128] sm:$0xc0]
        %v3337 = vld [vmem:[#allocation2 + $0x130] sm:$0xff]
        %v3338 = vld [vmem:[#allocation2 + $0x138] sm:$0xff]
        %v3339 = vld [vmem:[#allocation2 + $0x140] sm:$0xff]
        %v3340 = vld [vmem:[#allocation2 + $0x148] sm:$0xff]
        %v3341 = vld [vmem:[#allocation2 + $0x150] sm:$0xff]
        %v3342 = vld [vmem:[#allocation2 + $0x158] sm:$0xff]
        %v3343 = vld [vmem:[#allocation2 + $0x160] sm:$0xff]
        %v3344 = vld [vmem:[#allocation2 + $0x168] sm:$0xff]
        %v3345 = vld [vmem:[#allocation2 + $0x170] sm:$0xff]
        %v3346 = vld [vmem:[#allocation2 + $0x178] sm:$0xff]
        %v3347 = vld [vmem:[#allocation2 + $0x180] sm:$0xff]
        %v3348 = vld [vmem:[#allocation2 + $0x188] sm:$0xff]
        %v3349 = vld [vmem:[#allocation2 + $0x190] sm:$0xff]
        %v3350 = vld [vmem:[#allocation2 + $0x198] sm:$0xff]
        %v3351 = vld [vmem:[#allocation2 + $0x1a0] sm:$0xff]
        %v3352 = vld [vmem:[#allocation2 + $0x1a8] sm:$0x3f]
        %v3353 = vmul.bf16 %v3336, %v2660
        %v3354 = vmul.bf16 %v3337, %v2662
        %v3355 = vmul.bf16 %v3338, %v2664
        %v3356 = vmul.bf16 %v3339, %v2666
        %v3357 = vmul.bf16 %v3340, %v2668
        %v3358 = vmul.bf16 %v3341, %v2670
        %v3359 = vmul.bf16 %v3342, %v2672
        %v3360 = vmul.bf16 %v3343, %v2674
        %v3361 = vmul.bf16 %v3344, %v2676
        %v3362 = vmul.bf16 %v3345, %v2678
        %v3363 = vmul.bf16 %v3346, %v2680
        %v3364 = vmul.bf16 %v3347, %v2682
        %v3365 = vmul.bf16 %v3348, %v2684
        %v3366 = vmul.bf16 %v3349, %v2686
        %v3367 = vmul.bf16 %v3350, %v2688
        %v3368 = vmul.bf16 %v3351, %v2690
        %v3369 = vmul.bf16 %v3352, %v2689
        %s3370 = scalar_lea.vmem %s3, 16
        %v3371 = vld [vmem:[%s3370] sm:$0xf]
        %v3389 = vrot.slane %v3353, 6
        %v3390 = vrot.slane %v3354, 6
        %v3391 = vsel %vm1570, %v3389, %v3390
        %v3392 = vrot.slane %v3355, 6
        %v3393 = vsel %vm1570, %v3390, %v3392
        %v3394 = vrot.slane %v3356, 6
        %v3395 = vsel %vm1570, %v3392, %v3394
        %v3396 = vrot.slane %v3357, 6
        %v3397 = vsel %vm1570, %v3394, %v3396
        %v3398 = vrot.slane %v3358, 6
        %v3399 = vsel %vm1570, %v3396, %v3398
        %v3400 = vrot.slane %v3359, 6
        %v3401 = vsel %vm1570, %v3398, %v3400
        %v3402 = vrot.slane %v3360, 6
        %v3403 = vsel %vm1570, %v3400, %v3402
        %v3404 = vrot.slane %v3361, 6
        %v3405 = vsel %vm1570, %v3402, %v3404
        %v3406 = vrot.slane %v3362, 6
        %v3407 = vsel %vm1570, %v3404, %v3406
        %v3408 = vrot.slane %v3363, 6
        %v3409 = vsel %vm1570, %v3406, %v3408
        %v3410 = vrot.slane %v3364, 6
        %v3411 = vsel %vm1570, %v3408, %v3410
        %v3412 = vrot.slane %v3365, 6
        %v3413 = vsel %vm1570, %v3410, %v3412
        %v3414 = vrot.slane %v3366, 6
        %v3415 = vsel %vm1570, %v3412, %v3414
        %v3416 = vrot.slane %v3367, 6
        %v3417 = vsel %vm1570, %v3414, %v3416
        %v3418 = vrot.slane %v3368, 6
        %v3419 = vsel %vm1570, %v3416, %v3418
        %v3420 = vrot.slane %v3369, 6
        %v3421 = vsel %vm1570, %v3418, %v3420
        %v3423 = vsel %vm641, %v3391, 0
        %v3426 = vsel %vm641, %v3393, 0
        %v3429 = vsel %vm641, %v3395, 0
        %v3432 = vsel %vm641, %v3397, 0
        %v3435 = vsel %vm641, %v3399, 0
        %v3438 = vsel %vm641, %v3401, 0
        %v3441 = vsel %vm641, %v3403, 0
        %v3444 = vsel %vm641, %v3405, 0
        %v3447 = vsel %vm641, %v3407, 0
        %v3450 = vsel %vm641, %v3409, 0
        %v3453 = vsel %vm641, %v3411, 0
        %v3456 = vsel %vm641, %v3413, 0
        %v3459 = vsel %vm641, %v3415, 0
        %v3462 = vsel %vm641, %v3417, 0
        %v3465 = vsel %vm641, %v3419, 0
        %v3468 = vsel %vm641, %v3421, 0
        %v3471 = vsel %vm690, %v3371, 0
        %3473 = vmatprep.subr.bf16.mxu0 0
        %3474 = vmatpush1.bf16.msra.mxu0 %v3471
        %3475 = vmatprep.subr.bf16.mxu0 0
        %3476 = vmatpush1.bf16.msra.mxu0 0
        %3477 = vmatprep.subr.bf16.mxu0 0
        %3478 = vmatpush1.bf16.msra.mxu0 0
        %3479 = vmatprep.subr.bf16.mxu0 0
        %3480 = vmatpush1.bf16.msra.mxu0 0
        %3481 = vmatprep.subr.bf16.mxu0 0
        %3482 = vmatpush1.bf16.msra.mxu0 0
        %3483 = vmatprep.subr.bf16.mxu0 0
        %3484 = vmatpush1.bf16.msra.mxu0 0
        %3485 = vmatprep.subr.bf16.mxu0 0
        %3486 = vmatpush1.bf16.msra.mxu0 0
        %3487 = vmatprep.subr.bf16.mxu0 0
        %3488 = vmatpush1.bf16.msra.mxu0 0
        %3489 = vmatprep.subr.bf16.mxu0 0
        %3490 = vmatpush1.bf16.msra.mxu0 0
        %3491 = vmatprep.subr.bf16.mxu0 0
        %3492 = vmatpush1.bf16.msra.mxu0 0
        %3493 = vmatprep.subr.bf16.mxu0 0
        %3494 = vmatpush1.bf16.msra.mxu0 0
        %3495 = vmatprep.subr.bf16.mxu0 0
        %3496 = vmatpush1.bf16.msra.mxu0 0
        %3497 = vmatprep.subr.bf16.mxu0 0
        %3498 = vmatpush1.bf16.msra.mxu0 0
        %3499 = vmatprep.subr.bf16.mxu0 0
        %3500 = vmatpush1.bf16.msra.mxu0 0
        %3501 = vmatprep.subr.bf16.mxu0 0
        %3502 = vmatpush1.bf16.msra.mxu0 0
        %3503 = vmatprep.subr.bf16.mxu0 0
        %3504 = vmatpush1.bf16.msra.mxu0 0
        %3505 = vmatprep.mubr.bf16.mxu0 0
        %3506 = vmatmul.mubr.bf16.gmra.mrb[0].mxu0 %v3423
        %v3507 = vpop.f32.mrb[0].mxu0
        %v3508 = vadd.f32 0.0, %v3507
        %v3509 = vpop.f32.mrb[0].mxu0
        %v3510 = vpop.f32.mrb[0].mxu0
        %v3511 = vadd.f32 0.0, %v3510
        %v3512 = vpop.f32.mrb[0].mxu0
        %3513 = vmatprep.mubr.bf16.mxu0 0
        %3514 = vmatmul.mubr.bf16.gmra.mrb[0].mxu0 %v3426
        %v3515 = vpop.f32.mrb[0].mxu0
        %v3516 = vadd.f32 0.0, %v3515
        %v3517 = vpop.f32.mrb[0].mxu0
        %v3518 = vpop.f32.mrb[0].mxu0
        %v3519 = vadd.f32 0.0, %v3518
        %v3520 = vpop.f32.mrb[0].mxu0
        %3521 = vmatprep.mubr.bf16.mxu0 0
        %3522 = vmatmul.mubr.bf16.gmra.mrb[0].mxu0 %v3429
        %v3523 = vpop.f32.mrb[0].mxu0
        %v3524 = vadd.f32 0.0, %v3523
        %v3525 = vpop.f32.mrb[0].mxu0
        %v3526 = vpop.f32.mrb[0].mxu0
        %v3527 = vadd.f32 0.0, %v3526
        %v3528 = vpop.f32.mrb[0].mxu0
        %3529 = vmatprep.mubr.bf16.mxu0 0
        %3530 = vmatmul.mubr.bf16.gmra.mrb[0].mxu0 %v3432
        %v3531 = vpop.f32.mrb[0].mxu0
        %v3532 = vadd.f32 0.0, %v3531
        %v3533 = vpop.f32.mrb[0].mxu0
        %v3534 = vpop.f32.mrb[0].mxu0
        %v3535 = vadd.f32 0.0, %v3534
        %v3536 = vpop.f32.mrb[0].mxu0
        %3537 = vmatprep.mubr.bf16.mxu0 0
        %3538 = vmatmul.mubr.bf16.gmra.mrb[0].mxu0 %v3435
        %v3539 = vpop.f32.mrb[0].mxu0
        %v3540 = vadd.f32 0.0, %v3539
        %v3541 = vpop.f32.mrb[0].mxu0
        %v3542 = vpop.f32.mrb[0].mxu0
        %v3543 = vadd.f32 0.0, %v3542
        %v3544 = vpop.f32.mrb[0].mxu0
        %3545 = vmatprep.mubr.bf16.mxu0 0
        %3546 = vmatmul.mubr.bf16.gmra.mrb[0].mxu0 %v3438
        %v3547 = vpop.f32.mrb[0].mxu0
        %v3548 = vadd.f32 0.0, %v3547
        %v3549 = vpop.f32.mrb[0].mxu0
        %v3550 = vpop.f32.mrb[0].mxu0
        %v3551 = vadd.f32 0.0, %v3550
        %v3552 = vpop.f32.mrb[0].mxu0
        %3553 = vmatprep.mubr.bf16.mxu0 0
        %3554 = vmatmul.mubr.bf16.gmra.mrb[0].mxu0 %v3441
        %v3555 = vpop.f32.mrb[0].mxu0
        %v3556 = vadd.f32 0.0, %v3555
        %v3557 = vpop.f32.mrb[0].mxu0
        %v3558 = vpop.f32.mrb[0].mxu0
        %v3559 = vadd.f32 0.0, %v3558
        %v3560 = vpop.f32.mrb[0].mxu0
        %3561 = vmatprep.mubr.bf16.mxu0 0
        %3562 = vmatmul.mubr.bf16.gmra.mrb[0].mxu0 %v3444
        %v3563 = vpop.f32.mrb[0].mxu0
        %v3564 = vadd.f32 0.0, %v3563
        %v3565 = vpop.f32.mrb[0].mxu0
        %v3566 = vpop.f32.mrb[0].mxu0
        %v3567 = vadd.f32 0.0, %v3566
        %v3568 = vpop.f32.mrb[0].mxu0
        %3569 = vmatprep.mubr.bf16.mxu0 0
        %3570 = vmatmul.mubr.bf16.gmra.mrb[0].mxu0 %v3447
        %v3571 = vpop.f32.mrb[0].mxu0
        %v3572 = vadd.f32 0.0, %v3571
        %v3573 = vpop.f32.mrb[0].mxu0
        %v3574 = vpop.f32.mrb[0].mxu0
        %v3575 = vadd.f32 0.0, %v3574
        %v3576 = vpop.f32.mrb[0].mxu0
        %3577 = vmatprep.mubr.bf16.mxu0 0
        %3578 = vmatmul.mubr.bf16.gmra.mrb[0].mxu0 %v3450
        %v3579 = vpop.f32.mrb[0].mxu0
        %v3580 = vadd.f32 0.0, %v3579
        %v3581 = vpop.f32.mrb[0].mxu0
        %v3582 = vpop.f32.mrb[0].mxu0
        %v3583 = vadd.f32 0.0, %v3582
        %v3584 = vpop.f32.mrb[0].mxu0
        %3585 = vmatprep.mubr.bf16.mxu0 0
        %3586 = vmatmul.mubr.bf16.gmra.mrb[0].mxu0 %v3453
        %v3587 = vpop.f32.mrb[0].mxu0
        %v3588 = vadd.f32 0.0, %v3587
        %v3589 = vpop.f32.mrb[0].mxu0
        %v3590 = vpop.f32.mrb[0].mxu0
        %v3591 = vadd.f32 0.0, %v3590
        %v3592 = vpop.f32.mrb[0].mxu0
        %3593 = vmatprep.mubr.bf16.mxu0 0
        %3594 = vmatmul.mubr.bf16.gmra.mrb[0].mxu0 %v3456
        %v3595 = vpop.f32.mrb[0].mxu0
        %v3596 = vadd.f32 0.0, %v3595
        %v3597 = vpop.f32.mrb[0].mxu0
        %v3598 = vpop.f32.mrb[0].mxu0
        %v3599 = vadd.f32 0.0, %v3598
        %v3600 = vpop.f32.mrb[0].mxu0
        %3601 = vmatprep.mubr.bf16.mxu0 0
        %3602 = vmatmul.mubr.bf16.gmra.mrb[0].mxu0 %v3459
        %v3603 = vpop.f32.mrb[0].mxu0
        %v3604 = vadd.f32 0.0, %v3603
        %v3605 = vpop.f32.mrb[0].mxu0
        %v3606 = vpop.f32.mrb[0].mxu0
        %v3607 = vadd.f32 0.0, %v3606
        %v3608 = vpop.f32.mrb[0].mxu0
        %3609 = vmatprep.mubr.bf16.mxu0 0
        %3610 = vmatmul.mubr.bf16.gmra.mrb[0].mxu0 %v3462
        %v3611 = vpop.f32.mrb[0].mxu0
        %v3612 = vadd.f32 0.0, %v3611
        %v3613 = vpop.f32.mrb[0].mxu0
        %v3614 = vpop.f32.mrb[0].mxu0
        %v3615 = vadd.f32 0.0, %v3614
        %v3616 = vpop.f32.mrb[0].mxu0
        %3617 = vmatprep.mubr.bf16.mxu0 0
        %3618 = vmatmul.mubr.bf16.gmra.mrb[0].mxu0 %v3465
        %v3619 = vpop.f32.mrb[0].mxu0
        %v3620 = vadd.f32 0.0, %v3619
        %v3621 = vpop.f32.mrb[0].mxu0
        %v3622 = vpop.f32.mrb[0].mxu0
        %v3623 = vadd.f32 0.0, %v3622
        %v3624 = vpop.f32.mrb[0].mxu0
        %3625 = vmatprep.mubr.bf16.mxu0 0
        %3626 = vmatmul.mubr.bf16.gmra.mrb[0].mxu0 %v3468
        %v3627 = vpop.f32.mrb[0].mxu0
        %v3628 = vadd.f32 0.0, %v3627
        %v3629 = vpop.f32.mrb[0].mxu0
        %v3630 = vpop.f32.mrb[0].mxu0
        %v3631 = vadd.f32 0.0, %v3630
        %v3632 = vpop.f32.mrb[0].mxu0
        %3633 = vdwg.mxu0
        %v3634 = vadd.f32 %v3304, %v3508
        %v3635 = vadd.f32 %v3305, %v3511
        %v3636 = vadd.f32 %v3306, %v3516
        %v3637 = vadd.f32 %v3307, %v3519
        %v3638 = vadd.f32 %v3308, %v3524
        %v3639 = vadd.f32 %v3309, %v3527
        %v3640 = vadd.f32 %v3310, %v3532
        %v3641 = vadd.f32 %v3311, %v3535
        %v3642 = vadd.f32 %v3312, %v3540
        %v3643 = vadd.f32 %v3313, %v3543
        %v3644 = vadd.f32 %v3314, %v3548
        %v3645 = vadd.f32 %v3315, %v3551
        %v3646 = vadd.f32 %v3316, %v3556
        %v3647 = vadd.f32 %v3317, %v3559
        %v3648 = vadd.f32 %v3318, %v3564
        %v3649 = vadd.f32 %v3319, %v3567
        %v3650 = vadd.f32 %v3320, %v3572
        %v3651 = vadd.f32 %v3321, %v3575
        %v3652 = vadd.f32 %v3322, %v3580
        %v3653 = vadd.f32 %v3323, %v3583
        %v3654 = vadd.f32 %v3324, %v3588
        %v3655 = vadd.f32 %v3325, %v3591
        %v3656 = vadd.f32 %v3326, %v3596
        %v3657 = vadd.f32 %v3327, %v3599
        %v3658 = vadd.f32 %v3328, %v3604
        %v3659 = vadd.f32 %v3329, %v3607
        %v3660 = vadd.f32 %v3330, %v3612
        %v3661 = vadd.f32 %v3331, %v3615
        %v3662 = vadd.f32 %v3332, %v3620
        %v3663 = vadd.f32 %v3333, %v3623
        %v3664 = vadd.f32 %v3334, %v3628
        %v3665 = vadd.f32 %v3335, %v3631
        %v3666 = vld [vmem:[#allocation2 + $0x180] sm:$0xfc]
        %v3667 = vld [vmem:[#allocation2 + $0x188] sm:$0xff]
        %v3668 = vld [vmem:[#allocation2 + $0x190] sm:$0xff]
        %v3669 = vld [vmem:[#allocation2 + $0x198] sm:$0xff]
        %v3670 = vld [vmem:[#allocation2 + $0x1a0] sm:$0xff]
        %v3671 = vld [vmem:[#allocation2 + $0x1a8] sm:$0xff]
        %v3672 = vld [vmem:[#allocation2 + $0x1b0] sm:$0xff]
        %v3673 = vld [vmem:[#allocation2 + $0x1b8] sm:$0xff]
        %v3674 = vld [vmem:[#allocation2 + $0x1c0] sm:$0xff]
        %v3675 = vld [vmem:[#allocation2 + $0x1c8] sm:$0xff]
        %v3676 = vld [vmem:[#allocation2 + $0x1d0] sm:$0xff]
        %v3677 = vld [vmem:[#allocation2 + $0x1d8] sm:$0xff]
        %v3678 = vld [vmem:[#allocation2 + $0x1e0] sm:$0xff]
        %v3679 = vld [vmem:[#allocation2 + $0x1e8] sm:$0xff]
        %v3680 = vld [vmem:[#allocation2 + $0x1f0] sm:$0xff]
        %v3681 = vld [vmem:[#allocation2 + $0x1f8] sm:$0xff]
        %v3682 = vld [vmem:[#allocation2 + $0x200] sm:$0x3]
        %v3683 = vmul.bf16 %v3666, %v1571
        %v3684 = vmul.bf16 %v3667, %v1573
        %v3685 = vmul.bf16 %v3668, %v1575
        %v3686 = vmul.bf16 %v3669, %v1577
        %v3687 = vmul.bf16 %v3670, %v1579
        %v3688 = vmul.bf16 %v3671, %v1581
        %v3689 = vmul.bf16 %v3672, %v1583
        %v3690 = vmul.bf16 %v3673, %v1585
        %v3691 = vmul.bf16 %v3674, %v1587
        %v3692 = vmul.bf16 %v3675, %v1589
        %v3693 = vmul.bf16 %v3676, %v1591
        %v3694 = vmul.bf16 %v3677, %v1593
        %v3695 = vmul.bf16 %v3678, %v1595
        %v3696 = vmul.bf16 %v3679, %v1597
        %v3697 = vmul.bf16 %v3680, %v1599
        %v3698 = vmul.bf16 %v3681, %v1601
        %v3699 = vmul.bf16 %v3682, %v1600
        %s3700 = scalar_lea.vmem %s3, 20
        %v3701 = vld [vmem:[%s3700] sm:$0xf]
        %v3719 = vrot.slane %v3683, 2
        %v3720 = vrot.slane %v3684, 2
        %v3721 = vsel %vm1654, %v3719, %v3720
        %v3722 = vrot.slane %v3685, 2
        %v3723 = vsel %vm1654, %v3720, %v3722
        %v3724 = vrot.slane %v3686, 2
        %v3725 = vsel %vm1654, %v3722, %v3724
        %v3726 = vrot.slane %v3687, 2
        %v3727 = vsel %vm1654, %v3724, %v3726
        %v3728 = vrot.slane %v3688, 2
        %v3729 = vsel %vm1654, %v3726, %v3728
        %v3730 = vrot.slane %v3689, 2
        %v3731 = vsel %vm1654, %v3728, %v3730
        %v3732 = vrot.slane %v3690, 2
        %v3733 = vsel %vm1654, %v3730, %v3732
        %v3734 = vrot.slane %v3691, 2
        %v3735 = vsel %vm1654, %v3732, %v3734
        %v3736 = vrot.slane %v3692, 2
        %v3737 = vsel %vm1654, %v3734, %v3736
        %v3738 = vrot.slane %v3693, 2
        %v3739 = vsel %vm1654, %v3736, %v3738
        %v3740 = vrot.slane %v3694, 2
        %v3741 = vsel %vm1654, %v3738, %v3740
        %v3742 = vrot.slane %v3695, 2
        %v3743 = vsel %vm1654, %v3740, %v3742
        %v3744 = vrot.slane %v3696, 2
        %v3745 = vsel %vm1654, %v3742, %v3744
        %v3746 = vrot.slane %v3697, 2
        %v3747 = vsel %vm1654, %v3744, %v3746
        %v3748 = vrot.slane %v3698, 2
        %v3749 = vsel %vm1654, %v3746, %v3748
        %v3750 = vrot.slane %v3699, 2
        %v3751 = vsel %vm1654, %v3748, %v3750
        %v3753 = vsel %vm641, %v3721, 0
        %v3756 = vsel %vm641, %v3723, 0
        %v3759 = vsel %vm641, %v3725, 0
        %v3762 = vsel %vm641, %v3727, 0
        %v3765 = vsel %vm641, %v3729, 0
        %v3768 = vsel %vm641, %v3731, 0
        %v3771 = vsel %vm641, %v3733, 0
        %v3774 = vsel %vm641, %v3735, 0
        %v3777 = vsel %vm641, %v3737, 0
        %v3780 = vsel %vm641, %v3739, 0
        %v3783 = vsel %vm641, %v3741, 0
        %v3786 = vsel %vm641, %v3743, 0
        %v3789 = vsel %vm641, %v3745, 0
        %v3792 = vsel %vm641, %v3747, 0
        %v3795 = vsel %vm641, %v3749, 0
        %v3798 = vsel %vm641, %v3751, 0
        %v3801 = vsel %vm690, %v3701, 0
        %3803 = vmatprep.subr.bf16.mxu0 0
        %3804 = vmatpush1.bf16.msra.mxu0 %v3801
        %3805 = vmatprep.subr.bf16.mxu0 0
        %3806 = vmatpush1.bf16.msra.mxu0 0
        %3807 = vmatprep.subr.bf16.mxu0 0
        %3808 = vmatpush1.bf16.msra.mxu0 0
        %3809 = vmatprep.subr.bf16.mxu0 0
        %3810 = vmatpush1.bf16.msra.mxu0 0
        %3811 = vmatprep.subr.bf16.mxu0 0
        %3812 = vmatpush1.bf16.msra.mxu0 0
        %3813 = vmatprep.subr.bf16.mxu0 0
        %3814 = vmatpush1.bf16.msra.mxu0 0
        %3815 = vmatprep.subr.bf16.mxu0 0
        %3816 = vmatpush1.bf16.msra.mxu0 0
        %3817 = vmatprep.subr.bf16.mxu0 0
        %3818 = vmatpush1.bf16.msra.mxu0 0
        %3819 = vmatprep.subr.bf16.mxu0 0
        %3820 = vmatpush1.bf16.msra.mxu0 0
        %3821 = vmatprep.subr.bf16.mxu0 0
        %3822 = vmatpush1.bf16.msra.mxu0 0
        %3823 = vmatprep.subr.bf16.mxu0 0
        %3824 = vmatpush1.bf16.msra.mxu0 0
        %3825 = vmatprep.subr.bf16.mxu0 0
        %3826 = vmatpush1.bf16.msra.mxu0 0
        %3827 = vmatprep.subr.bf16.mxu0 0
        %3828 = vmatpush1.bf16.msra.mxu0 0
        %3829 = vmatprep.subr.bf16.mxu0 0
        %3830 = vmatpush1.bf16.msra.mxu0 0
        %3831 = vmatprep.subr.bf16.mxu0 0
        %3832 = vmatpush1.bf16.msra.mxu0 0
        %3833 = vmatprep.subr.bf16.mxu0 0
        %3834 = vmatpush1.bf16.msra.mxu0 0
        %3835 = vmatprep.mubr.bf16.mxu0 0
        %3836 = vmatmul.mubr.bf16.gmra.mrb[0].mxu0 %v3753
        %v3837 = vpop.f32.mrb[0].mxu0
        %v3838 = vadd.f32 0.0, %v3837
        %v3839 = vpop.f32.mrb[0].mxu0
        %v3840 = vpop.f32.mrb[0].mxu0
        %v3841 = vadd.f32 0.0, %v3840
        %v3842 = vpop.f32.mrb[0].mxu0
        %3843 = vmatprep.mubr.bf16.mxu0 0
        %3844 = vmatmul.mubr.bf16.gmra.mrb[0].mxu0 %v3756
        %v3845 = vpop.f32.mrb[0].mxu0
        %v3846 = vadd.f32 0.0, %v3845
        %v3847 = vpop.f32.mrb[0].mxu0
        %v3848 = vpop.f32.mrb[0].mxu0
        %v3849 = vadd.f32 0.0, %v3848
        %v3850 = vpop.f32.mrb[0].mxu0
        %3851 = vmatprep.mubr.bf16.mxu0 0
        %3852 = vmatmul.mubr.bf16.gmra.mrb[0].mxu0 %v3759
        %v3853 = vpop.f32.mrb[0].mxu0
        %v3854 = vadd.f32 0.0, %v3853
        %v3855 = vpop.f32.mrb[0].mxu0
        %v3856 = vpop.f32.mrb[0].mxu0
        %v3857 = vadd.f32 0.0, %v3856
        %v3858 = vpop.f32.mrb[0].mxu0
        %3859 = vmatprep.mubr.bf16.mxu0 0
        %3860 = vmatmul.mubr.bf16.gmra.mrb[0].mxu0 %v3762
        %v3861 = vpop.f32.mrb[0].mxu0
        %v3862 = vadd.f32 0.0, %v3861
        %v3863 = vpop.f32.mrb[0].mxu0
        %v3864 = vpop.f32.mrb[0].mxu0
        %v3865 = vadd.f32 0.0, %v3864
        %v3866 = vpop.f32.mrb[0].mxu0
        %3867 = vmatprep.mubr.bf16.mxu0 0
        %3868 = vmatmul.mubr.bf16.gmra.mrb[0].mxu0 %v3765
        %v3869 = vpop.f32.mrb[0].mxu0
        %v3870 = vadd.f32 0.0, %v3869
        %v3871 = vpop.f32.mrb[0].mxu0
        %v3872 = vpop.f32.mrb[0].mxu0
        %v3873 = vadd.f32 0.0, %v3872
        %v3874 = vpop.f32.mrb[0].mxu0
        %3875 = vmatprep.mubr.bf16.mxu0 0
        %3876 = vmatmul.mubr.bf16.gmra.mrb[0].mxu0 %v3768
        %v3877 = vpop.f32.mrb[0].mxu0
        %v3878 = vadd.f32 0.0, %v3877
        %v3879 = vpop.f32.mrb[0].mxu0
        %v3880 = vpop.f32.mrb[0].mxu0
        %v3881 = vadd.f32 0.0, %v3880
        %v3882 = vpop.f32.mrb[0].mxu0
        %3883 = vmatprep.mubr.bf16.mxu0 0
        %3884 = vmatmul.mubr.bf16.gmra.mrb[0].mxu0 %v3771
        %v3885 = vpop.f32.mrb[0].mxu0
        %v3886 = vadd.f32 0.0, %v3885
        %v3887 = vpop.f32.mrb[0].mxu0
        %v3888 = vpop.f32.mrb[0].mxu0
        %v3889 = vadd.f32 0.0, %v3888
        %v3890 = vpop.f32.mrb[0].mxu0
        %3891 = vmatprep.mubr.bf16.mxu0 0
        %3892 = vmatmul.mubr.bf16.gmra.mrb[0].mxu0 %v3774
        %v3893 = vpop.f32.mrb[0].mxu0
        %v3894 = vadd.f32 0.0, %v3893
        %v3895 = vpop.f32.mrb[0].mxu0
        %v3896 = vpop.f32.mrb[0].mxu0
        %v3897 = vadd.f32 0.0, %v3896
        %v3898 = vpop.f32.mrb[0].mxu0
        %3899 = vmatprep.mubr.bf16.mxu0 0
        %3900 = vmatmul.mubr.bf16.gmra.mrb[0].mxu0 %v3777
        %v3901 = vpop.f32.mrb[0].mxu0
        %v3902 = vadd.f32 0.0, %v3901
        %v3903 = vpop.f32.mrb[0].mxu0
        %v3904 = vpop.f32.mrb[0].mxu0
        %v3905 = vadd.f32 0.0, %v3904
        %v3906 = vpop.f32.mrb[0].mxu0
        %3907 = vmatprep.mubr.bf16.mxu0 0
        %3908 = vmatmul.mubr.bf16.gmra.mrb[0].mxu0 %v3780
        %v3909 = vpop.f32.mrb[0].mxu0
        %v3910 = vadd.f32 0.0, %v3909
        %v3911 = vpop.f32.mrb[0].mxu0
        %v3912 = vpop.f32.mrb[0].mxu0
        %v3913 = vadd.f32 0.0, %v3912
        %v3914 = vpop.f32.mrb[0].mxu0
        %3915 = vmatprep.mubr.bf16.mxu0 0
        %3916 = vmatmul.mubr.bf16.gmra.mrb[0].mxu0 %v3783
        %v3917 = vpop.f32.mrb[0].mxu0
        %v3918 = vadd.f32 0.0, %v3917
        %v3919 = vpop.f32.mrb[0].mxu0
        %v3920 = vpop.f32.mrb[0].mxu0
        %v3921 = vadd.f32 0.0, %v3920
        %v3922 = vpop.f32.mrb[0].mxu0
        %3923 = vmatprep.mubr.bf16.mxu0 0
        %3924 = vmatmul.mubr.bf16.gmra.mrb[0].mxu0 %v3786
        %v3925 = vpop.f32.mrb[0].mxu0
        %v3926 = vadd.f32 0.0, %v3925
        %v3927 = vpop.f32.mrb[0].mxu0
        %v3928 = vpop.f32.mrb[0].mxu0
        %v3929 = vadd.f32 0.0, %v3928
        %v3930 = vpop.f32.mrb[0].mxu0
        %3931 = vmatprep.mubr.bf16.mxu0 0
        %3932 = vmatmul.mubr.bf16.gmra.mrb[0].mxu0 %v3789
        %v3933 = vpop.f32.mrb[0].mxu0
        %v3934 = vadd.f32 0.0, %v3933
        %v3935 = vpop.f32.mrb[0].mxu0
        %v3936 = vpop.f32.mrb[0].mxu0
        %v3937 = vadd.f32 0.0, %v3936
        %v3938 = vpop.f32.mrb[0].mxu0
        %3939 = vmatprep.mubr.bf16.mxu0 0
        %3940 = vmatmul.mubr.bf16.gmra.mrb[0].mxu0 %v3792
        %v3941 = vpop.f32.mrb[0].mxu0
        %v3942 = vadd.f32 0.0, %v3941
        %v3943 = vpop.f32.mrb[0].mxu0
        %v3944 = vpop.f32.mrb[0].mxu0
        %v3945 = vadd.f32 0.0, %v3944
        %v3946 = vpop.f32.mrb[0].mxu0
        %3947 = vmatprep.mubr.bf16.mxu0 0
        %3948 = vmatmul.mubr.bf16.gmra.mrb[0].mxu0 %v3795
        %v3949 = vpop.f32.mrb[0].mxu0
        %v3950 = vadd.f32 0.0, %v3949
        %v3951 = vpop.f32.mrb[0].mxu0
        %v3952 = vpop.f32.mrb[0].mxu0
        %v3953 = vadd.f32 0.0, %v3952
        %v3954 = vpop.f32.mrb[0].mxu0
        %3955 = vmatprep.mubr.bf16.mxu0 0
        %3956 = vmatmul.mubr.bf16.gmra.mrb[0].mxu0 %v3798
        %v3957 = vpop.f32.mrb[0].mxu0
        %v3958 = vadd.f32 0.0, %v3957
        %v3959 = vpop.f32.mrb[0].mxu0
        %v3960 = vpop.f32.mrb[0].mxu0
        %v3961 = vadd.f32 0.0, %v3960
        %v3962 = vpop.f32.mrb[0].mxu0
        %3963 = vdwg.mxu0
        %v3964 = vadd.f32 %v3634, %v3838
        %v3965 = vadd.f32 %v3635, %v3841
        %v3966 = vadd.f32 %v3636, %v3846
        %v3967 = vadd.f32 %v3637, %v3849
        %v3968 = vadd.f32 %v3638, %v3854
        %v3969 = vadd.f32 %v3639, %v3857
        %v3970 = vadd.f32 %v3640, %v3862
        %v3971 = vadd.f32 %v3641, %v3865
        %v3972 = vadd.f32 %v3642, %v3870
        %v3973 = vadd.f32 %v3643, %v3873
        %v3974 = vadd.f32 %v3644, %v3878
        %v3975 = vadd.f32 %v3645, %v3881
        %v3976 = vadd.f32 %v3646, %v3886
        %v3977 = vadd.f32 %v3647, %v3889
        %v3978 = vadd.f32 %v3648, %v3894
        %v3979 = vadd.f32 %v3649, %v3897
        %v3980 = vadd.f32 %v3650, %v3902
        %v3981 = vadd.f32 %v3651, %v3905
        %v3982 = vadd.f32 %v3652, %v3910
        %v3983 = vadd.f32 %v3653, %v3913
        %v3984 = vadd.f32 %v3654, %v3918
        %v3985 = vadd.f32 %v3655, %v3921
        %v3986 = vadd.f32 %v3656, %v3926
        %v3987 = vadd.f32 %v3657, %v3929
        %v3988 = vadd.f32 %v3658, %v3934
        %v3989 = vadd.f32 %v3659, %v3937
        %v3990 = vadd.f32 %v3660, %v3942
        %v3991 = vadd.f32 %v3661, %v3945
        %v3992 = vadd.f32 %v3662, %v3950
        %v3993 = vadd.f32 %v3663, %v3953
        %v3994 = vadd.f32 %v3664, %v3958
        %v3995 = vadd.f32 %v3665, %v3961
        %v3996 = vld [vmem:[#allocation2 + $0x200] sm:$0xff]
        %s3997 = scalar_lea.vmem %s3, 24
        %v3998 = vld [vmem:[%s3997] sm:$0xf]
        %v4000 = vsel %vm641, %v3667, 0
        %v4003 = vsel %vm641, %v3668, 0
        %v4006 = vsel %vm641, %v3669, 0
        %v4009 = vsel %vm641, %v3670, 0
        %v4012 = vsel %vm641, %v3671, 0
        %v4015 = vsel %vm641, %v3672, 0
        %v4018 = vsel %vm641, %v3673, 0
        %v4021 = vsel %vm641, %v3674, 0
        %v4024 = vsel %vm641, %v3675, 0
        %v4027 = vsel %vm641, %v3676, 0
        %v4030 = vsel %vm641, %v3677, 0
        %v4033 = vsel %vm641, %v3678, 0
        %v4036 = vsel %vm641, %v3679, 0
        %v4039 = vsel %vm641, %v3680, 0
        %v4042 = vsel %vm641, %v3681, 0
        %v4045 = vsel %vm641, %v3996, 0
        %v4048 = vsel %vm690, %v3998, 0
        %4050 = vmatprep.subr.bf16.mxu0 0
        %4051 = vmatpush1.bf16.msra.mxu0 %v4048
        %4052 = vmatprep.subr.bf16.mxu0 0
        %4053 = vmatpush1.bf16.msra.mxu0 0
        %4054 = vmatprep.subr.bf16.mxu0 0
        %4055 = vmatpush1.bf16.msra.mxu0 0
        %4056 = vmatprep.subr.bf16.mxu0 0
        %4057 = vmatpush1.bf16.msra.mxu0 0
        %4058 = vmatprep.subr.bf16.mxu0 0
        %4059 = vmatpush1.bf16.msra.mxu0 0
        %4060 = vmatprep.subr.bf16.mxu0 0
        %4061 = vmatpush1.bf16.msra.mxu0 0
        %4062 = vmatprep.subr.bf16.mxu0 0
        %4063 = vmatpush1.bf16.msra.mxu0 0
        %4064 = vmatprep.subr.bf16.mxu0 0
        %4065 = vmatpush1.bf16.msra.mxu0 0
        %4066 = vmatprep.subr.bf16.mxu0 0
        %4067 = vmatpush1.bf16.msra.mxu0 0
        %4068 = vmatprep.subr.bf16.mxu0 0
        %4069 = vmatpush1.bf16.msra.mxu0 0
        %4070 = vmatprep.subr.bf16.mxu0 0
        %4071 = vmatpush1.bf16.msra.mxu0 0
        %4072 = vmatprep.subr.bf16.mxu0 0
        %4073 = vmatpush1.bf16.msra.mxu0 0
        %4074 = vmatprep.subr.bf16.mxu0 0
        %4075 = vmatpush1.bf16.msra.mxu0 0
        %4076 = vmatprep.subr.bf16.mxu0 0
        %4077 = vmatpush1.bf16.msra.mxu0 0
        %4078 = vmatprep.subr.bf16.mxu0 0
        %4079 = vmatpush1.bf16.msra.mxu0 0
        %4080 = vmatprep.subr.bf16.mxu0 0
        %4081 = vmatpush1.bf16.msra.mxu0 0
        %4082 = vmatprep.mubr.bf16.mxu0 0
        %4083 = vmatmul.mubr.bf16.gmra.mrb[0].mxu0 %v4000
        %v4084 = vpop.f32.mrb[0].mxu0
        %v4085 = vadd.f32 0.0, %v4084
        %v4086 = vpop.f32.mrb[0].mxu0
        %v4087 = vpop.f32.mrb[0].mxu0
        %v4088 = vadd.f32 0.0, %v4087
        %v4089 = vpop.f32.mrb[0].mxu0
        %4090 = vmatprep.mubr.bf16.mxu0 0
        %4091 = vmatmul.mubr.bf16.gmra.mrb[0].mxu0 %v4003
        %v4092 = vpop.f32.mrb[0].mxu0
        %v4093 = vadd.f32 0.0, %v4092
        %v4094 = vpop.f32.mrb[0].mxu0
        %v4095 = vpop.f32.mrb[0].mxu0
        %v4096 = vadd.f32 0.0, %v4095
        %v4097 = vpop.f32.mrb[0].mxu0
        %4098 = vmatprep.mubr.bf16.mxu0 0
        %4099 = vmatmul.mubr.bf16.gmra.mrb[0].mxu0 %v4006
        %v4100 = vpop.f32.mrb[0].mxu0
        %v4101 = vadd.f32 0.0, %v4100
        %v4102 = vpop.f32.mrb[0].mxu0
        %v4103 = vpop.f32.mrb[0].mxu0
        %v4104 = vadd.f32 0.0, %v4103
        %v4105 = vpop.f32.mrb[0].mxu0
        %4106 = vmatprep.mubr.bf16.mxu0 0
        %4107 = vmatmul.mubr.bf16.gmra.mrb[0].mxu0 %v4009
        %v4108 = vpop.f32.mrb[0].mxu0
        %v4109 = vadd.f32 0.0, %v4108
        %v4110 = vpop.f32.mrb[0].mxu0
        %v4111 = vpop.f32.mrb[0].mxu0
        %v4112 = vadd.f32 0.0, %v4111
        %v4113 = vpop.f32.mrb[0].mxu0
        %4114 = vmatprep.mubr.bf16.mxu0 0
        %4115 = vmatmul.mubr.bf16.gmra.mrb[0].mxu0 %v4012
        %v4116 = vpop.f32.mrb[0].mxu0
        %v4117 = vadd.f32 0.0, %v4116
        %v4118 = vpop.f32.mrb[0].mxu0
        %v4119 = vpop.f32.mrb[0].mxu0
        %v4120 = vadd.f32 0.0, %v4119
        %v4121 = vpop.f32.mrb[0].mxu0
        %4122 = vmatprep.mubr.bf16.mxu0 0
        %4123 = vmatmul.mubr.bf16.gmra.mrb[0].mxu0 %v4015
        %v4124 = vpop.f32.mrb[0].mxu0
        %v4125 = vadd.f32 0.0, %v4124
        %v4126 = vpop.f32.mrb[0].mxu0
        %v4127 = vpop.f32.mrb[0].mxu0
        %v4128 = vadd.f32 0.0, %v4127
        %v4129 = vpop.f32.mrb[0].mxu0
        %4130 = vmatprep.mubr.bf16.mxu0 0
        %4131 = vmatmul.mubr.bf16.gmra.mrb[0].mxu0 %v4018
        %v4132 = vpop.f32.mrb[0].mxu0
        %v4133 = vadd.f32 0.0, %v4132
        %v4134 = vpop.f32.mrb[0].mxu0
        %v4135 = vpop.f32.mrb[0].mxu0
        %v4136 = vadd.f32 0.0, %v4135
        %v4137 = vpop.f32.mrb[0].mxu0
        %4138 = vmatprep.mubr.bf16.mxu0 0
        %4139 = vmatmul.mubr.bf16.gmra.mrb[0].mxu0 %v4021
        %v4140 = vpop.f32.mrb[0].mxu0
        %v4141 = vadd.f32 0.0, %v4140
        %v4142 = vpop.f32.mrb[0].mxu0
        %v4143 = vpop.f32.mrb[0].mxu0
        %v4144 = vadd.f32 0.0, %v4143
        %v4145 = vpop.f32.mrb[0].mxu0
        %4146 = vmatprep.mubr.bf16.mxu0 0
        %4147 = vmatmul.mubr.bf16.gmra.mrb[0].mxu0 %v4024
        %v4148 = vpop.f32.mrb[0].mxu0
        %v4149 = vadd.f32 0.0, %v4148
        %v4150 = vpop.f32.mrb[0].mxu0
        %v4151 = vpop.f32.mrb[0].mxu0
        %v4152 = vadd.f32 0.0, %v4151
        %v4153 = vpop.f32.mrb[0].mxu0
        %4154 = vmatprep.mubr.bf16.mxu0 0
        %4155 = vmatmul.mubr.bf16.gmra.mrb[0].mxu0 %v4027
        %v4156 = vpop.f32.mrb[0].mxu0
        %v4157 = vadd.f32 0.0, %v4156
        %v4158 = vpop.f32.mrb[0].mxu0
        %v4159 = vpop.f32.mrb[0].mxu0
        %v4160 = vadd.f32 0.0, %v4159
        %v4161 = vpop.f32.mrb[0].mxu0
        %4162 = vmatprep.mubr.bf16.mxu0 0
        %4163 = vmatmul.mubr.bf16.gmra.mrb[0].mxu0 %v4030
        %v4164 = vpop.f32.mrb[0].mxu0
        %v4165 = vadd.f32 0.0, %v4164
        %v4166 = vpop.f32.mrb[0].mxu0
        %v4167 = vpop.f32.mrb[0].mxu0
        %v4168 = vadd.f32 0.0, %v4167
        %v4169 = vpop.f32.mrb[0].mxu0
        %4170 = vmatprep.mubr.bf16.mxu0 0
        %4171 = vmatmul.mubr.bf16.gmra.mrb[0].mxu0 %v4033
        %v4172 = vpop.f32.mrb[0].mxu0
        %v4173 = vadd.f32 0.0, %v4172
        %v4174 = vpop.f32.mrb[0].mxu0
        %v4175 = vpop.f32.mrb[0].mxu0
        %v4176 = vadd.f32 0.0, %v4175
        %v4177 = vpop.f32.mrb[0].mxu0
        %4178 = vmatprep.mubr.bf16.mxu0 0
        %4179 = vmatmul.mubr.bf16.gmra.mrb[0].mxu0 %v4036
        %v4180 = vpop.f32.mrb[0].mxu0
        %v4181 = vadd.f32 0.0, %v4180
        %v4182 = vpop.f32.mrb[0].mxu0
        %v4183 = vpop.f32.mrb[0].mxu0
        %v4184 = vadd.f32 0.0, %v4183
        %v4185 = vpop.f32.mrb[0].mxu0
        %4186 = vmatprep.mubr.bf16.mxu0 0
        %4187 = vmatmul.mubr.bf16.gmra.mrb[0].mxu0 %v4039
        %v4188 = vpop.f32.mrb[0].mxu0
        %v4189 = vadd.f32 0.0, %v4188
        %v4190 = vpop.f32.mrb[0].mxu0
        %v4191 = vpop.f32.mrb[0].mxu0
        %v4192 = vadd.f32 0.0, %v4191
        %v4193 = vpop.f32.mrb[0].mxu0
        %4194 = vmatprep.mubr.bf16.mxu0 0
        %4195 = vmatmul.mubr.bf16.gmra.mrb[0].mxu0 %v4042
        %v4196 = vpop.f32.mrb[0].mxu0
        %v4197 = vadd.f32 0.0, %v4196
        %v4198 = vpop.f32.mrb[0].mxu0
        %v4199 = vpop.f32.mrb[0].mxu0
        %v4200 = vadd.f32 0.0, %v4199
        %v4201 = vpop.f32.mrb[0].mxu0
        %4202 = vmatprep.mubr.bf16.mxu0 0
        %4203 = vmatmul.mubr.bf16.gmra.mrb[0].mxu0 %v4045
        %v4204 = vpop.f32.mrb[0].mxu0
        %v4205 = vadd.f32 0.0, %v4204
        %v4206 = vpop.f32.mrb[0].mxu0
        %v4207 = vpop.f32.mrb[0].mxu0
        %v4208 = vadd.f32 0.0, %v4207
        %v4209 = vpop.f32.mrb[0].mxu0
        %4210 = vdwg.mxu0
        %v4211 = vadd.f32 %v3964, %v4085
        %v4212 = vadd.f32 %v3965, %v4088
        %v4213 = vadd.f32 %v3966, %v4093
        %v4214 = vadd.f32 %v3967, %v4096
        %v4215 = vadd.f32 %v3968, %v4101
        %v4216 = vadd.f32 %v3969, %v4104
        %v4217 = vadd.f32 %v3970, %v4109
        %v4218 = vadd.f32 %v3971, %v4112
        %v4219 = vadd.f32 %v3972, %v4117
        %v4220 = vadd.f32 %v3973, %v4120
        %v4221 = vadd.f32 %v3974, %v4125
        %v4222 = vadd.f32 %v3975, %v4128
        %v4223 = vadd.f32 %v3976, %v4133
        %v4224 = vadd.f32 %v3977, %v4136
        %v4225 = vadd.f32 %v3978, %v4141
        %v4226 = vadd.f32 %v3979, %v4144
        %v4227 = vadd.f32 %v3980, %v4149
        %v4228 = vadd.f32 %v3981, %v4152
        %v4229 = vadd.f32 %v3982, %v4157
        %v4230 = vadd.f32 %v3983, %v4160
        %v4231 = vadd.f32 %v3984, %v4165
        %v4232 = vadd.f32 %v3985, %v4168
        %v4233 = vadd.f32 %v3986, %v4173
        %v4234 = vadd.f32 %v3987, %v4176
        %v4235 = vadd.f32 %v3988, %v4181
        %v4236 = vadd.f32 %v3989, %v4184
        %v4237 = vadd.f32 %v3990, %v4189
        %v4238 = vadd.f32 %v3991, %v4192
        %v4239 = vadd.f32 %v3992, %v4197
        %v4240 = vadd.f32 %v3993, %v4200
        %v4241 = vadd.f32 %v3994, %v4205
        %v4242 = vadd.f32 %v3995, %v4208
        %v4243 = vld [vmem:[#allocation2 + $0x188] sm:$0xc0]
        %v4244 = vld [vmem:[#allocation2 + $0x190] sm:$0xff]
        %v4245 = vld [vmem:[#allocation2 + $0x198] sm:$0xff]
        %v4246 = vld [vmem:[#allocation2 + $0x1a0] sm:$0xff]
        %v4247 = vld [vmem:[#allocation2 + $0x1a8] sm:$0xff]
        %v4248 = vld [vmem:[#allocation2 + $0x1b0] sm:$0xff]
        %v4249 = vld [vmem:[#allocation2 + $0x1b8] sm:$0xff]
        %v4250 = vld [vmem:[#allocation2 + $0x1c0] sm:$0xff]
        %v4251 = vld [vmem:[#allocation2 + $0x1c8] sm:$0xff]
        %v4252 = vld [vmem:[#allocation2 + $0x1d0] sm:$0xff]
        %v4253 = vld [vmem:[#allocation2 + $0x1d8] sm:$0xff]
        %v4254 = vld [vmem:[#allocation2 + $0x1e0] sm:$0xff]
        %v4255 = vld [vmem:[#allocation2 + $0x1e8] sm:$0xff]
        %v4256 = vld [vmem:[#allocation2 + $0x1f0] sm:$0xff]
        %v4257 = vld [vmem:[#allocation2 + $0x1f8] sm:$0xff]
        %v4258 = vld [vmem:[#allocation2 + $0x200] sm:$0xff]
        %v4259 = vld [vmem:[#allocation2 + $0x208] sm:$0x3f]
        %v4260 = vmul.bf16 %v4243, %v2660
        %v4261 = vmul.bf16 %v4244, %v2662
        %v4262 = vmul.bf16 %v4245, %v2664
        %v4263 = vmul.bf16 %v4246, %v2666
        %v4264 = vmul.bf16 %v4247, %v2668
        %v4265 = vmul.bf16 %v4248, %v2670
        %v4266 = vmul.bf16 %v4249, %v2672
        %v4267 = vmul.bf16 %v4250, %v2674
        %v4268 = vmul.bf16 %v4251, %v2676
        %v4269 = vmul.bf16 %v4252, %v2678
        %v4270 = vmul.bf16 %v4253, %v2680
        %v4271 = vmul.bf16 %v4254, %v2682
        %v4272 = vmul.bf16 %v4255, %v2684
        %v4273 = vmul.bf16 %v4256, %v2686
        %v4274 = vmul.bf16 %v4257, %v2688
        %v4275 = vmul.bf16 %v4258, %v2690
        %v4276 = vmul.bf16 %v4259, %v2689
        %s4277 = scalar_lea.vmem %s3, 28
        %v4278 = vld [vmem:[%s4277] sm:$0xf]
        %v4296 = vrot.slane %v4260, 6
        %v4297 = vrot.slane %v4261, 6
        %v4298 = vsel %vm1570, %v4296, %v4297
        %v4299 = vrot.slane %v4262, 6
        %v4300 = vsel %vm1570, %v4297, %v4299
        %v4301 = vrot.slane %v4263, 6
        %v4302 = vsel %vm1570, %v4299, %v4301
        %v4303 = vrot.slane %v4264, 6
        %v4304 = vsel %vm1570, %v4301, %v4303
        %v4305 = vrot.slane %v4265, 6
        %v4306 = vsel %vm1570, %v4303, %v4305
        %v4307 = vrot.slane %v4266, 6
        %v4308 = vsel %vm1570, %v4305, %v4307
        %v4309 = vrot.slane %v4267, 6
        %v4310 = vsel %vm1570, %v4307, %v4309
        %v4311 = vrot.slane %v4268, 6
        %v4312 = vsel %vm1570, %v4309, %v4311
        %v4313 = vrot.slane %v4269, 6
        %v4314 = vsel %vm1570, %v4311, %v4313
        %v4315 = vrot.slane %v4270, 6
        %v4316 = vsel %vm1570, %v4313, %v4315
        %v4317 = vrot.slane %v4271, 6
        %v4318 = vsel %vm1570, %v4315, %v4317
        %v4319 = vrot.slane %v4272, 6
        %v4320 = vsel %vm1570, %v4317, %v4319
        %v4321 = vrot.slane %v4273, 6
        %v4322 = vsel %vm1570, %v4319, %v4321
        %v4323 = vrot.slane %v4274, 6
        %v4324 = vsel %vm1570, %v4321, %v4323
        %v4325 = vrot.slane %v4275, 6
        %v4326 = vsel %vm1570, %v4323, %v4325
        %v4327 = vrot.slane %v4276, 6
        %v4328 = vsel %vm1570, %v4325, %v4327
        %v4330 = vsel %vm641, %v4298, 0
        %v4333 = vsel %vm641, %v4300, 0
        %v4336 = vsel %vm641, %v4302, 0
        %v4339 = vsel %vm641, %v4304, 0
        %v4342 = vsel %vm641, %v4306, 0
        %v4345 = vsel %vm641, %v4308, 0
        %v4348 = vsel %vm641, %v4310, 0
        %v4351 = vsel %vm641, %v4312, 0
        %v4354 = vsel %vm641, %v4314, 0
        %v4357 = vsel %vm641, %v4316, 0
        %v4360 = vsel %vm641, %v4318, 0
        %v4363 = vsel %vm641, %v4320, 0
        %v4366 = vsel %vm641, %v4322, 0
        %v4369 = vsel %vm641, %v4324, 0
        %v4372 = vsel %vm641, %v4326, 0
        %v4375 = vsel %vm641, %v4328, 0
        %v4378 = vsel %vm690, %v4278, 0
        %4380 = vmatprep.subr.bf16.mxu0 0
        %4381 = vmatpush1.bf16.msra.mxu0 %v4378
        %4382 = vmatprep.subr.bf16.mxu0 0
        %4383 = vmatpush1.bf16.msra.mxu0 0
        %4384 = vmatprep.subr.bf16.mxu0 0
        %4385 = vmatpush1.bf16.msra.mxu0 0
        %4386 = vmatprep.subr.bf16.mxu0 0
        %4387 = vmatpush1.bf16.msra.mxu0 0
        %4388 = vmatprep.subr.bf16.mxu0 0
        %4389 = vmatpush1.bf16.msra.mxu0 0
        %4390 = vmatprep.subr.bf16.mxu0 0
        %4391 = vmatpush1.bf16.msra.mxu0 0
        %4392 = vmatprep.subr.bf16.mxu0 0
        %4393 = vmatpush1.bf16.msra.mxu0 0
        %4394 = vmatprep.subr.bf16.mxu0 0
        %4395 = vmatpush1.bf16.msra.mxu0 0
        %4396 = vmatprep.subr.bf16.mxu0 0
        %4397 = vmatpush1.bf16.msra.mxu0 0
        %4398 = vmatprep.subr.bf16.mxu0 0
        %4399 = vmatpush1.bf16.msra.mxu0 0
        %4400 = vmatprep.subr.bf16.mxu0 0
        %4401 = vmatpush1.bf16.msra.mxu0 0
        %4402 = vmatprep.subr.bf16.mxu0 0
        %4403 = vmatpush1.bf16.msra.mxu0 0
        %4404 = vmatprep.subr.bf16.mxu0 0
        %4405 = vmatpush1.bf16.msra.mxu0 0
        %4406 = vmatprep.subr.bf16.mxu0 0
        %4407 = vmatpush1.bf16.msra.mxu0 0
        %4408 = vmatprep.subr.bf16.mxu0 0
        %4409 = vmatpush1.bf16.msra.mxu0 0
        %4410 = vmatprep.subr.bf16.mxu0 0
        %4411 = vmatpush1.bf16.msra.mxu0 0
        %4412 = vmatprep.mubr.bf16.mxu0 0
        %4413 = vmatmul.mubr.bf16.gmra.mrb[0].mxu0 %v4330
        %v4414 = vpop.f32.mrb[0].mxu0
        %v4415 = vadd.f32 0.0, %v4414
        %v4416 = vpop.f32.mrb[0].mxu0
        %v4417 = vpop.f32.mrb[0].mxu0
        %v4418 = vadd.f32 0.0, %v4417
        %v4419 = vpop.f32.mrb[0].mxu0
        %4420 = vmatprep.mubr.bf16.mxu0 0
        %4421 = vmatmul.mubr.bf16.gmra.mrb[0].mxu0 %v4333
        %v4422 = vpop.f32.mrb[0].mxu0
        %v4423 = vadd.f32 0.0, %v4422
        %v4424 = vpop.f32.mrb[0].mxu0
        %v4425 = vpop.f32.mrb[0].mxu0
        %v4426 = vadd.f32 0.0, %v4425
        %v4427 = vpop.f32.mrb[0].mxu0
        %4428 = vmatprep.mubr.bf16.mxu0 0
        %4429 = vmatmul.mubr.bf16.gmra.mrb[0].mxu0 %v4336
        %v4430 = vpop.f32.mrb[0].mxu0
        %v4431 = vadd.f32 0.0, %v4430
        %v4432 = vpop.f32.mrb[0].mxu0
        %v4433 = vpop.f32.mrb[0].mxu0
        %v4434 = vadd.f32 0.0, %v4433
        %v4435 = vpop.f32.mrb[0].mxu0
        %4436 = vmatprep.mubr.bf16.mxu0 0
        %4437 = vmatmul.mubr.bf16.gmra.mrb[0].mxu0 %v4339
        %v4438 = vpop.f32.mrb[0].mxu0
        %v4439 = vadd.f32 0.0, %v4438
        %v4440 = vpop.f32.mrb[0].mxu0
        %v4441 = vpop.f32.mrb[0].mxu0
        %v4442 = vadd.f32 0.0, %v4441
        %v4443 = vpop.f32.mrb[0].mxu0
        %4444 = vmatprep.mubr.bf16.mxu0 0
        %4445 = vmatmul.mubr.bf16.gmra.mrb[0].mxu0 %v4342
        %v4446 = vpop.f32.mrb[0].mxu0
        %v4447 = vadd.f32 0.0, %v4446
        %v4448 = vpop.f32.mrb[0].mxu0
        %v4449 = vpop.f32.mrb[0].mxu0
        %v4450 = vadd.f32 0.0, %v4449
        %v4451 = vpop.f32.mrb[0].mxu0
        %4452 = vmatprep.mubr.bf16.mxu0 0
        %4453 = vmatmul.mubr.bf16.gmra.mrb[0].mxu0 %v4345
        %v4454 = vpop.f32.mrb[0].mxu0
        %v4455 = vadd.f32 0.0, %v4454
        %v4456 = vpop.f32.mrb[0].mxu0
        %v4457 = vpop.f32.mrb[0].mxu0
        %v4458 = vadd.f32 0.0, %v4457
        %v4459 = vpop.f32.mrb[0].mxu0
        %4460 = vmatprep.mubr.bf16.mxu0 0
        %4461 = vmatmul.mubr.bf16.gmra.mrb[0].mxu0 %v4348
        %v4462 = vpop.f32.mrb[0].mxu0
        %v4463 = vadd.f32 0.0, %v4462
        %v4464 = vpop.f32.mrb[0].mxu0
        %v4465 = vpop.f32.mrb[0].mxu0
        %v4466 = vadd.f32 0.0, %v4465
        %v4467 = vpop.f32.mrb[0].mxu0
        %4468 = vmatprep.mubr.bf16.mxu0 0
        %4469 = vmatmul.mubr.bf16.gmra.mrb[0].mxu0 %v4351
        %v4470 = vpop.f32.mrb[0].mxu0
        %v4471 = vadd.f32 0.0, %v4470
        %v4472 = vpop.f32.mrb[0].mxu0
        %v4473 = vpop.f32.mrb[0].mxu0
        %v4474 = vadd.f32 0.0, %v4473
        %v4475 = vpop.f32.mrb[0].mxu0
        %4476 = vmatprep.mubr.bf16.mxu0 0
        %4477 = vmatmul.mubr.bf16.gmra.mrb[0].mxu0 %v4354
        %v4478 = vpop.f32.mrb[0].mxu0
        %v4479 = vadd.f32 0.0, %v4478
        %v4480 = vpop.f32.mrb[0].mxu0
        %v4481 = vpop.f32.mrb[0].mxu0
        %v4482 = vadd.f32 0.0, %v4481
        %v4483 = vpop.f32.mrb[0].mxu0
        %4484 = vmatprep.mubr.bf16.mxu0 0
        %4485 = vmatmul.mubr.bf16.gmra.mrb[0].mxu0 %v4357
        %v4486 = vpop.f32.mrb[0].mxu0
        %v4487 = vadd.f32 0.0, %v4486
        %v4488 = vpop.f32.mrb[0].mxu0
        %v4489 = vpop.f32.mrb[0].mxu0
        %v4490 = vadd.f32 0.0, %v4489
        %v4491 = vpop.f32.mrb[0].mxu0
        %4492 = vmatprep.mubr.bf16.mxu0 0
        %4493 = vmatmul.mubr.bf16.gmra.mrb[0].mxu0 %v4360
        %v4494 = vpop.f32.mrb[0].mxu0
        %v4495 = vadd.f32 0.0, %v4494
        %v4496 = vpop.f32.mrb[0].mxu0
        %v4497 = vpop.f32.mrb[0].mxu0
        %v4498 = vadd.f32 0.0, %v4497
        %v4499 = vpop.f32.mrb[0].mxu0
        %4500 = vmatprep.mubr.bf16.mxu0 0
        %4501 = vmatmul.mubr.bf16.gmra.mrb[0].mxu0 %v4363
        %v4502 = vpop.f32.mrb[0].mxu0
        %v4503 = vadd.f32 0.0, %v4502
        %v4504 = vpop.f32.mrb[0].mxu0
        %v4505 = vpop.f32.mrb[0].mxu0
        %v4506 = vadd.f32 0.0, %v4505
        %v4507 = vpop.f32.mrb[0].mxu0
        %4508 = vmatprep.mubr.bf16.mxu0 0
        %4509 = vmatmul.mubr.bf16.gmra.mrb[0].mxu0 %v4366
        %v4510 = vpop.f32.mrb[0].mxu0
        %v4511 = vadd.f32 0.0, %v4510
        %v4512 = vpop.f32.mrb[0].mxu0
        %v4513 = vpop.f32.mrb[0].mxu0
        %v4514 = vadd.f32 0.0, %v4513
        %v4515 = vpop.f32.mrb[0].mxu0
        %4516 = vmatprep.mubr.bf16.mxu0 0
        %4517 = vmatmul.mubr.bf16.gmra.mrb[0].mxu0 %v4369
        %v4518 = vpop.f32.mrb[0].mxu0
        %v4519 = vadd.f32 0.0, %v4518
        %v4520 = vpop.f32.mrb[0].mxu0
        %v4521 = vpop.f32.mrb[0].mxu0
        %v4522 = vadd.f32 0.0, %v4521
        %v4523 = vpop.f32.mrb[0].mxu0
        %4524 = vmatprep.mubr.bf16.mxu0 0
        %4525 = vmatmul.mubr.bf16.gmra.mrb[0].mxu0 %v4372
        %v4526 = vpop.f32.mrb[0].mxu0
        %v4527 = vadd.f32 0.0, %v4526
        %v4528 = vpop.f32.mrb[0].mxu0
        %v4529 = vpop.f32.mrb[0].mxu0
        %v4530 = vadd.f32 0.0, %v4529
        %v4531 = vpop.f32.mrb[0].mxu0
        %4532 = vmatprep.mubr.bf16.mxu0 0
        %4533 = vmatmul.mubr.bf16.gmra.mrb[0].mxu0 %v4375
        %v4534 = vpop.f32.mrb[0].mxu0
        %v4535 = vadd.f32 0.0, %v4534
        %v4536 = vpop.f32.mrb[0].mxu0
        %v4537 = vpop.f32.mrb[0].mxu0
        %v4538 = vadd.f32 0.0, %v4537
        %v4539 = vpop.f32.mrb[0].mxu0
        %4540 = vdwg.mxu0
        %v4541 = vadd.f32 %v4211, %v4415
        %v4542 = vadd.f32 %v4212, %v4418
        %v4543 = vadd.f32 %v4213, %v4423
        %v4544 = vadd.f32 %v4214, %v4426
        %v4545 = vadd.f32 %v4215, %v4431
        %v4546 = vadd.f32 %v4216, %v4434
        %v4547 = vadd.f32 %v4217, %v4439
        %v4548 = vadd.f32 %v4218, %v4442
        %v4549 = vadd.f32 %v4219, %v4447
        %v4550 = vadd.f32 %v4220, %v4450
        %v4551 = vadd.f32 %v4221, %v4455
        %v4552 = vadd.f32 %v4222, %v4458
        %v4553 = vadd.f32 %v4223, %v4463
        %v4554 = vadd.f32 %v4224, %v4466
        %v4555 = vadd.f32 %v4225, %v4471
        %v4556 = vadd.f32 %v4226, %v4474
        %v4557 = vadd.f32 %v4227, %v4479
        %v4558 = vadd.f32 %v4228, %v4482
        %v4559 = vadd.f32 %v4229, %v4487
        %v4560 = vadd.f32 %v4230, %v4490
        %v4561 = vadd.f32 %v4231, %v4495
        %v4562 = vadd.f32 %v4232, %v4498
        %v4563 = vadd.f32 %v4233, %v4503
        %v4564 = vadd.f32 %v4234, %v4506
        %v4565 = vadd.f32 %v4235, %v4511
        %v4566 = vadd.f32 %v4236, %v4514
        %v4567 = vadd.f32 %v4237, %v4519
        %v4568 = vadd.f32 %v4238, %v4522
        %v4569 = vadd.f32 %v4239, %v4527
        %v4570 = vadd.f32 %v4240, %v4530
        %v4571 = vadd.f32 %v4241, %v4535
        %v4572 = vadd.f32 %v4242, %v4538
        %v4573 = vld [vmem:[%s4] sm:$0x1]
        %v4574 = vlaneseq
        %v4575 = vshrl.u32 %v4574, 7
        %v4576 = vsub.s32 0, %v4575
        %v4577 = vrot.slane %v4573, %v4576
        %v4578 = vmul.f32 %v738, %v4577
        %v4579 = vmul.f32 %v742, %v4577
        %v4580 = vmul.f32 %v748, %v4577
        %v4581 = vmul.f32 %v752, %v4577
        %v4582 = vmul.f32 %v758, %v4577
        %v4583 = vmul.f32 %v762, %v4577
        %v4584 = vmul.f32 %v768, %v4577
        %v4585 = vmul.f32 %v772, %v4577
        %v4586 = vmul.f32 %v778, %v4577
        %v4587 = vmul.f32 %v782, %v4577
        %v4588 = vmul.f32 %v788, %v4577
        %v4589 = vmul.f32 %v792, %v4577
        %v4590 = vmul.f32 %v798, %v4577
        %v4591 = vmul.f32 %v802, %v4577
        %v4592 = vmul.f32 %v808, %v4577
        %v4593 = vmul.f32 %v812, %v4577
        %v4594 = vmul.f32 %v818, %v4577
        %v4595 = vmul.f32 %v822, %v4577
        %v4596 = vmul.f32 %v828, %v4577
        %v4597 = vmul.f32 %v832, %v4577
        %v4598 = vmul.f32 %v838, %v4577
        %v4599 = vmul.f32 %v842, %v4577
        %v4600 = vmul.f32 %v848, %v4577
        %v4601 = vmul.f32 %v852, %v4577
        %v4602 = vmul.f32 %v858, %v4577
        %v4603 = vmul.f32 %v862, %v4577
        %v4604 = vmul.f32 %v868, %v4577
        %v4605 = vmul.f32 %v872, %v4577
        %v4606 = vmul.f32 %v878, %v4577
        %v4607 = vmul.f32 %v882, %v4577
        %v4608 = vmul.f32 %v888, %v4577
        %v4609 = vmul.f32 %v892, %v4577
        %v4610 = vld [vmem:[%s5] sm:$0x1]
        %v4611 = vlaneseq
        %v4612 = vshrl.u32 %v4611, 7
        %v4613 = vsub.s32 0, %v4612
        %v4614 = vrot.slane %v4610, %v4613
        %v4615 = vadd.f32 %v4578, %v4614
        %v4616 = vadd.f32 %v4579, %v4614
        %v4617 = vadd.f32 %v4580, %v4614
        %v4618 = vadd.f32 %v4581, %v4614
        %v4619 = vadd.f32 %v4582, %v4614
        %v4620 = vadd.f32 %v4583, %v4614
        %v4621 = vadd.f32 %v4584, %v4614
        %v4622 = vadd.f32 %v4585, %v4614
        %v4623 = vadd.f32 %v4586, %v4614
        %v4624 = vadd.f32 %v4587, %v4614
        %v4625 = vadd.f32 %v4588, %v4614
        %v4626 = vadd.f32 %v4589, %v4614
        %v4627 = vadd.f32 %v4590, %v4614
        %v4628 = vadd.f32 %v4591, %v4614
        %v4629 = vadd.f32 %v4592, %v4614
        %v4630 = vadd.f32 %v4593, %v4614
        %v4631 = vadd.f32 %v4594, %v4614
        %v4632 = vadd.f32 %v4595, %v4614
        %v4633 = vadd.f32 %v4596, %v4614
        %v4634 = vadd.f32 %v4597, %v4614
        %v4635 = vadd.f32 %v4598, %v4614
        %v4636 = vadd.f32 %v4599, %v4614
        %v4637 = vadd.f32 %v4600, %v4614
        %v4638 = vadd.f32 %v4601, %v4614
        %v4639 = vadd.f32 %v4602, %v4614
        %v4640 = vadd.f32 %v4603, %v4614
        %v4641 = vadd.f32 %v4604, %v4614
        %v4642 = vadd.f32 %v4605, %v4614
        %v4643 = vadd.f32 %v4606, %v4614
        %v4644 = vadd.f32 %v4607, %v4614
        %v4645 = vadd.f32 %v4608, %v4614
        %v4646 = vadd.f32 %v4609, %v4614
        %vm4647 = vcmp.gt.f32.partialorder %v4615, 0.0
        %vm4648 = vcmp.gt.f32.partialorder %v4616, 0.0
        %vm4649 = vcmp.gt.f32.partialorder %v4617, 0.0
        %vm4650 = vcmp.gt.f32.partialorder %v4618, 0.0
        %vm4651 = vcmp.gt.f32.partialorder %v4619, 0.0
        %vm4652 = vcmp.gt.f32.partialorder %v4620, 0.0
        %vm4653 = vcmp.gt.f32.partialorder %v4621, 0.0
        %vm4654 = vcmp.gt.f32.partialorder %v4622, 0.0
        %vm4655 = vcmp.gt.f32.partialorder %v4623, 0.0
        %vm4656 = vcmp.gt.f32.partialorder %v4624, 0.0
        %vm4657 = vcmp.gt.f32.partialorder %v4625, 0.0
        %vm4658 = vcmp.gt.f32.partialorder %v4626, 0.0
        %vm4659 = vcmp.gt.f32.partialorder %v4627, 0.0
        %vm4660 = vcmp.gt.f32.partialorder %v4628, 0.0
        %vm4661 = vcmp.gt.f32.partialorder %v4629, 0.0
        %vm4662 = vcmp.gt.f32.partialorder %v4630, 0.0
        %vm4663 = vcmp.gt.f32.partialorder %v4631, 0.0
        %vm4664 = vcmp.gt.f32.partialorder %v4632, 0.0
        %vm4665 = vcmp.gt.f32.partialorder %v4633, 0.0
        %vm4666 = vcmp.gt.f32.partialorder %v4634, 0.0
        %vm4667 = vcmp.gt.f32.partialorder %v4635, 0.0
        %vm4668 = vcmp.gt.f32.partialorder %v4636, 0.0
        %vm4669 = vcmp.gt.f32.partialorder %v4637, 0.0
        %vm4670 = vcmp.gt.f32.partialorder %v4638, 0.0
        %vm4671 = vcmp.gt.f32.partialorder %v4639, 0.0
        %vm4672 = vcmp.gt.f32.partialorder %v4640, 0.0
        %vm4673 = vcmp.gt.f32.partialorder %v4641, 0.0
        %vm4674 = vcmp.gt.f32.partialorder %v4642, 0.0
        %vm4675 = vcmp.gt.f32.partialorder %v4643, 0.0
        %vm4676 = vcmp.gt.f32.partialorder %v4644, 0.0
        %vm4677 = vcmp.gt.f32.partialorder %v4645, 0.0
        %vm4678 = vcmp.gt.f32.partialorder %v4646, 0.0
        %v4679 = vmul.f32 %v4615, 0.01
        %v4680 = vmul.f32 %v4616, 0.01
        %v4681 = vmul.f32 %v4617, 0.01
        %v4682 = vmul.f32 %v4618, 0.01
        %v4683 = vmul.f32 %v4619, 0.01
        %v4684 = vmul.f32 %v4620, 0.01
        %v4685 = vmul.f32 %v4621, 0.01
        %v4686 = vmul.f32 %v4622, 0.01
        %v4687 = vmul.f32 %v4623, 0.01
        %v4688 = vmul.f32 %v4624, 0.01
        %v4689 = vmul.f32 %v4625, 0.01
        %v4690 = vmul.f32 %v4626, 0.01
        %v4691 = vmul.f32 %v4627, 0.01
        %v4692 = vmul.f32 %v4628, 0.01
        %v4693 = vmul.f32 %v4629, 0.01
        %v4694 = vmul.f32 %v4630, 0.01
        %v4695 = vmul.f32 %v4631, 0.01
        %v4696 = vmul.f32 %v4632, 0.01
        %v4697 = vmul.f32 %v4633, 0.01
        %v4698 = vmul.f32 %v4634, 0.01
        %v4699 = vmul.f32 %v4635, 0.01
        %v4700 = vmul.f32 %v4636, 0.01
        %v4701 = vmul.f32 %v4637, 0.01
        %v4702 = vmul.f32 %v4638, 0.01
        %v4703 = vmul.f32 %v4639, 0.01
        %v4704 = vmul.f32 %v4640, 0.01
        %v4705 = vmul.f32 %v4641, 0.01
        %v4706 = vmul.f32 %v4642, 0.01
        %v4707 = vmul.f32 %v4643, 0.01
        %v4708 = vmul.f32 %v4644, 0.01
        %v4709 = vmul.f32 %v4645, 0.01
        %v4710 = vmul.f32 %v4646, 0.01
        %v4711 = vsel %vm4647, %v4615, %v4679
        %v4712 = vsel %vm4648, %v4616, %v4680
        %v4713 = vsel %vm4649, %v4617, %v4681
        %v4714 = vsel %vm4650, %v4618, %v4682
        %v4715 = vsel %vm4651, %v4619, %v4683
        %v4716 = vsel %vm4652, %v4620, %v4684
        %v4717 = vsel %vm4653, %v4621, %v4685
        %v4718 = vsel %vm4654, %v4622, %v4686
        %v4719 = vsel %vm4655, %v4623, %v4687
        %v4720 = vsel %vm4656, %v4624, %v4688
        %v4721 = vsel %vm4657, %v4625, %v4689
        %v4722 = vsel %vm4658, %v4626, %v4690
        %v4723 = vsel %vm4659, %v4627, %v4691
        %v4724 = vsel %vm4660, %v4628, %v4692
        %v4725 = vsel %vm4661, %v4629, %v4693
        %v4726 = vsel %vm4662, %v4630, %v4694
        %v4727 = vsel %vm4663, %v4631, %v4695
        %v4728 = vsel %vm4664, %v4632, %v4696
        %v4729 = vsel %vm4665, %v4633, %v4697
        %v4730 = vsel %vm4666, %v4634, %v4698
        %v4731 = vsel %vm4667, %v4635, %v4699
        %v4732 = vsel %vm4668, %v4636, %v4700
        %v4733 = vsel %vm4669, %v4637, %v4701
        %v4734 = vsel %vm4670, %v4638, %v4702
        %v4735 = vsel %vm4671, %v4639, %v4703
        %v4736 = vsel %vm4672, %v4640, %v4704
        %v4737 = vsel %vm4673, %v4641, %v4705
        %v4738 = vsel %vm4674, %v4642, %v4706
        %v4739 = vsel %vm4675, %v4643, %v4707
        %v4740 = vsel %vm4676, %v4644, %v4708
        %v4741 = vsel %vm4677, %v4645, %v4709
        %v4742 = vsel %vm4678, %v4646, %v4710
        %v4743 = vpack.c.bf16 %v4712, %v4711
        %v4744 = vpack.c.bf16 %v4714, %v4713
        %v4745 = vpack.c.bf16 %v4716, %v4715
        %v4746 = vpack.c.bf16 %v4718, %v4717
        %v4747 = vpack.c.bf16 %v4720, %v4719
        %v4748 = vpack.c.bf16 %v4722, %v4721
        %v4749 = vpack.c.bf16 %v4724, %v4723
        %v4750 = vpack.c.bf16 %v4726, %v4725
        %v4751 = vpack.c.bf16 %v4728, %v4727
        %v4752 = vpack.c.bf16 %v4730, %v4729
        %v4753 = vpack.c.bf16 %v4732, %v4731
        %v4754 = vpack.c.bf16 %v4734, %v4733
        %v4755 = vpack.c.bf16 %v4736, %v4735
        %v4756 = vpack.c.bf16 %v4738, %v4737
        %v4757 = vpack.c.bf16 %v4740, %v4739
        %v4758 = vpack.c.bf16 %v4742, %v4741
        %4759 = vst [vmem:[#allocation4] sm:$0xff] %v4743
        %4760 = vst [vmem:[#allocation4 + $0x20] sm:$0xff] %v4744
        %4761 = vst [vmem:[#allocation4 + $0x40] sm:$0xff] %v4745
        %4762 = vst [vmem:[#allocation4 + $0x60] sm:$0xff] %v4746
        %4763 = vst [vmem:[#allocation4 + $0x80] sm:$0xff] %v4747
        %4764 = vst [vmem:[#allocation4 + $0xa0] sm:$0xff] %v4748
        %4765 = vst [vmem:[#allocation4 + $0xc0] sm:$0xff] %v4749
        %4766 = vst [vmem:[#allocation4 + $0xe0] sm:$0xff] %v4750
        %4767 = vst [vmem:[#allocation4 + $0x100] sm:$0xff] %v4751
        %4768 = vst [vmem:[#allocation4 + $0x120] sm:$0xff] %v4752
        %4769 = vst [vmem:[#allocation4 + $0x140] sm:$0xff] %v4753
        %4770 = vst [vmem:[#allocation4 + $0x160] sm:$0xff] %v4754
        %4771 = vst [vmem:[#allocation4 + $0x180] sm:$0xff] %v4755
        %4772 = vst [vmem:[#allocation4 + $0x1a0] sm:$0xff] %v4756
        %4773 = vst [vmem:[#allocation4 + $0x1c0] sm:$0xff] %v4757
        %4774 = vst [vmem:[#allocation4 + $0x1e0] sm:$0xff] %v4758
        %v4775 = vld [vmem:[%s4 + $0x1] sm:$0x1]
        %v4776 = vlaneseq
        %v4777 = vshrl.u32 %v4776, 7
        %v4778 = vsub.s32 0, %v4777
        %v4779 = vrot.slane %v4775, %v4778
        %v4780 = vmul.f32 %v4541, %v4779
        %v4781 = vmul.f32 %v4542, %v4779
        %v4782 = vmul.f32 %v4543, %v4779
        %v4783 = vmul.f32 %v4544, %v4779
        %v4784 = vmul.f32 %v4545, %v4779
        %v4785 = vmul.f32 %v4546, %v4779
        %v4786 = vmul.f32 %v4547, %v4779
        %v4787 = vmul.f32 %v4548, %v4779
        %v4788 = vmul.f32 %v4549, %v4779
        %v4789 = vmul.f32 %v4550, %v4779
        %v4790 = vmul.f32 %v4551, %v4779
        %v4791 = vmul.f32 %v4552, %v4779
        %v4792 = vmul.f32 %v4553, %v4779
        %v4793 = vmul.f32 %v4554, %v4779
        %v4794 = vmul.f32 %v4555, %v4779
        %v4795 = vmul.f32 %v4556, %v4779
        %v4796 = vmul.f32 %v4557, %v4779
        %v4797 = vmul.f32 %v4558, %v4779
        %v4798 = vmul.f32 %v4559, %v4779
        %v4799 = vmul.f32 %v4560, %v4779
        %v4800 = vmul.f32 %v4561, %v4779
        %v4801 = vmul.f32 %v4562, %v4779
        %v4802 = vmul.f32 %v4563, %v4779
        %v4803 = vmul.f32 %v4564, %v4779
        %v4804 = vmul.f32 %v4565, %v4779
        %v4805 = vmul.f32 %v4566, %v4779
        %v4806 = vmul.f32 %v4567, %v4779
        %v4807 = vmul.f32 %v4568, %v4779
        %v4808 = vmul.f32 %v4569, %v4779
        %v4809 = vmul.f32 %v4570, %v4779
        %v4810 = vmul.f32 %v4571, %v4779
        %v4811 = vmul.f32 %v4572, %v4779
        %v4812 = vld [vmem:[%s5 + $0x1] sm:$0x1]
        %v4813 = vlaneseq
        %v4814 = vshrl.u32 %v4813, 7
        %v4815 = vsub.s32 0, %v4814
        %v4816 = vrot.slane %v4812, %v4815
        %v4817 = vadd.f32 %v4780, %v4816
        %v4818 = vadd.f32 %v4781, %v4816
        %v4819 = vadd.f32 %v4782, %v4816
        %v4820 = vadd.f32 %v4783, %v4816
        %v4821 = vadd.f32 %v4784, %v4816
        %v4822 = vadd.f32 %v4785, %v4816
        %v4823 = vadd.f32 %v4786, %v4816
        %v4824 = vadd.f32 %v4787, %v4816
        %v4825 = vadd.f32 %v4788, %v4816
        %v4826 = vadd.f32 %v4789, %v4816
        %v4827 = vadd.f32 %v4790, %v4816
        %v4828 = vadd.f32 %v4791, %v4816
        %v4829 = vadd.f32 %v4792, %v4816
        %v4830 = vadd.f32 %v4793, %v4816
        %v4831 = vadd.f32 %v4794, %v4816
        %v4832 = vadd.f32 %v4795, %v4816
        %v4833 = vadd.f32 %v4796, %v4816
        %v4834 = vadd.f32 %v4797, %v4816
        %v4835 = vadd.f32 %v4798, %v4816
        %v4836 = vadd.f32 %v4799, %v4816
        %v4837 = vadd.f32 %v4800, %v4816
        %v4838 = vadd.f32 %v4801, %v4816
        %v4839 = vadd.f32 %v4802, %v4816
        %v4840 = vadd.f32 %v4803, %v4816
        %v4841 = vadd.f32 %v4804, %v4816
        %v4842 = vadd.f32 %v4805, %v4816
        %v4843 = vadd.f32 %v4806, %v4816
        %v4844 = vadd.f32 %v4807, %v4816
        %v4845 = vadd.f32 %v4808, %v4816
        %v4846 = vadd.f32 %v4809, %v4816
        %v4847 = vadd.f32 %v4810, %v4816
        %v4848 = vadd.f32 %v4811, %v4816
        %vm4849 = vcmp.gt.f32.partialorder %v4817, 0.0
        %vm4850 = vcmp.gt.f32.partialorder %v4818, 0.0
        %vm4851 = vcmp.gt.f32.partialorder %v4819, 0.0
        %vm4852 = vcmp.gt.f32.partialorder %v4820, 0.0
        %vm4853 = vcmp.gt.f32.partialorder %v4821, 0.0
        %vm4854 = vcmp.gt.f32.partialorder %v4822, 0.0
        %vm4855 = vcmp.gt.f32.partialorder %v4823, 0.0
        %vm4856 = vcmp.gt.f32.partialorder %v4824, 0.0
        %vm4857 = vcmp.gt.f32.partialorder %v4825, 0.0
        %vm4858 = vcmp.gt.f32.partialorder %v4826, 0.0
        %vm4859 = vcmp.gt.f32.partialorder %v4827, 0.0
        %vm4860 = vcmp.gt.f32.partialorder %v4828, 0.0
        %vm4861 = vcmp.gt.f32.partialorder %v4829, 0.0
        %vm4862 = vcmp.gt.f32.partialorder %v4830, 0.0
        %vm4863 = vcmp.gt.f32.partialorder %v4831, 0.0
        %vm4864 = vcmp.gt.f32.partialorder %v4832, 0.0
        %vm4865 = vcmp.gt.f32.partialorder %v4833, 0.0
        %vm4866 = vcmp.gt.f32.partialorder %v4834, 0.0
        %vm4867 = vcmp.gt.f32.partialorder %v4835, 0.0
        %vm4868 = vcmp.gt.f32.partialorder %v4836, 0.0
        %vm4869 = vcmp.gt.f32.partialorder %v4837, 0.0
        %vm4870 = vcmp.gt.f32.partialorder %v4838, 0.0
        %vm4871 = vcmp.gt.f32.partialorder %v4839, 0.0
        %vm4872 = vcmp.gt.f32.partialorder %v4840, 0.0
        %vm4873 = vcmp.gt.f32.partialorder %v4841, 0.0
        %vm4874 = vcmp.gt.f32.partialorder %v4842, 0.0
        %vm4875 = vcmp.gt.f32.partialorder %v4843, 0.0
        %vm4876 = vcmp.gt.f32.partialorder %v4844, 0.0
        %vm4877 = vcmp.gt.f32.partialorder %v4845, 0.0
        %vm4878 = vcmp.gt.f32.partialorder %v4846, 0.0
        %vm4879 = vcmp.gt.f32.partialorder %v4847, 0.0
        %vm4880 = vcmp.gt.f32.partialorder %v4848, 0.0
        %v4881 = vmul.f32 %v4817, 0.01
        %v4882 = vmul.f32 %v4818, 0.01
        %v4883 = vmul.f32 %v4819, 0.01
        %v4884 = vmul.f32 %v4820, 0.01
        %v4885 = vmul.f32 %v4821, 0.01
        %v4886 = vmul.f32 %v4822, 0.01
        %v4887 = vmul.f32 %v4823, 0.01
        %v4888 = vmul.f32 %v4824, 0.01
        %v4889 = vmul.f32 %v4825, 0.01
        %v4890 = vmul.f32 %v4826, 0.01
        %v4891 = vmul.f32 %v4827, 0.01
        %v4892 = vmul.f32 %v4828, 0.01
        %v4893 = vmul.f32 %v4829, 0.01
        %v4894 = vmul.f32 %v4830, 0.01
        %v4895 = vmul.f32 %v4831, 0.01
        %v4896 = vmul.f32 %v4832, 0.01
        %v4897 = vmul.f32 %v4833, 0.01
        %v4898 = vmul.f32 %v4834, 0.01
        %v4899 = vmul.f32 %v4835, 0.01
        %v4900 = vmul.f32 %v4836, 0.01
        %v4901 = vmul.f32 %v4837, 0.01
        %v4902 = vmul.f32 %v4838, 0.01
        %v4903 = vmul.f32 %v4839, 0.01
        %v4904 = vmul.f32 %v4840, 0.01
        %v4905 = vmul.f32 %v4841, 0.01
        %v4906 = vmul.f32 %v4842, 0.01
        %v4907 = vmul.f32 %v4843, 0.01
        %v4908 = vmul.f32 %v4844, 0.01
        %v4909 = vmul.f32 %v4845, 0.01
        %v4910 = vmul.f32 %v4846, 0.01
        %v4911 = vmul.f32 %v4847, 0.01
        %v4912 = vmul.f32 %v4848, 0.01
        %v4913 = vsel %vm4849, %v4817, %v4881
        %v4914 = vsel %vm4850, %v4818, %v4882
        %v4915 = vsel %vm4851, %v4819, %v4883
        %v4916 = vsel %vm4852, %v4820, %v4884
        %v4917 = vsel %vm4853, %v4821, %v4885
        %v4918 = vsel %vm4854, %v4822, %v4886
        %v4919 = vsel %vm4855, %v4823, %v4887
        %v4920 = vsel %vm4856, %v4824, %v4888
        %v4921 = vsel %vm4857, %v4825, %v4889
        %v4922 = vsel %vm4858, %v4826, %v4890
        %v4923 = vsel %vm4859, %v4827, %v4891
        %v4924 = vsel %vm4860, %v4828, %v4892
        %v4925 = vsel %vm4861, %v4829, %v4893
        %v4926 = vsel %vm4862, %v4830, %v4894
        %v4927 = vsel %vm4863, %v4831, %v4895
        %v4928 = vsel %vm4864, %v4832, %v4896
        %v4929 = vsel %vm4865, %v4833, %v4897
        %v4930 = vsel %vm4866, %v4834, %v4898
        %v4931 = vsel %vm4867, %v4835, %v4899
        %v4932 = vsel %vm4868, %v4836, %v4900
        %v4933 = vsel %vm4869, %v4837, %v4901
        %v4934 = vsel %vm4870, %v4838, %v4902
        %v4935 = vsel %vm4871, %v4839, %v4903
        %v4936 = vsel %vm4872, %v4840, %v4904
        %v4937 = vsel %vm4873, %v4841, %v4905
        %v4938 = vsel %vm4874, %v4842, %v4906
        %v4939 = vsel %vm4875, %v4843, %v4907
        %v4940 = vsel %vm4876, %v4844, %v4908
        %v4941 = vsel %vm4877, %v4845, %v4909
        %v4942 = vsel %vm4878, %v4846, %v4910
        %v4943 = vsel %vm4879, %v4847, %v4911
        %v4944 = vsel %vm4880, %v4848, %v4912
        %v4945 = vpack.c.bf16 %v4914, %v4913
        %v4946 = vpack.c.bf16 %v4916, %v4915
        %v4947 = vpack.c.bf16 %v4918, %v4917
        %v4948 = vpack.c.bf16 %v4920, %v4919
        %v4949 = vpack.c.bf16 %v4922, %v4921
        %v4950 = vpack.c.bf16 %v4924, %v4923
        %v4951 = vpack.c.bf16 %v4926, %v4925
        %v4952 = vpack.c.bf16 %v4928, %v4927
        %v4953 = vpack.c.bf16 %v4930, %v4929
        %v4954 = vpack.c.bf16 %v4932, %v4931
        %v4955 = vpack.c.bf16 %v4934, %v4933
        %v4956 = vpack.c.bf16 %v4936, %v4935
        %v4957 = vpack.c.bf16 %v4938, %v4937
        %v4958 = vpack.c.bf16 %v4940, %v4939
        %v4959 = vpack.c.bf16 %v4942, %v4941
        %v4960 = vpack.c.bf16 %v4944, %v4943
        %4961 = vst [vmem:[#allocation4 + $0x8] sm:$0xff] %v4945
        %4962 = vst [vmem:[#allocation4 + $0x28] sm:$0xff] %v4946
        %4963 = vst [vmem:[#allocation4 + $0x48] sm:$0xff] %v4947
        %4964 = vst [vmem:[#allocation4 + $0x68] sm:$0xff] %v4948
        %4965 = vst [vmem:[#allocation4 + $0x88] sm:$0xff] %v4949
        %4966 = vst [vmem:[#allocation4 + $0xa8] sm:$0xff] %v4950
        %4967 = vst [vmem:[#allocation4 + $0xc8] sm:$0xff] %v4951
        %4968 = vst [vmem:[#allocation4 + $0xe8] sm:$0xff] %v4952
        %4969 = vst [vmem:[#allocation4 + $0x108] sm:$0xff] %v4953
        %4970 = vst [vmem:[#allocation4 + $0x128] sm:$0xff] %v4954
        %4971 = vst [vmem:[#allocation4 + $0x148] sm:$0xff] %v4955
        %4972 = vst [vmem:[#allocation4 + $0x168] sm:$0xff] %v4956
        %4973 = vst [vmem:[#allocation4 + $0x188] sm:$0xff] %v4957
        %4974 = vst [vmem:[#allocation4 + $0x1a8] sm:$0xff] %v4958
        %4975 = vst [vmem:[#allocation4 + $0x1c8] sm:$0xff] %v4959
        %4976 = vst [vmem:[#allocation4 + $0x1e8] sm:$0xff] %v4960
        %v4977 = vld [vmem:[%s4 + $0x2] sm:$0x1]
        %v4978 = vlaneseq
        %v4979 = vshrl.u32 %v4978, 7
        %v4980 = vsub.s32 0, %v4979
        %v4981 = vrot.slane %v4977, %v4980
        %v4982 = vmul.f32 %v931, %v4981
        %v4983 = vmul.f32 %v935, %v4981
        %v4984 = vmul.f32 %v941, %v4981
        %v4985 = vmul.f32 %v945, %v4981
        %v4986 = vmul.f32 %v951, %v4981
        %v4987 = vmul.f32 %v955, %v4981
        %v4988 = vmul.f32 %v961, %v4981
        %v4989 = vmul.f32 %v965, %v4981
        %v4990 = vmul.f32 %v971, %v4981
        %v4991 = vmul.f32 %v975, %v4981
        %v4992 = vmul.f32 %v981, %v4981
        %v4993 = vmul.f32 %v985, %v4981
        %v4994 = vmul.f32 %v991, %v4981
        %v4995 = vmul.f32 %v995, %v4981
        %v4996 = vmul.f32 %v1001, %v4981
        %v4997 = vmul.f32 %v1005, %v4981
        %v4998 = vmul.f32 %v1011, %v4981
        %v4999 = vmul.f32 %v1015, %v4981
        %v5000 = vmul.f32 %v1021, %v4981
        %v5001 = vmul.f32 %v1025, %v4981
        %v5002 = vmul.f32 %v1031, %v4981
        %v5003 = vmul.f32 %v1035, %v4981
        %v5004 = vmul.f32 %v1041, %v4981
        %v5005 = vmul.f32 %v1045, %v4981
        %v5006 = vmul.f32 %v1051, %v4981
        %v5007 = vmul.f32 %v1055, %v4981
        %v5008 = vmul.f32 %v1061, %v4981
        %v5009 = vmul.f32 %v1065, %v4981
        %v5010 = vmul.f32 %v1071, %v4981
        %v5011 = vmul.f32 %v1075, %v4981
        %v5012 = vmul.f32 %v1081, %v4981
        %v5013 = vmul.f32 %v1085, %v4981
        %v5014 = vld [vmem:[%s5 + $0x2] sm:$0x1]
        %v5015 = vlaneseq
        %v5016 = vshrl.u32 %v5015, 7
        %v5017 = vsub.s32 0, %v5016
        %v5018 = vrot.slane %v5014, %v5017
        %v5019 = vadd.f32 %v4982, %v5018
        %v5020 = vadd.f32 %v4983, %v5018
        %v5021 = vadd.f32 %v4984, %v5018
        %v5022 = vadd.f32 %v4985, %v5018
        %v5023 = vadd.f32 %v4986, %v5018
        %v5024 = vadd.f32 %v4987, %v5018
        %v5025 = vadd.f32 %v4988, %v5018
        %v5026 = vadd.f32 %v4989, %v5018
        %v5027 = vadd.f32 %v4990, %v5018
        %v5028 = vadd.f32 %v4991, %v5018
        %v5029 = vadd.f32 %v4992, %v5018
        %v5030 = vadd.f32 %v4993, %v5018
        %v5031 = vadd.f32 %v4994, %v5018
        %v5032 = vadd.f32 %v4995, %v5018
        %v5033 = vadd.f32 %v4996, %v5018
        %v5034 = vadd.f32 %v4997, %v5018
        %v5035 = vadd.f32 %v4998, %v5018
        %v5036 = vadd.f32 %v4999, %v5018
        %v5037 = vadd.f32 %v5000, %v5018
        %v5038 = vadd.f32 %v5001, %v5018
        %v5039 = vadd.f32 %v5002, %v5018
        %v5040 = vadd.f32 %v5003, %v5018
        %v5041 = vadd.f32 %v5004, %v5018
        %v5042 = vadd.f32 %v5005, %v5018
        %v5043 = vadd.f32 %v5006, %v5018
        %v5044 = vadd.f32 %v5007, %v5018
        %v5045 = vadd.f32 %v5008, %v5018
        %v5046 = vadd.f32 %v5009, %v5018
        %v5047 = vadd.f32 %v5010, %v5018
        %v5048 = vadd.f32 %v5011, %v5018
        %v5049 = vadd.f32 %v5012, %v5018
        %v5050 = vadd.f32 %v5013, %v5018
        %vm5051 = vcmp.gt.f32.partialorder %v5019, 0.0
        %vm5052 = vcmp.gt.f32.partialorder %v5020, 0.0
        %vm5053 = vcmp.gt.f32.partialorder %v5021, 0.0
        %vm5054 = vcmp.gt.f32.partialorder %v5022, 0.0
        %vm5055 = vcmp.gt.f32.partialorder %v5023, 0.0
        %vm5056 = vcmp.gt.f32.partialorder %v5024, 0.0
        %vm5057 = vcmp.gt.f32.partialorder %v5025, 0.0
        %vm5058 = vcmp.gt.f32.partialorder %v5026, 0.0
        %vm5059 = vcmp.gt.f32.partialorder %v5027, 0.0
        %vm5060 = vcmp.gt.f32.partialorder %v5028, 0.0
        %vm5061 = vcmp.gt.f32.partialorder %v5029, 0.0
        %vm5062 = vcmp.gt.f32.partialorder %v5030, 0.0
        %vm5063 = vcmp.gt.f32.partialorder %v5031, 0.0
        %vm5064 = vcmp.gt.f32.partialorder %v5032, 0.0
        %vm5065 = vcmp.gt.f32.partialorder %v5033, 0.0
        %vm5066 = vcmp.gt.f32.partialorder %v5034, 0.0
        %vm5067 = vcmp.gt.f32.partialorder %v5035, 0.0
        %vm5068 = vcmp.gt.f32.partialorder %v5036, 0.0
        %vm5069 = vcmp.gt.f32.partialorder %v5037, 0.0
        %vm5070 = vcmp.gt.f32.partialorder %v5038, 0.0
        %vm5071 = vcmp.gt.f32.partialorder %v5039, 0.0
        %vm5072 = vcmp.gt.f32.partialorder %v5040, 0.0
        %vm5073 = vcmp.gt.f32.partialorder %v5041, 0.0
        %vm5074 = vcmp.gt.f32.partialorder %v5042, 0.0
        %vm5075 = vcmp.gt.f32.partialorder %v5043, 0.0
        %vm5076 = vcmp.gt.f32.partialorder %v5044, 0.0
        %vm5077 = vcmp.gt.f32.partialorder %v5045, 0.0
        %vm5078 = vcmp.gt.f32.partialorder %v5046, 0.0
        %vm5079 = vcmp.gt.f32.partialorder %v5047, 0.0
        %vm5080 = vcmp.gt.f32.partialorder %v5048, 0.0
        %vm5081 = vcmp.gt.f32.partialorder %v5049, 0.0
        %vm5082 = vcmp.gt.f32.partialorder %v5050, 0.0
        %v5083 = vmul.f32 %v5019, 0.01
        %v5084 = vmul.f32 %v5020, 0.01
        %v5085 = vmul.f32 %v5021, 0.01
        %v5086 = vmul.f32 %v5022, 0.01
        %v5087 = vmul.f32 %v5023, 0.01
        %v5088 = vmul.f32 %v5024, 0.01
        %v5089 = vmul.f32 %v5025, 0.01
        %v5090 = vmul.f32 %v5026, 0.01
        %v5091 = vmul.f32 %v5027, 0.01
        %v5092 = vmul.f32 %v5028, 0.01
        %v5093 = vmul.f32 %v5029, 0.01
        %v5094 = vmul.f32 %v5030, 0.01
        %v5095 = vmul.f32 %v5031, 0.01
        %v5096 = vmul.f32 %v5032, 0.01
        %v5097 = vmul.f32 %v5033, 0.01
        %v5098 = vmul.f32 %v5034, 0.01
        %v5099 = vmul.f32 %v5035, 0.01
        %v5100 = vmul.f32 %v5036, 0.01
        %v5101 = vmul.f32 %v5037, 0.01
        %v5102 = vmul.f32 %v5038, 0.01
        %v5103 = vmul.f32 %v5039, 0.01
        %v5104 = vmul.f32 %v5040, 0.01
        %v5105 = vmul.f32 %v5041, 0.01
        %v5106 = vmul.f32 %v5042, 0.01
        %v5107 = vmul.f32 %v5043, 0.01
        %v5108 = vmul.f32 %v5044, 0.01
        %v5109 = vmul.f32 %v5045, 0.01
        %v5110 = vmul.f32 %v5046, 0.01
        %v5111 = vmul.f32 %v5047, 0.01
        %v5112 = vmul.f32 %v5048, 0.01
        %v5113 = vmul.f32 %v5049, 0.01
        %v5114 = vmul.f32 %v5050, 0.01
        %v5115 = vsel %vm5051, %v5019, %v5083
        %v5116 = vsel %vm5052, %v5020, %v5084
        %v5117 = vsel %vm5053, %v5021, %v5085
        %v5118 = vsel %vm5054, %v5022, %v5086
        %v5119 = vsel %vm5055, %v5023, %v5087
        %v5120 = vsel %vm5056, %v5024, %v5088
        %v5121 = vsel %vm5057, %v5025, %v5089
        %v5122 = vsel %vm5058, %v5026, %v5090
        %v5123 = vsel %vm5059, %v5027, %v5091
        %v5124 = vsel %vm5060, %v5028, %v5092
        %v5125 = vsel %vm5061, %v5029, %v5093
        %v5126 = vsel %vm5062, %v5030, %v5094
        %v5127 = vsel %vm5063, %v5031, %v5095
        %v5128 = vsel %vm5064, %v5032, %v5096
        %v5129 = vsel %vm5065, %v5033, %v5097
        %v5130 = vsel %vm5066, %v5034, %v5098
        %v5131 = vsel %vm5067, %v5035, %v5099
        %v5132 = vsel %vm5068, %v5036, %v5100
        %v5133 = vsel %vm5069, %v5037, %v5101
        %v5134 = vsel %vm5070, %v5038, %v5102
        %v5135 = vsel %vm5071, %v5039, %v5103
        %v5136 = vsel %vm5072, %v5040, %v5104
        %v5137 = vsel %vm5073, %v5041, %v5105
        %v5138 = vsel %vm5074, %v5042, %v5106
        %v5139 = vsel %vm5075, %v5043, %v5107
        %v5140 = vsel %vm5076, %v5044, %v5108
        %v5141 = vsel %vm5077, %v5045, %v5109
        %v5142 = vsel %vm5078, %v5046, %v5110
        %v5143 = vsel %vm5079, %v5047, %v5111
        %v5144 = vsel %vm5080, %v5048, %v5112
        %v5145 = vsel %vm5081, %v5049, %v5113
        %v5146 = vsel %vm5082, %v5050, %v5114
        %v5147 = vpack.c.bf16 %v5116, %v5115
        %v5148 = vpack.c.bf16 %v5118, %v5117
        %v5149 = vpack.c.bf16 %v5120, %v5119
        %v5150 = vpack.c.bf16 %v5122, %v5121
        %v5151 = vpack.c.bf16 %v5124, %v5123
        %v5152 = vpack.c.bf16 %v5126, %v5125
        %v5153 = vpack.c.bf16 %v5128, %v5127
        %v5154 = vpack.c.bf16 %v5130, %v5129
        %v5155 = vpack.c.bf16 %v5132, %v5131
        %v5156 = vpack.c.bf16 %v5134, %v5133
        %v5157 = vpack.c.bf16 %v5136, %v5135
        %v5158 = vpack.c.bf16 %v5138, %v5137
        %v5159 = vpack.c.bf16 %v5140, %v5139
        %v5160 = vpack.c.bf16 %v5142, %v5141
        %v5161 = vpack.c.bf16 %v5144, %v5143
        %v5162 = vpack.c.bf16 %v5146, %v5145
        %5163 = vst [vmem:[#allocation4 + $0x10] sm:$0xff] %v5147
        %5164 = vst [vmem:[#allocation4 + $0x30] sm:$0xff] %v5148
        %5165 = vst [vmem:[#allocation4 + $0x50] sm:$0xff] %v5149
        %5166 = vst [vmem:[#allocation4 + $0x70] sm:$0xff] %v5150
        %5167 = vst [vmem:[#allocation4 + $0x90] sm:$0xff] %v5151
        %5168 = vst [vmem:[#allocation4 + $0xb0] sm:$0xff] %v5152
        %5169 = vst [vmem:[#allocation4 + $0xd0] sm:$0xff] %v5153
        %5170 = vst [vmem:[#allocation4 + $0xf0] sm:$0xff] %v5154
        %5171 = vst [vmem:[#allocation4 + $0x110] sm:$0xff] %v5155
        %5172 = vst [vmem:[#allocation4 + $0x130] sm:$0xff] %v5156
        %5173 = vst [vmem:[#allocation4 + $0x150] sm:$0xff] %v5157
        %5174 = vst [vmem:[#allocation4 + $0x170] sm:$0xff] %v5158
        %5175 = vst [vmem:[#allocation4 + $0x190] sm:$0xff] %v5159
        %5176 = vst [vmem:[#allocation4 + $0x1b0] sm:$0xff] %v5160
        %5177 = vst [vmem:[#allocation4 + $0x1d0] sm:$0xff] %v5161
        %5178 = vst [vmem:[#allocation4 + $0x1f0] sm:$0xff] %v5162
        %v5179 = vld [vmem:[%s4 + $0x3] sm:$0x1]
        %v5180 = vlaneseq
        %v5181 = vshrl.u32 %v5180, 7
        %v5182 = vsub.s32 0, %v5181
        %v5183 = vrot.slane %v5179, %v5182
        %v5184 = vmul.f32 %v933, %v5183
        %v5185 = vmul.f32 %v937, %v5183
        %v5186 = vmul.f32 %v943, %v5183
        %v5187 = vmul.f32 %v947, %v5183
        %v5188 = vmul.f32 %v953, %v5183
        %v5189 = vmul.f32 %v957, %v5183
        %v5190 = vmul.f32 %v963, %v5183
        %v5191 = vmul.f32 %v967, %v5183
        %v5192 = vmul.f32 %v973, %v5183
        %v5193 = vmul.f32 %v977, %v5183
        %v5194 = vmul.f32 %v983, %v5183
        %v5195 = vmul.f32 %v987, %v5183
        %v5196 = vmul.f32 %v993, %v5183
        %v5197 = vmul.f32 %v997, %v5183
        %v5198 = vmul.f32 %v1003, %v5183
        %v5199 = vmul.f32 %v1007, %v5183
        %v5200 = vmul.f32 %v1013, %v5183
        %v5201 = vmul.f32 %v1017, %v5183
        %v5202 = vmul.f32 %v1023, %v5183
        %v5203 = vmul.f32 %v1027, %v5183
        %v5204 = vmul.f32 %v1033, %v5183
        %v5205 = vmul.f32 %v1037, %v5183
        %v5206 = vmul.f32 %v1043, %v5183
        %v5207 = vmul.f32 %v1047, %v5183
        %v5208 = vmul.f32 %v1053, %v5183
        %v5209 = vmul.f32 %v1057, %v5183
        %v5210 = vmul.f32 %v1063, %v5183
        %v5211 = vmul.f32 %v1067, %v5183
        %v5212 = vmul.f32 %v1073, %v5183
        %v5213 = vmul.f32 %v1077, %v5183
        %v5214 = vmul.f32 %v1083, %v5183
        %v5215 = vmul.f32 %v1087, %v5183
        %v5216 = vld [vmem:[%s5 + $0x3] sm:$0x1]
        %v5217 = vlaneseq
        %v5218 = vshrl.u32 %v5217, 7
        %v5219 = vsub.s32 0, %v5218
        %v5220 = vrot.slane %v5216, %v5219
        %v5221 = vadd.f32 %v5184, %v5220
        %v5222 = vadd.f32 %v5185, %v5220
        %v5223 = vadd.f32 %v5186, %v5220
        %v5224 = vadd.f32 %v5187, %v5220
        %v5225 = vadd.f32 %v5188, %v5220
        %v5226 = vadd.f32 %v5189, %v5220
        %v5227 = vadd.f32 %v5190, %v5220
        %v5228 = vadd.f32 %v5191, %v5220
        %v5229 = vadd.f32 %v5192, %v5220
        %v5230 = vadd.f32 %v5193, %v5220
        %v5231 = vadd.f32 %v5194, %v5220
        %v5232 = vadd.f32 %v5195, %v5220
        %v5233 = vadd.f32 %v5196, %v5220
        %v5234 = vadd.f32 %v5197, %v5220
        %v5235 = vadd.f32 %v5198, %v5220
        %v5236 = vadd.f32 %v5199, %v5220
        %v5237 = vadd.f32 %v5200, %v5220
        %v5238 = vadd.f32 %v5201, %v5220
        %v5239 = vadd.f32 %v5202, %v5220
        %v5240 = vadd.f32 %v5203, %v5220
        %v5241 = vadd.f32 %v5204, %v5220
        %v5242 = vadd.f32 %v5205, %v5220
        %v5243 = vadd.f32 %v5206, %v5220
        %v5244 = vadd.f32 %v5207, %v5220
        %v5245 = vadd.f32 %v5208, %v5220
        %v5246 = vadd.f32 %v5209, %v5220
        %v5247 = vadd.f32 %v5210, %v5220
        %v5248 = vadd.f32 %v5211, %v5220
        %v5249 = vadd.f32 %v5212, %v5220
        %v5250 = vadd.f32 %v5213, %v5220
        %v5251 = vadd.f32 %v5214, %v5220
        %v5252 = vadd.f32 %v5215, %v5220
        %vm5253 = vcmp.gt.f32.partialorder %v5221, 0.0
        %vm5254 = vcmp.gt.f32.partialorder %v5222, 0.0
        %vm5255 = vcmp.gt.f32.partialorder %v5223, 0.0
        %vm5256 = vcmp.gt.f32.partialorder %v5224, 0.0
        %vm5257 = vcmp.gt.f32.partialorder %v5225, 0.0
        %vm5258 = vcmp.gt.f32.partialorder %v5226, 0.0
        %vm5259 = vcmp.gt.f32.partialorder %v5227, 0.0
        %vm5260 = vcmp.gt.f32.partialorder %v5228, 0.0
        %vm5261 = vcmp.gt.f32.partialorder %v5229, 0.0
        %vm5262 = vcmp.gt.f32.partialorder %v5230, 0.0
        %vm5263 = vcmp.gt.f32.partialorder %v5231, 0.0
        %vm5264 = vcmp.gt.f32.partialorder %v5232, 0.0
        %vm5265 = vcmp.gt.f32.partialorder %v5233, 0.0
        %vm5266 = vcmp.gt.f32.partialorder %v5234, 0.0
        %vm5267 = vcmp.gt.f32.partialorder %v5235, 0.0
        %vm5268 = vcmp.gt.f32.partialorder %v5236, 0.0
        %vm5269 = vcmp.gt.f32.partialorder %v5237, 0.0
        %vm5270 = vcmp.gt.f32.partialorder %v5238, 0.0
        %vm5271 = vcmp.gt.f32.partialorder %v5239, 0.0
        %vm5272 = vcmp.gt.f32.partialorder %v5240, 0.0
        %vm5273 = vcmp.gt.f32.partialorder %v5241, 0.0
        %vm5274 = vcmp.gt.f32.partialorder %v5242, 0.0
        %vm5275 = vcmp.gt.f32.partialorder %v5243, 0.0
        %vm5276 = vcmp.gt.f32.partialorder %v5244, 0.0
        %vm5277 = vcmp.gt.f32.partialorder %v5245, 0.0
        %vm5278 = vcmp.gt.f32.partialorder %v5246, 0.0
        %vm5279 = vcmp.gt.f32.partialorder %v5247, 0.0
        %vm5280 = vcmp.gt.f32.partialorder %v5248, 0.0
        %vm5281 = vcmp.gt.f32.partialorder %v5249, 0.0
        %vm5282 = vcmp.gt.f32.partialorder %v5250, 0.0
        %vm5283 = vcmp.gt.f32.partialorder %v5251, 0.0
        %vm5284 = vcmp.gt.f32.partialorder %v5252, 0.0
        %v5285 = vmul.f32 %v5221, 0.01
        %v5286 = vmul.f32 %v5222, 0.01
        %v5287 = vmul.f32 %v5223, 0.01
        %v5288 = vmul.f32 %v5224, 0.01
        %v5289 = vmul.f32 %v5225, 0.01
        %v5290 = vmul.f32 %v5226, 0.01
        %v5291 = vmul.f32 %v5227, 0.01
        %v5292 = vmul.f32 %v5228, 0.01
        %v5293 = vmul.f32 %v5229, 0.01
        %v5294 = vmul.f32 %v5230, 0.01
        %v5295 = vmul.f32 %v5231, 0.01
        %v5296 = vmul.f32 %v5232, 0.01
        %v5297 = vmul.f32 %v5233, 0.01
        %v5298 = vmul.f32 %v5234, 0.01
        %v5299 = vmul.f32 %v5235, 0.01
        %v5300 = vmul.f32 %v5236, 0.01
        %v5301 = vmul.f32 %v5237, 0.01
        %v5302 = vmul.f32 %v5238, 0.01
        %v5303 = vmul.f32 %v5239, 0.01
        %v5304 = vmul.f32 %v5240, 0.01
        %v5305 = vmul.f32 %v5241, 0.01
        %v5306 = vmul.f32 %v5242, 0.01
        %v5307 = vmul.f32 %v5243, 0.01
        %v5308 = vmul.f32 %v5244, 0.01
        %v5309 = vmul.f32 %v5245, 0.01
        %v5310 = vmul.f32 %v5246, 0.01
        %v5311 = vmul.f32 %v5247, 0.01
        %v5312 = vmul.f32 %v5248, 0.01
        %v5313 = vmul.f32 %v5249, 0.01
        %v5314 = vmul.f32 %v5250, 0.01
        %v5315 = vmul.f32 %v5251, 0.01
        %v5316 = vmul.f32 %v5252, 0.01
        %v5317 = vsel %vm5253, %v5221, %v5285
        %v5318 = vsel %vm5254, %v5222, %v5286
        %v5319 = vsel %vm5255, %v5223, %v5287
        %v5320 = vsel %vm5256, %v5224, %v5288
        %v5321 = vsel %vm5257, %v5225, %v5289
        %v5322 = vsel %vm5258, %v5226, %v5290
        %v5323 = vsel %vm5259, %v5227, %v5291
        %v5324 = vsel %vm5260, %v5228, %v5292
        %v5325 = vsel %vm5261, %v5229, %v5293
        %v5326 = vsel %vm5262, %v5230, %v5294
        %v5327 = vsel %vm5263, %v5231, %v5295
        %v5328 = vsel %vm5264, %v5232, %v5296
        %v5329 = vsel %vm5265, %v5233, %v5297
        %v5330 = vsel %vm5266, %v5234, %v5298
        %v5331 = vsel %vm5267, %v5235, %v5299
        %v5332 = vsel %vm5268, %v5236, %v5300
        %v5333 = vsel %vm5269, %v5237, %v5301
        %v5334 = vsel %vm5270, %v5238, %v5302
        %v5335 = vsel %vm5271, %v5239, %v5303
        %v5336 = vsel %vm5272, %v5240, %v5304
        %v5337 = vsel %vm5273, %v5241, %v5305
        %v5338 = vsel %vm5274, %v5242, %v5306
        %v5339 = vsel %vm5275, %v5243, %v5307
        %v5340 = vsel %vm5276, %v5244, %v5308
        %v5341 = vsel %vm5277, %v5245, %v5309
        %v5342 = vsel %vm5278, %v5246, %v5310
        %v5343 = vsel %vm5279, %v5247, %v5311
        %v5344 = vsel %vm5280, %v5248, %v5312
        %v5345 = vsel %vm5281, %v5249, %v5313
        %v5346 = vsel %vm5282, %v5250, %v5314
        %v5347 = vsel %vm5283, %v5251, %v5315
        %v5348 = vsel %vm5284, %v5252, %v5316
        %v5349 = vpack.c.bf16 %v5318, %v5317
        %v5350 = vpack.c.bf16 %v5320, %v5319
        %v5351 = vpack.c.bf16 %v5322, %v5321
        %v5352 = vpack.c.bf16 %v5324, %v5323
        %v5353 = vpack.c.bf16 %v5326, %v5325
        %v5354 = vpack.c.bf16 %v5328, %v5327
        %v5355 = vpack.c.bf16 %v5330, %v5329
        %v5356 = vpack.c.bf16 %v5332, %v5331
        %v5357 = vpack.c.bf16 %v5334, %v5333
        %v5358 = vpack.c.bf16 %v5336, %v5335
        %v5359 = vpack.c.bf16 %v5338, %v5337
        %v5360 = vpack.c.bf16 %v5340, %v5339
        %v5361 = vpack.c.bf16 %v5342, %v5341
        %v5362 = vpack.c.bf16 %v5344, %v5343
        %v5363 = vpack.c.bf16 %v5346, %v5345
        %v5364 = vpack.c.bf16 %v5348, %v5347
        %5365 = vst [vmem:[#allocation4 + $0x18] sm:$0xff] %v5349
        %5366 = vst [vmem:[#allocation4 + $0x38] sm:$0xff] %v5350
        %5367 = vst [vmem:[#allocation4 + $0x58] sm:$0xff] %v5351
        %5368 = vst [vmem:[#allocation4 + $0x78] sm:$0xff] %v5352
        %5369 = vst [vmem:[#allocation4 + $0x98] sm:$0xff] %v5353
        %5370 = vst [vmem:[#allocation4 + $0xb8] sm:$0xff] %v5354
        %5371 = vst [vmem:[#allocation4 + $0xd8] sm:$0xff] %v5355
        %5372 = vst [vmem:[#allocation4 + $0xf8] sm:$0xff] %v5356
        %5373 = vst [vmem:[#allocation4 + $0x118] sm:$0xff] %v5357
        %5374 = vst [vmem:[#allocation4 + $0x138] sm:$0xff] %v5358
        %5375 = vst [vmem:[#allocation4 + $0x158] sm:$0xff] %v5359
        %5376 = vst [vmem:[#allocation4 + $0x178] sm:$0xff] %v5360
        %5377 = vst [vmem:[#allocation4 + $0x198] sm:$0xff] %v5361
        %5378 = vst [vmem:[#allocation4 + $0x1b8] sm:$0xff] %v5362
        %5379 = vst [vmem:[#allocation4 + $0x1d8] sm:$0xff] %v5363
        %5380 = vst [vmem:[#allocation4 + $0x1f8] sm:$0xff] %v5364
        %v5381 = vld [vmem:[#allocation4] sm:$0xff]
        %v5382 = vld [vmem:[#allocation4 + $0x8] sm:$0xff]
        %v5383 = vld [vmem:[#allocation4 + $0x10] sm:$0xff]
        %v5384 = vld [vmem:[#allocation4 + $0x18] sm:$0xff]
        %v5385 = vld [vmem:[#allocation4 + $0x20] sm:$0xff]
        %v5386 = vld [vmem:[#allocation4 + $0x28] sm:$0xff]
        %v5387 = vld [vmem:[#allocation4 + $0x30] sm:$0xff]
        %v5388 = vld [vmem:[#allocation4 + $0x38] sm:$0xff]
        %v5389 = vld [vmem:[#allocation4 + $0x40] sm:$0xff]
        %v5390 = vld [vmem:[#allocation4 + $0x48] sm:$0xff]
        %v5391 = vld [vmem:[#allocation4 + $0x50] sm:$0xff]
        %v5392 = vld [vmem:[#allocation4 + $0x58] sm:$0xff]
        %v5393 = vld [vmem:[#allocation4 + $0x60] sm:$0xff]
        %v5394 = vld [vmem:[#allocation4 + $0x68] sm:$0xff]
        %v5395 = vld [vmem:[#allocation4 + $0x70] sm:$0xff]
        %v5396 = vld [vmem:[#allocation4 + $0x78] sm:$0xff]
        %v5397 = vld [vmem:[#allocation4 + $0x80] sm:$0xff]
        %v5398 = vld [vmem:[#allocation4 + $0x88] sm:$0xff]
        %v5399 = vld [vmem:[#allocation4 + $0x90] sm:$0xff]
        %v5400 = vld [vmem:[#allocation4 + $0x98] sm:$0xff]
        %v5401 = vld [vmem:[#allocation4 + $0xa0] sm:$0xff]
        %v5402 = vld [vmem:[#allocation4 + $0xa8] sm:$0xff]
        %v5403 = vld [vmem:[#allocation4 + $0xb0] sm:$0xff]
        %v5404 = vld [vmem:[#allocation4 + $0xb8] sm:$0xff]
        %v5405 = vld [vmem:[#allocation4 + $0xc0] sm:$0xff]
        %v5406 = vld [vmem:[#allocation4 + $0xc8] sm:$0xff]
        %v5407 = vld [vmem:[#allocation4 + $0xd0] sm:$0xff]
        %v5408 = vld [vmem:[#allocation4 + $0xd8] sm:$0xff]
        %v5409 = vld [vmem:[#allocation4 + $0xe0] sm:$0xff]
        %v5410 = vld [vmem:[#allocation4 + $0xe8] sm:$0xff]
        %v5411 = vld [vmem:[#allocation4 + $0xf0] sm:$0xff]
        %v5412 = vld [vmem:[#allocation4 + $0xf8] sm:$0xff]
        %v5413 = vld [vmem:[#allocation4 + $0x100] sm:$0xff]
        %v5414 = vld [vmem:[#allocation4 + $0x108] sm:$0xff]
        %v5415 = vld [vmem:[#allocation4 + $0x110] sm:$0xff]
        %v5416 = vld [vmem:[#allocation4 + $0x118] sm:$0xff]
        %v5417 = vld [vmem:[#allocation4 + $0x120] sm:$0xff]
        %v5418 = vld [vmem:[#allocation4 + $0x128] sm:$0xff]
        %v5419 = vld [vmem:[#allocation4 + $0x130] sm:$0xff]
        %v5420 = vld [vmem:[#allocation4 + $0x138] sm:$0xff]
        %v5421 = vld [vmem:[#allocation4 + $0x140] sm:$0xff]
        %v5422 = vld [vmem:[#allocation4 + $0x148] sm:$0xff]
        %v5423 = vld [vmem:[#allocation4 + $0x150] sm:$0xff]
        %v5424 = vld [vmem:[#allocation4 + $0x158] sm:$0xff]
        %v5425 = vld [vmem:[#allocation4 + $0x160] sm:$0xff]
        %v5426 = vld [vmem:[#allocation4 + $0x168] sm:$0xff]
        %v5427 = vld [vmem:[#allocation4 + $0x170] sm:$0xff]
        %v5428 = vld [vmem:[#allocation4 + $0x178] sm:$0xff]
        %v5429 = vld [vmem:[#allocation4 + $0x180] sm:$0xff]
        %v5430 = vld [vmem:[#allocation4 + $0x188] sm:$0xff]
        %v5431 = vld [vmem:[#allocation4 + $0x190] sm:$0xff]
        %v5432 = vld [vmem:[#allocation4 + $0x198] sm:$0xff]
        %v5433 = vld [vmem:[#allocation4 + $0x1a0] sm:$0xff]
        %v5434 = vld [vmem:[#allocation4 + $0x1a8] sm:$0xff]
        %v5435 = vld [vmem:[#allocation4 + $0x1b0] sm:$0xff]
        %v5436 = vld [vmem:[#allocation4 + $0x1b8] sm:$0xff]
        %v5437 = vld [vmem:[#allocation4 + $0x1c0] sm:$0xff]
        %v5438 = vld [vmem:[#allocation4 + $0x1c8] sm:$0xff]
        %v5439 = vld [vmem:[#allocation4 + $0x1d0] sm:$0xff]
        %v5440 = vld [vmem:[#allocation4 + $0x1d8] sm:$0xff]
        %v5441 = vld [vmem:[#allocation4 + $0x1e0] sm:$0xff]
        %v5442 = vld [vmem:[#allocation4 + $0x1e8] sm:$0xff]
        %v5443 = vld [vmem:[#allocation4 + $0x1f0] sm:$0xff]
        %v5444 = vld [vmem:[#allocation4 + $0x1f8] sm:$0xff]
        %v5445 = vld [vmem:[%s6] sm:$0xf]
        %v5446 = vld [vmem:[%s6 + $0x4] sm:$0xf]
        %v5447 = vld [vmem:[%s6 + $0x8] sm:$0xf]
        %v5448 = vld [vmem:[%s6 + $0xc] sm:$0xf]
        %v5449 = vld [vmem:[%s6 + $0x10] sm:$0xf]
        %v5450 = vld [vmem:[%s6 + $0x14] sm:$0xf]
        %v5451 = vld [vmem:[%s6 + $0x18] sm:$0xf]
        %v5452 = vld [vmem:[%s6 + $0x1c] sm:$0xf]
        %v5453 = vld [vmem:[%s6 + $0x20] sm:$0xf]
        %v5454 = vld [vmem:[%s6 + $0x24] sm:$0xf]
        %v5455 = vld [vmem:[%s6 + $0x28] sm:$0xf]
        %v5456 = vld [vmem:[%s6 + $0x2c] sm:$0xf]
        %v5457 = vld [vmem:[%s6 + $0x30] sm:$0xf]
        %v5458 = vld [vmem:[%s6 + $0x34] sm:$0xf]
        %v5459 = vld [vmem:[%s6 + $0x38] sm:$0xf]
        %v5460 = vld [vmem:[%s6 + $0x3c] sm:$0xf]
        %v5461 = vld [vmem:[%s6 + $0x40] sm:$0xf]
        %v5462 = vld [vmem:[%s6 + $0x44] sm:$0xf]
        %v5463 = vld [vmem:[%s6 + $0x48] sm:$0xf]
        %v5464 = vld [vmem:[%s6 + $0x4c] sm:$0xf]
        %v5465 = vld [vmem:[%s6 + $0x50] sm:$0xf]
        %v5466 = vld [vmem:[%s6 + $0x54] sm:$0xf]
        %v5467 = vld [vmem:[%s6 + $0x58] sm:$0xf]
        %v5468 = vld [vmem:[%s6 + $0x5c] sm:$0xf]
        %v5469 = vld [vmem:[%s6 + $0x60] sm:$0xf]
        %v5470 = vld [vmem:[%s6 + $0x64] sm:$0xf]
        %v5471 = vld [vmem:[%s6 + $0x68] sm:$0xf]
        %v5472 = vld [vmem:[%s6 + $0x6c] sm:$0xf]
        %v5473 = vld [vmem:[%s6 + $0x70] sm:$0xf]
        %v5474 = vld [vmem:[%s6 + $0x74] sm:$0xf]
        %v5475 = vld [vmem:[%s6 + $0x78] sm:$0xf]
        %v5476 = vld [vmem:[%s6 + $0x7c] sm:$0xf]
        %v5477 = vld [vmem:[%s6 + $0x80] sm:$0xf]
        %v5478 = vld [vmem:[%s6 + $0x84] sm:$0xf]
        %v5479 = vld [vmem:[%s6 + $0x88] sm:$0xf]
        %v5480 = vld [vmem:[%s6 + $0x8c] sm:$0xf]
        %v5481 = vld [vmem:[%s6 + $0x90] sm:$0xf]
        %v5482 = vld [vmem:[%s6 + $0x94] sm:$0xf]
        %v5483 = vld [vmem:[%s6 + $0x98] sm:$0xf]
        %v5484 = vld [vmem:[%s6 + $0x9c] sm:$0xf]
        %v5485 = vld [vmem:[%s6 + $0xa0] sm:$0xf]
        %v5486 = vld [vmem:[%s6 + $0xa4] sm:$0xf]
        %v5487 = vld [vmem:[%s6 + $0xa8] sm:$0xf]
        %v5488 = vld [vmem:[%s6 + $0xac] sm:$0xf]
        %v5489 = vld [vmem:[%s6 + $0xb0] sm:$0xf]
        %v5490 = vld [vmem:[%s6 + $0xb4] sm:$0xf]
        %v5491 = vld [vmem:[%s6 + $0xb8] sm:$0xf]
        %v5492 = vld [vmem:[%s6 + $0xbc] sm:$0xf]
        %v5493 = vld [vmem:[%s6 + $0xc0] sm:$0xf]
        %v5494 = vld [vmem:[%s6 + $0xc4] sm:$0xf]
        %v5495 = vld [vmem:[%s6 + $0xc8] sm:$0xf]
        %v5496 = vld [vmem:[%s6 + $0xcc] sm:$0xf]
        %v5497 = vld [vmem:[%s6 + $0xd0] sm:$0xf]
        %v5498 = vld [vmem:[%s6 + $0xd4] sm:$0xf]
        %v5499 = vld [vmem:[%s6 + $0xd8] sm:$0xf]
        %v5500 = vld [vmem:[%s6 + $0xdc] sm:$0xf]
        %v5501 = vld [vmem:[%s6 + $0xe0] sm:$0xf]
        %v5502 = vld [vmem:[%s6 + $0xe4] sm:$0xf]
        %v5503 = vld [vmem:[%s6 + $0xe8] sm:$0xf]
        %v5504 = vld [vmem:[%s6 + $0xec] sm:$0xf]
        %v5505 = vld [vmem:[%s6 + $0xf0] sm:$0xf]
        %v5506 = vld [vmem:[%s6 + $0xf4] sm:$0xf]
        %v5507 = vld [vmem:[%s6 + $0xf8] sm:$0xf]
        %v5508 = vld [vmem:[%s6 + $0xfc] sm:$0xf]
        %v5573 = vunpack.c.l.b16 %v5445
        %v5574 = vunpack.c.l.b16 %v5446
        %v5575 = vunpack.c.l.b16 %v5447
        %v5576 = vunpack.c.l.b16 %v5448
        %v5577 = vunpack.c.l.b16 %v5449
        %v5578 = vunpack.c.l.b16 %v5450
        %v5579 = vunpack.c.l.b16 %v5451
        %v5580 = vunpack.c.l.b16 %v5452
        %v5581 = vunpack.c.l.b16 %v5453
        %v5582 = vunpack.c.l.b16 %v5454
        %v5583 = vunpack.c.l.b16 %v5455
        %v5584 = vunpack.c.l.b16 %v5456
        %v5585 = vunpack.c.l.b16 %v5457
        %v5586 = vunpack.c.l.b16 %v5458
        %v5587 = vunpack.c.l.b16 %v5459
        %v5588 = vunpack.c.l.b16 %v5460
        %v5589 = vunpack.c.l.b16 %v5461
        %v5590 = vunpack.c.l.b16 %v5462
        %v5591 = vunpack.c.l.b16 %v5463
        %v5592 = vunpack.c.l.b16 %v5464
        %v5593 = vunpack.c.l.b16 %v5465
        %v5594 = vunpack.c.l.b16 %v5466
        %v5595 = vunpack.c.l.b16 %v5467
        %v5596 = vunpack.c.l.b16 %v5468
        %v5597 = vunpack.c.l.b16 %v5469
        %v5598 = vunpack.c.l.b16 %v5470
        %v5599 = vunpack.c.l.b16 %v5471
        %v5600 = vunpack.c.l.b16 %v5472
        %v5601 = vunpack.c.l.b16 %v5473
        %v5602 = vunpack.c.l.b16 %v5474
        %v5603 = vunpack.c.l.b16 %v5475
        %v5604 = vunpack.c.l.b16 %v5476
        %v5605 = vunpack.c.l.b16 %v5477
        %v5606 = vunpack.c.l.b16 %v5478
        %v5607 = vunpack.c.l.b16 %v5479
        %v5608 = vunpack.c.l.b16 %v5480
        %v5609 = vunpack.c.l.b16 %v5481
        %v5610 = vunpack.c.l.b16 %v5482
        %v5611 = vunpack.c.l.b16 %v5483
        %v5612 = vunpack.c.l.b16 %v5484
        %v5613 = vunpack.c.l.b16 %v5485
        %v5614 = vunpack.c.l.b16 %v5486
        %v5615 = vunpack.c.l.b16 %v5487
        %v5616 = vunpack.c.l.b16 %v5488
        %v5617 = vunpack.c.l.b16 %v5489
        %v5618 = vunpack.c.l.b16 %v5490
        %v5619 = vunpack.c.l.b16 %v5491
        %v5620 = vunpack.c.l.b16 %v5492
        %v5621 = vunpack.c.l.b16 %v5493
        %v5622 = vunpack.c.l.b16 %v5494
        %v5623 = vunpack.c.l.b16 %v5495
        %v5624 = vunpack.c.l.b16 %v5496
        %v5625 = vunpack.c.l.b16 %v5497
        %v5626 = vunpack.c.l.b16 %v5498
        %v5627 = vunpack.c.l.b16 %v5499
        %v5628 = vunpack.c.l.b16 %v5500
        %v5629 = vunpack.c.l.b16 %v5501
        %v5630 = vunpack.c.l.b16 %v5502
        %v5631 = vunpack.c.l.b16 %v5503
        %v5632 = vunpack.c.l.b16 %v5504
        %v5633 = vunpack.c.l.b16 %v5505
        %v5634 = vunpack.c.l.b16 %v5506
        %v5635 = vunpack.c.l.b16 %v5507
        %v5636 = vunpack.c.l.b16 %v5508
        %v5637 = vpack.c.b16 %v5574, %v5573
        %v5638 = vpack.c.b16 %v5576, %v5575
        %v5639 = vpack.c.b16 %v5578, %v5577
        %v5640 = vpack.c.b16 %v5580, %v5579
        %v5641 = vpack.c.b16 %v5582, %v5581
        %v5642 = vpack.c.b16 %v5584, %v5583
        %v5643 = vpack.c.b16 %v5586, %v5585
        %v5644 = vpack.c.b16 %v5588, %v5587
        %v5645 = vpack.c.b16 %v5590, %v5589
        %v5646 = vpack.c.b16 %v5592, %v5591
        %v5647 = vpack.c.b16 %v5594, %v5593
        %v5648 = vpack.c.b16 %v5596, %v5595
        %v5649 = vpack.c.b16 %v5598, %v5597
        %v5650 = vpack.c.b16 %v5600, %v5599
        %v5651 = vpack.c.b16 %v5602, %v5601
        %v5652 = vpack.c.b16 %v5604, %v5603
        %v5653 = vpack.c.b16 %v5606, %v5605
        %v5654 = vpack.c.b16 %v5608, %v5607
        %v5655 = vpack.c.b16 %v5610, %v5609
        %v5656 = vpack.c.b16 %v5612, %v5611
        %v5657 = vpack.c.b16 %v5614, %v5613
        %v5658 = vpack.c.b16 %v5616, %v5615
        %v5659 = vpack.c.b16 %v5618, %v5617
        %v5660 = vpack.c.b16 %v5620, %v5619
        %v5661 = vpack.c.b16 %v5622, %v5621
        %v5662 = vpack.c.b16 %v5624, %v5623
        %v5663 = vpack.c.b16 %v5626, %v5625
        %v5664 = vpack.c.b16 %v5628, %v5627
        %v5665 = vpack.c.b16 %v5630, %v5629
        %v5666 = vpack.c.b16 %v5632, %v5631
        %v5667 = vpack.c.b16 %v5634, %v5633
        %v5668 = vpack.c.b16 %v5636, %v5635
        %5701 = vmatprep.subr.bf16.mxu0 0
        %5702 = vmatpush1.bf16.msra.mxu0 %v5637
        %5703 = vmatprep.subr.bf16.mxu0 0
        %5704 = vmatpush1.bf16.msra.mxu0 %v5638
        %5705 = vmatprep.subr.bf16.mxu0 0
        %5706 = vmatpush1.bf16.msra.mxu0 %v5639
        %5707 = vmatprep.subr.bf16.mxu0 0
        %5708 = vmatpush1.bf16.msra.mxu0 %v5640
        %5709 = vmatprep.subr.bf16.mxu0 0
        %5710 = vmatpush1.bf16.msra.mxu0 %v5641
        %5711 = vmatprep.subr.bf16.mxu0 0
        %5712 = vmatpush1.bf16.msra.mxu0 %v5642
        %5713 = vmatprep.subr.bf16.mxu0 0
        %5714 = vmatpush1.bf16.msra.mxu0 %v5643
        %5715 = vmatprep.subr.bf16.mxu0 0
        %5716 = vmatpush1.bf16.msra.mxu0 %v5644
        %5717 = vmatprep.subr.bf16.mxu0 0
        %5718 = vmatpush1.bf16.msra.mxu0 %v5645
        %5719 = vmatprep.subr.bf16.mxu0 0
        %5720 = vmatpush1.bf16.msra.mxu0 %v5646
        %5721 = vmatprep.subr.bf16.mxu0 0
        %5722 = vmatpush1.bf16.msra.mxu0 %v5647
        %5723 = vmatprep.subr.bf16.mxu0 0
        %5724 = vmatpush1.bf16.msra.mxu0 %v5648
        %5725 = vmatprep.subr.bf16.mxu0 0
        %5726 = vmatpush1.bf16.msra.mxu0 %v5649
        %5727 = vmatprep.subr.bf16.mxu0 0
        %5728 = vmatpush1.bf16.msra.mxu0 %v5650
        %5729 = vmatprep.subr.bf16.mxu0 0
        %5730 = vmatpush1.bf16.msra.mxu0 %v5651
        %5731 = vmatprep.subr.bf16.mxu0 0
        %5732 = vmatpush1.bf16.msra.mxu0 %v5652
        %5733 = vmatprep.mubr.bf16.mxu0 %v5382
        %5734 = vmatmul.mubr.bf16.gmra.mrb[0].mxu0 %v5381
        %v5735 = vpop.f32.mrb[0].mxu0
        %v5736 = vadd.f32 0.0, %v5735
        %v5737 = vpop.f32.mrb[0].mxu0
        %v5738 = vpop.f32.mrb[0].mxu0
        %v5739 = vadd.f32 0.0, %v5738
        %v5740 = vpop.f32.mrb[0].mxu0
        %5741 = vmatprep.mubr.bf16.mxu0 %v5386
        %5742 = vmatmul.mubr.bf16.gmra.mrb[0].mxu0 %v5385
        %v5743 = vpop.f32.mrb[0].mxu0
        %v5744 = vadd.f32 0.0, %v5743
        %v5745 = vpop.f32.mrb[0].mxu0
        %v5746 = vpop.f32.mrb[0].mxu0
        %v5747 = vadd.f32 0.0, %v5746
        %v5748 = vpop.f32.mrb[0].mxu0
        %5749 = vmatprep.mubr.bf16.mxu0 %v5390
        %5750 = vmatmul.mubr.bf16.gmra.mrb[0].mxu0 %v5389
        %v5751 = vpop.f32.mrb[0].mxu0
        %v5752 = vadd.f32 0.0, %v5751
        %v5753 = vpop.f32.mrb[0].mxu0
        %v5754 = vpop.f32.mrb[0].mxu0
        %v5755 = vadd.f32 0.0, %v5754
        %v5756 = vpop.f32.mrb[0].mxu0
        %5757 = vmatprep.mubr.bf16.mxu0 %v5394
        %5758 = vmatmul.mubr.bf16.gmra.mrb[0].mxu0 %v5393
        %v5759 = vpop.f32.mrb[0].mxu0
        %v5760 = vadd.f32 0.0, %v5759
        %v5761 = vpop.f32.mrb[0].mxu0
        %v5762 = vpop.f32.mrb[0].mxu0
        %v5763 = vadd.f32 0.0, %v5762
        %v5764 = vpop.f32.mrb[0].mxu0
        %5765 = vmatprep.mubr.bf16.mxu0 %v5398
        %5766 = vmatmul.mubr.bf16.gmra.mrb[0].mxu0 %v5397
        %v5767 = vpop.f32.mrb[0].mxu0
        %v5768 = vadd.f32 0.0, %v5767
        %v5769 = vpop.f32.mrb[0].mxu0
        %v5770 = vpop.f32.mrb[0].mxu0
        %v5771 = vadd.f32 0.0, %v5770
        %v5772 = vpop.f32.mrb[0].mxu0
        %5773 = vmatprep.mubr.bf16.mxu0 %v5402
        %5774 = vmatmul.mubr.bf16.gmra.mrb[0].mxu0 %v5401
        %v5775 = vpop.f32.mrb[0].mxu0
        %v5776 = vadd.f32 0.0, %v5775
        %v5777 = vpop.f32.mrb[0].mxu0
        %v5778 = vpop.f32.mrb[0].mxu0
        %v5779 = vadd.f32 0.0, %v5778
        %v5780 = vpop.f32.mrb[0].mxu0
        %5781 = vmatprep.mubr.bf16.mxu0 %v5406
        %5782 = vmatmul.mubr.bf16.gmra.mrb[0].mxu0 %v5405
        %v5783 = vpop.f32.mrb[0].mxu0
        %v5784 = vadd.f32 0.0, %v5783
        %v5785 = vpop.f32.mrb[0].mxu0
        %v5786 = vpop.f32.mrb[0].mxu0
        %v5787 = vadd.f32 0.0, %v5786
        %v5788 = vpop.f32.mrb[0].mxu0
        %5789 = vmatprep.mubr.bf16.mxu0 %v5410
        %5790 = vmatmul.mubr.bf16.gmra.mrb[0].mxu0 %v5409
        %v5791 = vpop.f32.mrb[0].mxu0
        %v5792 = vadd.f32 0.0, %v5791
        %v5793 = vpop.f32.mrb[0].mxu0
        %v5794 = vpop.f32.mrb[0].mxu0
        %v5795 = vadd.f32 0.0, %v5794
        %v5796 = vpop.f32.mrb[0].mxu0
        %5797 = vmatprep.mubr.bf16.mxu0 %v5414
        %5798 = vmatmul.mubr.bf16.gmra.mrb[0].mxu0 %v5413
        %v5799 = vpop.f32.mrb[0].mxu0
        %v5800 = vadd.f32 0.0, %v5799
        %v5801 = vpop.f32.mrb[0].mxu0
        %v5802 = vpop.f32.mrb[0].mxu0
        %v5803 = vadd.f32 0.0, %v5802
        %v5804 = vpop.f32.mrb[0].mxu0
        %5805 = vmatprep.mubr.bf16.mxu0 %v5418
        %5806 = vmatmul.mubr.bf16.gmra.mrb[0].mxu0 %v5417
        %v5807 = vpop.f32.mrb[0].mxu0
        %v5808 = vadd.f32 0.0, %v5807
        %v5809 = vpop.f32.mrb[0].mxu0
        %v5810 = vpop.f32.mrb[0].mxu0
        %v5811 = vadd.f32 0.0, %v5810
        %v5812 = vpop.f32.mrb[0].mxu0
        %5813 = vmatprep.mubr.bf16.mxu0 %v5422
        %5814 = vmatmul.mubr.bf16.gmra.mrb[0].mxu0 %v5421
        %v5815 = vpop.f32.mrb[0].mxu0
        %v5816 = vadd.f32 0.0, %v5815
        %v5817 = vpop.f32.mrb[0].mxu0
        %v5818 = vpop.f32.mrb[0].mxu0
        %v5819 = vadd.f32 0.0, %v5818
        %v5820 = vpop.f32.mrb[0].mxu0
        %5821 = vmatprep.mubr.bf16.mxu0 %v5426
        %5822 = vmatmul.mubr.bf16.gmra.mrb[0].mxu0 %v5425
        %v5823 = vpop.f32.mrb[0].mxu0
        %v5824 = vadd.f32 0.0, %v5823
        %v5825 = vpop.f32.mrb[0].mxu0
        %v5826 = vpop.f32.mrb[0].mxu0
        %v5827 = vadd.f32 0.0, %v5826
        %v5828 = vpop.f32.mrb[0].mxu0
        %5829 = vmatprep.mubr.bf16.mxu0 %v5430
        %5830 = vmatmul.mubr.bf16.gmra.mrb[0].mxu0 %v5429
        %v5831 = vpop.f32.mrb[0].mxu0
        %v5832 = vadd.f32 0.0, %v5831
        %v5833 = vpop.f32.mrb[0].mxu0
        %v5834 = vpop.f32.mrb[0].mxu0
        %v5835 = vadd.f32 0.0, %v5834
        %v5836 = vpop.f32.mrb[0].mxu0
        %5837 = vmatprep.mubr.bf16.mxu0 %v5434
        %5838 = vmatmul.mubr.bf16.gmra.mrb[0].mxu0 %v5433
        %v5839 = vpop.f32.mrb[0].mxu0
        %v5840 = vadd.f32 0.0, %v5839
        %v5841 = vpop.f32.mrb[0].mxu0
        %v5842 = vpop.f32.mrb[0].mxu0
        %v5843 = vadd.f32 0.0, %v5842
        %v5844 = vpop.f32.mrb[0].mxu0
        %5845 = vmatprep.mubr.bf16.mxu0 %v5438
        %5846 = vmatmul.mubr.bf16.gmra.mrb[0].mxu0 %v5437
        %v5847 = vpop.f32.mrb[0].mxu0
        %v5848 = vadd.f32 0.0, %v5847
        %v5849 = vpop.f32.mrb[0].mxu0
        %v5850 = vpop.f32.mrb[0].mxu0
        %v5851 = vadd.f32 0.0, %v5850
        %v5852 = vpop.f32.mrb[0].mxu0
        %5853 = vmatprep.mubr.bf16.mxu0 %v5442
        %5854 = vmatmul.mubr.bf16.gmra.mrb[0].mxu0 %v5441
        %v5855 = vpop.f32.mrb[0].mxu0
        %v5856 = vadd.f32 0.0, %v5855
        %v5857 = vpop.f32.mrb[0].mxu0
        %v5858 = vpop.f32.mrb[0].mxu0
        %v5859 = vadd.f32 0.0, %v5858
        %v5860 = vpop.f32.mrb[0].mxu0
        %5861 = vdwg.mxu0
        %5862 = vmatprep.subr.bf16.mxu0 0
        %5863 = vmatpush1.bf16.msra.mxu0 %v5653
        %5864 = vmatprep.subr.bf16.mxu0 0
        %5865 = vmatpush1.bf16.msra.mxu0 %v5654
        %5866 = vmatprep.subr.bf16.mxu0 0
        %5867 = vmatpush1.bf16.msra.mxu0 %v5655
        %5868 = vmatprep.subr.bf16.mxu0 0
        %5869 = vmatpush1.bf16.msra.mxu0 %v5656
        %5870 = vmatprep.subr.bf16.mxu0 0
        %5871 = vmatpush1.bf16.msra.mxu0 %v5657
        %5872 = vmatprep.subr.bf16.mxu0 0
        %5873 = vmatpush1.bf16.msra.mxu0 %v5658
        %5874 = vmatprep.subr.bf16.mxu0 0
        %5875 = vmatpush1.bf16.msra.mxu0 %v5659
        %5876 = vmatprep.subr.bf16.mxu0 0
        %5877 = vmatpush1.bf16.msra.mxu0 %v5660
        %5878 = vmatprep.subr.bf16.mxu0 0
        %5879 = vmatpush1.bf16.msra.mxu0 %v5661
        %5880 = vmatprep.subr.bf16.mxu0 0
        %5881 = vmatpush1.bf16.msra.mxu0 %v5662
        %5882 = vmatprep.subr.bf16.mxu0 0
        %5883 = vmatpush1.bf16.msra.mxu0 %v5663
        %5884 = vmatprep.subr.bf16.mxu0 0
        %5885 = vmatpush1.bf16.msra.mxu0 %v5664
        %5886 = vmatprep.subr.bf16.mxu0 0
        %5887 = vmatpush1.bf16.msra.mxu0 %v5665
        %5888 = vmatprep.subr.bf16.mxu0 0
        %5889 = vmatpush1.bf16.msra.mxu0 %v5666
        %5890 = vmatprep.subr.bf16.mxu0 0
        %5891 = vmatpush1.bf16.msra.mxu0 %v5667
        %5892 = vmatprep.subr.bf16.mxu0 0
        %5893 = vmatpush1.bf16.msra.mxu0 %v5668
        %5894 = vmatprep.mubr.bf16.mxu0 %v5384
        %5895 = vmatmul.mubr.bf16.gmra.mrb[0].mxu0 %v5383
        %v5896 = vpop.f32.mrb[0].mxu0
        %v5897 = vadd.f32 %v5736, %v5896
        %v5898 = vpop.f32.mrb[0].mxu0
        %v5899 = vpop.f32.mrb[0].mxu0
        %v5900 = vadd.f32 %v5739, %v5899
        %v5901 = vpop.f32.mrb[0].mxu0
        %5902 = vmatprep.mubr.bf16.mxu0 %v5388
        %5903 = vmatmul.mubr.bf16.gmra.mrb[0].mxu0 %v5387
        %v5904 = vpop.f32.mrb[0].mxu0
        %v5905 = vadd.f32 %v5744, %v5904
        %v5906 = vpop.f32.mrb[0].mxu0
        %v5907 = vpop.f32.mrb[0].mxu0
        %v5908 = vadd.f32 %v5747, %v5907
        %v5909 = vpop.f32.mrb[0].mxu0
        %5910 = vmatprep.mubr.bf16.mxu0 %v5392
        %5911 = vmatmul.mubr.bf16.gmra.mrb[0].mxu0 %v5391
        %v5912 = vpop.f32.mrb[0].mxu0
        %v5913 = vadd.f32 %v5752, %v5912
        %v5914 = vpop.f32.mrb[0].mxu0
        %v5915 = vpop.f32.mrb[0].mxu0
        %v5916 = vadd.f32 %v5755, %v5915
        %v5917 = vpop.f32.mrb[0].mxu0
        %5918 = vmatprep.mubr.bf16.mxu0 %v5396
        %5919 = vmatmul.mubr.bf16.gmra.mrb[0].mxu0 %v5395
        %v5920 = vpop.f32.mrb[0].mxu0
        %v5921 = vadd.f32 %v5760, %v5920
        %v5922 = vpop.f32.mrb[0].mxu0
        %v5923 = vpop.f32.mrb[0].mxu0
        %v5924 = vadd.f32 %v5763, %v5923
        %v5925 = vpop.f32.mrb[0].mxu0
        %5926 = vmatprep.mubr.bf16.mxu0 %v5400
        %5927 = vmatmul.mubr.bf16.gmra.mrb[0].mxu0 %v5399
        %v5928 = vpop.f32.mrb[0].mxu0
        %v5929 = vadd.f32 %v5768, %v5928
        %v5930 = vpop.f32.mrb[0].mxu0
        %v5931 = vpop.f32.mrb[0].mxu0
        %v5932 = vadd.f32 %v5771, %v5931
        %v5933 = vpop.f32.mrb[0].mxu0
        %5934 = vmatprep.mubr.bf16.mxu0 %v5404
        %5935 = vmatmul.mubr.bf16.gmra.mrb[0].mxu0 %v5403
        %v5936 = vpop.f32.mrb[0].mxu0
        %v5937 = vadd.f32 %v5776, %v5936
        %v5938 = vpop.f32.mrb[0].mxu0
        %v5939 = vpop.f32.mrb[0].mxu0
        %v5940 = vadd.f32 %v5779, %v5939
        %v5941 = vpop.f32.mrb[0].mxu0
        %5942 = vmatprep.mubr.bf16.mxu0 %v5408
        %5943 = vmatmul.mubr.bf16.gmra.mrb[0].mxu0 %v5407
        %v5944 = vpop.f32.mrb[0].mxu0
        %v5945 = vadd.f32 %v5784, %v5944
        %v5946 = vpop.f32.mrb[0].mxu0
        %v5947 = vpop.f32.mrb[0].mxu0
        %v5948 = vadd.f32 %v5787, %v5947
        %v5949 = vpop.f32.mrb[0].mxu0
        %5950 = vmatprep.mubr.bf16.mxu0 %v5412
        %5951 = vmatmul.mubr.bf16.gmra.mrb[0].mxu0 %v5411
        %v5952 = vpop.f32.mrb[0].mxu0
        %v5953 = vadd.f32 %v5792, %v5952
        %v5954 = vpop.f32.mrb[0].mxu0
        %v5955 = vpop.f32.mrb[0].mxu0
        %v5956 = vadd.f32 %v5795, %v5955
        %v5957 = vpop.f32.mrb[0].mxu0
        %5958 = vmatprep.mubr.bf16.mxu0 %v5416
        %5959 = vmatmul.mubr.bf16.gmra.mrb[0].mxu0 %v5415
        %v5960 = vpop.f32.mrb[0].mxu0
        %v5961 = vadd.f32 %v5800, %v5960
        %v5962 = vpop.f32.mrb[0].mxu0
        %v5963 = vpop.f32.mrb[0].mxu0
        %v5964 = vadd.f32 %v5803, %v5963
        %v5965 = vpop.f32.mrb[0].mxu0
        %5966 = vmatprep.mubr.bf16.mxu0 %v5420
        %5967 = vmatmul.mubr.bf16.gmra.mrb[0].mxu0 %v5419
        %v5968 = vpop.f32.mrb[0].mxu0
        %v5969 = vadd.f32 %v5808, %v5968
        %v5970 = vpop.f32.mrb[0].mxu0
        %v5971 = vpop.f32.mrb[0].mxu0
        %v5972 = vadd.f32 %v5811, %v5971
        %v5973 = vpop.f32.mrb[0].mxu0
        %5974 = vmatprep.mubr.bf16.mxu0 %v5424
        %5975 = vmatmul.mubr.bf16.gmra.mrb[0].mxu0 %v5423
        %v5976 = vpop.f32.mrb[0].mxu0
        %v5977 = vadd.f32 %v5816, %v5976
        %v5978 = vpop.f32.mrb[0].mxu0
        %v5979 = vpop.f32.mrb[0].mxu0
        %v5980 = vadd.f32 %v5819, %v5979
        %v5981 = vpop.f32.mrb[0].mxu0
        %5982 = vmatprep.mubr.bf16.mxu0 %v5428
        %5983 = vmatmul.mubr.bf16.gmra.mrb[0].mxu0 %v5427
        %v5984 = vpop.f32.mrb[0].mxu0
        %v5985 = vadd.f32 %v5824, %v5984
        %v5986 = vpop.f32.mrb[0].mxu0
        %v5987 = vpop.f32.mrb[0].mxu0
        %v5988 = vadd.f32 %v5827, %v5987
        %v5989 = vpop.f32.mrb[0].mxu0
        %5990 = vmatprep.mubr.bf16.mxu0 %v5432
        %5991 = vmatmul.mubr.bf16.gmra.mrb[0].mxu0 %v5431
        %v5992 = vpop.f32.mrb[0].mxu0
        %v5993 = vadd.f32 %v5832, %v5992
        %v5994 = vpop.f32.mrb[0].mxu0
        %v5995 = vpop.f32.mrb[0].mxu0
        %v5996 = vadd.f32 %v5835, %v5995
        %v5997 = vpop.f32.mrb[0].mxu0
        %5998 = vmatprep.mubr.bf16.mxu0 %v5436
        %5999 = vmatmul.mubr.bf16.gmra.mrb[0].mxu0 %v5435
        %v6000 = vpop.f32.mrb[0].mxu0
        %v6001 = vadd.f32 %v5840, %v6000
        %v6002 = vpop.f32.mrb[0].mxu0
        %v6003 = vpop.f32.mrb[0].mxu0
        %v6004 = vadd.f32 %v5843, %v6003
        %v6005 = vpop.f32.mrb[0].mxu0
        %6006 = vmatprep.mubr.bf16.mxu0 %v5440
        %6007 = vmatmul.mubr.bf16.gmra.mrb[0].mxu0 %v5439
        %v6008 = vpop.f32.mrb[0].mxu0
        %v6009 = vadd.f32 %v5848, %v6008
        %v6010 = vpop.f32.mrb[0].mxu0
        %v6011 = vpop.f32.mrb[0].mxu0
        %v6012 = vadd.f32 %v5851, %v6011
        %v6013 = vpop.f32.mrb[0].mxu0
        %6014 = vmatprep.mubr.bf16.mxu0 %v5444
        %6015 = vmatmul.mubr.bf16.gmra.mrb[0].mxu0 %v5443
        %v6016 = vpop.f32.mrb[0].mxu0
        %v6017 = vadd.f32 %v5856, %v6016
        %v6018 = vpop.f32.mrb[0].mxu0
        %v6019 = vpop.f32.mrb[0].mxu0
        %v6020 = vadd.f32 %v5859, %v6019
        %v6021 = vpop.f32.mrb[0].mxu0
        %6022 = vdwg.mxu0
        %v6023 = vld [vmem:[%s7] sm:$0x1]
        %v6025 = vlaneseq
        %v6026 = vshrl.u32 %v6025, 7
        %v6027 = vsub.s32 0, %v6026
        %v6028 = vrot.slane %v6023, %v6027
        %v6030 = vmul.f32 %v5897, %v6028
        %v6031 = vmul.f32 %v5900, %v6028
        %v6032 = vmul.f32 %v5905, %v6028
        %v6033 = vmul.f32 %v5908, %v6028
        %v6034 = vmul.f32 %v5913, %v6028
        %v6035 = vmul.f32 %v5916, %v6028
        %v6036 = vmul.f32 %v5921, %v6028
        %v6037 = vmul.f32 %v5924, %v6028
        %v6038 = vmul.f32 %v5929, %v6028
        %v6039 = vmul.f32 %v5932, %v6028
        %v6040 = vmul.f32 %v5937, %v6028
        %v6041 = vmul.f32 %v5940, %v6028
        %v6042 = vmul.f32 %v5945, %v6028
        %v6043 = vmul.f32 %v5948, %v6028
        %v6044 = vmul.f32 %v5953, %v6028
        %v6045 = vmul.f32 %v5956, %v6028
        %v6046 = vmul.f32 %v5961, %v6028
        %v6047 = vmul.f32 %v5964, %v6028
        %v6048 = vmul.f32 %v5969, %v6028
        %v6049 = vmul.f32 %v5972, %v6028
        %v6050 = vmul.f32 %v5977, %v6028
        %v6051 = vmul.f32 %v5980, %v6028
        %v6052 = vmul.f32 %v5985, %v6028
        %v6053 = vmul.f32 %v5988, %v6028
        %v6054 = vmul.f32 %v5993, %v6028
        %v6055 = vmul.f32 %v5996, %v6028
        %v6056 = vmul.f32 %v6001, %v6028
        %v6057 = vmul.f32 %v6004, %v6028
        %v6058 = vmul.f32 %v6009, %v6028
        %v6059 = vmul.f32 %v6012, %v6028
        %v6060 = vmul.f32 %v6017, %v6028
        %v6061 = vmul.f32 %v6020, %v6028
        %v6062 = vld [vmem:[%s312] sm:$0x1]
        %v6064 = vlaneseq
        %v6065 = vshrl.u32 %v6064, 7
        %v6066 = vsub.s32 0, %v6065
        %v6067 = vrot.slane %v6062, %v6066
        %v6069 = vadd.f32 %v6030, %v6067
        %v6070 = vadd.f32 %v6031, %v6067
        %v6071 = vadd.f32 %v6032, %v6067
        %v6072 = vadd.f32 %v6033, %v6067
        %v6073 = vadd.f32 %v6034, %v6067
        %v6074 = vadd.f32 %v6035, %v6067
        %v6075 = vadd.f32 %v6036, %v6067
        %v6076 = vadd.f32 %v6037, %v6067
        %v6077 = vadd.f32 %v6038, %v6067
        %v6078 = vadd.f32 %v6039, %v6067
        %v6079 = vadd.f32 %v6040, %v6067
        %v6080 = vadd.f32 %v6041, %v6067
        %v6081 = vadd.f32 %v6042, %v6067
        %v6082 = vadd.f32 %v6043, %v6067
        %v6083 = vadd.f32 %v6044, %v6067
        %v6084 = vadd.f32 %v6045, %v6067
        %v6085 = vadd.f32 %v6046, %v6067
        %v6086 = vadd.f32 %v6047, %v6067
        %v6087 = vadd.f32 %v6048, %v6067
        %v6088 = vadd.f32 %v6049, %v6067
        %v6089 = vadd.f32 %v6050, %v6067
        %v6090 = vadd.f32 %v6051, %v6067
        %v6091 = vadd.f32 %v6052, %v6067
        %v6092 = vadd.f32 %v6053, %v6067
        %v6093 = vadd.f32 %v6054, %v6067
        %v6094 = vadd.f32 %v6055, %v6067
        %v6095 = vadd.f32 %v6056, %v6067
        %v6096 = vadd.f32 %v6057, %v6067
        %v6097 = vadd.f32 %v6058, %v6067
        %v6098 = vadd.f32 %v6059, %v6067
        %v6099 = vadd.f32 %v6060, %v6067
        %v6100 = vadd.f32 %v6061, %v6067
        %vm6101 = vcmp.gt.f32.partialorder %v6069, 0.0
        %vm6102 = vcmp.gt.f32.partialorder %v6070, 0.0
        %vm6103 = vcmp.gt.f32.partialorder %v6071, 0.0
        %vm6104 = vcmp.gt.f32.partialorder %v6072, 0.0
        %vm6105 = vcmp.gt.f32.partialorder %v6073, 0.0
        %vm6106 = vcmp.gt.f32.partialorder %v6074, 0.0
        %vm6107 = vcmp.gt.f32.partialorder %v6075, 0.0
        %vm6108 = vcmp.gt.f32.partialorder %v6076, 0.0
        %vm6109 = vcmp.gt.f32.partialorder %v6077, 0.0
        %vm6110 = vcmp.gt.f32.partialorder %v6078, 0.0
        %vm6111 = vcmp.gt.f32.partialorder %v6079, 0.0
        %vm6112 = vcmp.gt.f32.partialorder %v6080, 0.0
        %vm6113 = vcmp.gt.f32.partialorder %v6081, 0.0
        %vm6114 = vcmp.gt.f32.partialorder %v6082, 0.0
        %vm6115 = vcmp.gt.f32.partialorder %v6083, 0.0
        %vm6116 = vcmp.gt.f32.partialorder %v6084, 0.0
        %vm6117 = vcmp.gt.f32.partialorder %v6085, 0.0
        %vm6118 = vcmp.gt.f32.partialorder %v6086, 0.0
        %vm6119 = vcmp.gt.f32.partialorder %v6087, 0.0
        %vm6120 = vcmp.gt.f32.partialorder %v6088, 0.0
        %vm6121 = vcmp.gt.f32.partialorder %v6089, 0.0
        %vm6122 = vcmp.gt.f32.partialorder %v6090, 0.0
        %vm6123 = vcmp.gt.f32.partialorder %v6091, 0.0
        %vm6124 = vcmp.gt.f32.partialorder %v6092, 0.0
        %vm6125 = vcmp.gt.f32.partialorder %v6093, 0.0
        %vm6126 = vcmp.gt.f32.partialorder %v6094, 0.0
        %vm6127 = vcmp.gt.f32.partialorder %v6095, 0.0
        %vm6128 = vcmp.gt.f32.partialorder %v6096, 0.0
        %vm6129 = vcmp.gt.f32.partialorder %v6097, 0.0
        %vm6130 = vcmp.gt.f32.partialorder %v6098, 0.0
        %vm6131 = vcmp.gt.f32.partialorder %v6099, 0.0
        %vm6132 = vcmp.gt.f32.partialorder %v6100, 0.0
        %v6133 = vmul.f32 %v6069, 0.01
        %v6134 = vmul.f32 %v6070, 0.01
        %v6135 = vmul.f32 %v6071, 0.01
        %v6136 = vmul.f32 %v6072, 0.01
        %v6137 = vmul.f32 %v6073, 0.01
        %v6138 = vmul.f32 %v6074, 0.01
        %v6139 = vmul.f32 %v6075, 0.01
        %v6140 = vmul.f32 %v6076, 0.01
        %v6141 = vmul.f32 %v6077, 0.01
        %v6142 = vmul.f32 %v6078, 0.01
        %v6143 = vmul.f32 %v6079, 0.01
        %v6144 = vmul.f32 %v6080, 0.01
        %v6145 = vmul.f32 %v6081, 0.01
        %v6146 = vmul.f32 %v6082, 0.01
        %v6147 = vmul.f32 %v6083, 0.01
        %v6148 = vmul.f32 %v6084, 0.01
        %v6149 = vmul.f32 %v6085, 0.01
        %v6150 = vmul.f32 %v6086, 0.01
        %v6151 = vmul.f32 %v6087, 0.01
        %v6152 = vmul.f32 %v6088, 0.01
        %v6153 = vmul.f32 %v6089, 0.01
        %v6154 = vmul.f32 %v6090, 0.01
        %v6155 = vmul.f32 %v6091, 0.01
        %v6156 = vmul.f32 %v6092, 0.01
        %v6157 = vmul.f32 %v6093, 0.01
        %v6158 = vmul.f32 %v6094, 0.01
        %v6159 = vmul.f32 %v6095, 0.01
        %v6160 = vmul.f32 %v6096, 0.01
        %v6161 = vmul.f32 %v6097, 0.01
        %v6162 = vmul.f32 %v6098, 0.01
        %v6163 = vmul.f32 %v6099, 0.01
        %v6164 = vmul.f32 %v6100, 0.01
        %v6165 = vsel %vm6101, %v6069, %v6133
        %v6166 = vsel %vm6102, %v6070, %v6134
        %v6167 = vsel %vm6103, %v6071, %v6135
        %v6168 = vsel %vm6104, %v6072, %v6136
        %v6169 = vsel %vm6105, %v6073, %v6137
        %v6170 = vsel %vm6106, %v6074, %v6138
        %v6171 = vsel %vm6107, %v6075, %v6139
        %v6172 = vsel %vm6108, %v6076, %v6140
        %v6173 = vsel %vm6109, %v6077, %v6141
        %v6174 = vsel %vm6110, %v6078, %v6142
        %v6175 = vsel %vm6111, %v6079, %v6143
        %v6176 = vsel %vm6112, %v6080, %v6144
        %v6177 = vsel %vm6113, %v6081, %v6145
        %v6178 = vsel %vm6114, %v6082, %v6146
        %v6179 = vsel %vm6115, %v6083, %v6147
        %v6180 = vsel %vm6116, %v6084, %v6148
        %v6181 = vsel %vm6117, %v6085, %v6149
        %v6182 = vsel %vm6118, %v6086, %v6150
        %v6183 = vsel %vm6119, %v6087, %v6151
        %v6184 = vsel %vm6120, %v6088, %v6152
        %v6185 = vsel %vm6121, %v6089, %v6153
        %v6186 = vsel %vm6122, %v6090, %v6154
        %v6187 = vsel %vm6123, %v6091, %v6155
        %v6188 = vsel %vm6124, %v6092, %v6156
        %v6189 = vsel %vm6125, %v6093, %v6157
        %v6190 = vsel %vm6126, %v6094, %v6158
        %v6191 = vsel %vm6127, %v6095, %v6159
        %v6192 = vsel %vm6128, %v6096, %v6160
        %v6193 = vsel %vm6129, %v6097, %v6161
        %v6194 = vsel %vm6130, %v6098, %v6162
        %v6195 = vsel %vm6131, %v6099, %v6163
        %v6196 = vsel %vm6132, %v6100, %v6164
        %6197 = vst [vmem:[%s309] sm:$0xff] %v6165
        %6198 = vst [vmem:[%s309 + $0x8] sm:$0xff] %v6166
        %6199 = vst [vmem:[%s309 + $0x10] sm:$0xff] %v6167
        %6200 = vst [vmem:[%s309 + $0x18] sm:$0xff] %v6168
        %6201 = vst [vmem:[%s309 + $0x20] sm:$0xff] %v6169
        %6202 = vst [vmem:[%s309 + $0x28] sm:$0xff] %v6170
        %6203 = vst [vmem:[%s309 + $0x30] sm:$0xff] %v6171
        %6204 = vst [vmem:[%s309 + $0x38] sm:$0xff] %v6172
        %6205 = vst [vmem:[%s309 + $0x40] sm:$0xff] %v6173
        %6206 = vst [vmem:[%s309 + $0x48] sm:$0xff] %v6174
        %6207 = vst [vmem:[%s309 + $0x50] sm:$0xff] %v6175
        %6208 = vst [vmem:[%s309 + $0x58] sm:$0xff] %v6176
        %6209 = vst [vmem:[%s309 + $0x60] sm:$0xff] %v6177
        %6210 = vst [vmem:[%s309 + $0x68] sm:$0xff] %v6178
        %6211 = vst [vmem:[%s309 + $0x70] sm:$0xff] %v6179
        %6212 = vst [vmem:[%s309 + $0x78] sm:$0xff] %v6180
        %6213 = vst [vmem:[%s309 + $0x80] sm:$0xff] %v6181
        %6214 = vst [vmem:[%s309 + $0x88] sm:$0xff] %v6182
        %6215 = vst [vmem:[%s309 + $0x90] sm:$0xff] %v6183
        %6216 = vst [vmem:[%s309 + $0x98] sm:$0xff] %v6184
        %6217 = vst [vmem:[%s309 + $0xa0] sm:$0xff] %v6185
        %6218 = vst [vmem:[%s309 + $0xa8] sm:$0xff] %v6186
        %6219 = vst [vmem:[%s309 + $0xb0] sm:$0xff] %v6187
        %6220 = vst [vmem:[%s309 + $0xb8] sm:$0xff] %v6188
        %6221 = vst [vmem:[%s309 + $0xc0] sm:$0xff] %v6189
        %6222 = vst [vmem:[%s309 + $0xc8] sm:$0xff] %v6190
        %6223 = vst [vmem:[%s309 + $0xd0] sm:$0xff] %v6191
        %6224 = vst [vmem:[%s309 + $0xd8] sm:$0xff] %v6192
        %6225 = vst [vmem:[%s309 + $0xe0] sm:$0xff] %v6193
        %6226 = vst [vmem:[%s309 + $0xe8] sm:$0xff] %v6194
        %6227 = vst [vmem:[%s309 + $0xf0] sm:$0xff] %v6195
        %6228 = vst [vmem:[%s309 + $0xf8] sm:$0xff] %v6196
        %s6229 = sand.u32 %s218, 1
        %s6230 = scalar_lea.sflag [#allocation6], %s6229
        %s6231 = sand.u32 %s218, 1
        %s6232 = smul.addr %s6231, 256
        %s6233 = scalar_lea.vmem [#allocation5], %s6232
        // Predicated region
        $region91: #{tpu_custom_call.1} parent=51 // pred_check
          %p6234 = pneg %p228
        $region92: #{tpu_custom_call.1} parent=51 // pred_check_branch
          %6236 = sbr.rel (%p6234) target = $region94
        $region93: #{tpu_custom_call.1} parent=51 // pred_region
          %s6237 = smul.u32 32, %s28
          %s6239 = ssub.s32 4096, 4096
          %6240 = vsyncadd %s6230, %s6239
          %s6241 = smul.addr %s27, 32
          %s6242 = sadd.s32 %s6237, %s6241
          %s6243 = smul.addr %s6242, 128
          %s6244 = scalar_lea.hbm %s9, %s6243
          %s6245 = sshll.u32 %s6233, 4
          %s6246 = int_to_ptr.vmem [resolvable:$true] %s6245
          %6251 = dma.vmem_to_hbm [thread:$0]  %s6246, 4096, %s6244, %s6230, 128, 128, 8
        $region94: #{tpu_custom_call.1} parent=51 // pred_fallthru
          _
      $region52: #{tpu_custom_call.1} parent=5 // pred_fallthru
        _
      %p6252 = scmp.le.s32.totalorder 2, %s18
      // Predicated region
      $region95: #{tpu_custom_call.1} parent=5 // pred_check
        %p6253 = pneg %p6252
      $region96: #{tpu_custom_call.1} parent=5 // pred_check_branch
        %6255 = sbr.rel (%p6253) target = $region98
      $region97: #{tpu_custom_call.1} parent=5 // pred_region
        %s6256 = ssub.s32 %s18, 2
        // Predicated region
        $region99: #{tpu_custom_call.1} parent=97 // pred_check
          %p6257 = pneg %p234
        $region100: #{tpu_custom_call.1} parent=97 // pred_check_branch
          %6259 = sbr.rel (%p6257) target = $region102
        $region101: #{tpu_custom_call.1} parent=97 // pred_region
          %s6260 = sand.u32 %s219, 1
          %s6261 = scalar_lea.sflag [#allocation6], %s6260
          %s6262 = sand.u32 %s219, 1
          %s6263 = smul.addr %s6262, 256
          %s6264 = scalar_lea.vmem [#allocation5], %s6263
          %6265 = dma.done %s6261, 4096
        $region102: #{tpu_custom_call.1} parent=97 // pred_fallthru
          _
      $region98: #{tpu_custom_call.1} parent=5 // pred_fallthru
        _
    $region6: #{tpu_custom_call.1} parent=1 // loop_footer
      %s22 = sadd.s32 1, %s18
    $region7: #{tpu_custom_call.1} parent=1 // loop_footer_branch
      %17 = sbr.rel target = $region3
    $region8: #{tpu_custom_call.1} parent=1 // loop_exit
      _
    %6266 = vsyncpa [#allocation6], 1
    %s6267 = scalar_lea.sflag [#allocation6], 1
    %6268 = vsyncpa %s6267, 1
  %6269 = vsyncmov [#allocation3]
  %s6270 = vpop.sfrf %6269
  %p6271 = scmp.eq.s32.totalorder %s6270, 0
  %p6272 = pneg %p6271
  %6274 = shalt.err (%p6272)

</llo_original>
